<compile_context>
chip_gen: v7x
topology: tpu7x:2x2x1
jax: 0.10.0
libtpu: 0.0.40
codegen_flags: <defaults>
</compile_context>

<pallas_src>
import functools

import jax
import jax.numpy as jnp
from jax import lax
from jax.experimental import pallas as pl
from jax.experimental.pallas import tpu as pltpu


def _round_up(v, m):
    return ((v + m - 1) // m) * m


def _pad_gate_rows(w, H, Hp):
    """Pad a PyTorch gate-stacked tensor (4H, ...) to (4Hp, ...), per gate."""
    if Hp == H:
        return w
    parts = [w[g * H:(g + 1) * H] for g in range(4)]
    pad = ((0, Hp - H),) + ((0, 0),) * (w.ndim - 1)
    return jnp.concatenate([jnp.pad(p, pad) for p in parts], axis=0)


def _lstm_fc_kernel(x_ref, wih_ref, whh_ref, b_ref, wfc_ref, bfc_ref, out_ref,
                    h_ref, c_ref, gx_ref, *, seq_len):
    """Grid step (bb, tt) of the pipelined LSTM + final Linear.

    Stage A (MXU, chunk tt):    gx[tt%2] = x_chunk(tt) @ W_ih^T + b
    Stage B (serial, chunk tt-1): recurrence using gx[(tt-1)%2]  (overlaps Stage A)
    Finalize at tt == nchunks:  out = h_T * w_fc (lane reduce) + b_fc

    x_ref   : (Tt*Bb, D)        chunk min(tt, ntt-1), rows ordered (t, b)
    wih_ref : (D, 4Hp)          input->gates weight (per-gate lane-padded, transposed)
    whh_ref : (Hp, 4Hp)         hidden->gates weight (padded, transposed)
    b_ref   : (1, 4Hp) f32      b_ih + b_hh (padded)
    wfc_ref : (1, Hp)  f32      fc weight row (padded)
    bfc_ref : (1, 1)   f32      fc bias
    out_ref : (Bb, 1)  f32      output block (written on the last grid step)
    h_ref   : (Bb, Hp) f32      hidden state scratch (persists across tt)
    c_ref   : (Bb, Hp) f32      cell state scratch
    gx_ref  : (2, Tt, Bb, 4Hp)  2-slot precomputed x-projection scratch
    """
    _, Tt, Bb, G = gx_ref.shape
    Hp = whh_ref.shape[0]
    nchunks = pl.num_programs(1) - 1          # number of real time chunks
    tt = pl.program_id(1)

    # New batch block -> fresh recurrence.
    @pl.when(tt == 0)
    def _init():
        h_ref[...] = jnp.zeros_like(h_ref)
        c_ref[...] = jnp.zeros_like(c_ref)

    # ---- Stage A: hoisted input projection for chunk `tt`, one chunk AHEAD of the
    # recurrence, so the MXU matmul can interleave with the serial loop below.
    @pl.when(tt < nchunks)
    def _project():
        gx = jnp.dot(x_ref[...], wih_ref[...], preferred_element_type=jnp.float32)
        gx = gx + b_ref[...]                                   # fold bias once per chunk
        gx_ref[tt % 2] = gx.reshape(Tt, Bb, G).astype(gx_ref.dtype)

    # ---- Stage B: recurrence for chunk `tt - 1` (its projection was done last step).
    @pl.when(tt > 0)
    def _recur():
        chunk = tt - 1
        valid = jnp.minimum(seq_len - chunk * Tt, Tt)          # ragged last chunk
        slot = chunk % 2
        whh = whh_ref[...]                                     # loop-invariant, resident

        def step(t, carry):
            h, c = carry
            gates = (jnp.dot(h.astype(whh.dtype), whh,
                             preferred_element_type=jnp.float32)
                     + gx_ref[slot, t].astype(jnp.float32))    # (Bb, 4Hp)
            # Sliced transcendentals (Hp % 128 == 0): ~5*Hp EUP elems/row/step
            # instead of ~9*Hp with full-width sigmoid+tanh. Gate order [i, f, g, o].
            sig_if = jax.nn.sigmoid(gates[:, :2 * Hp])
            g_g = jnp.tanh(gates[:, 2 * Hp:3 * Hp])
            o_g = jax.nn.sigmoid(gates[:, 3 * Hp:])
            i_g = sig_if[:, :Hp]
            f_g = sig_if[:, Hp:]
            c_new = f_g * c + i_g * g_g
            h_new = o_g * jnp.tanh(c_new)
            keep = t < valid                                   # freeze state on pad steps
            return jnp.where(keep, h_new, h), jnp.where(keep, c_new, c)

        # Bounded unroll: keeps LLO scheduling visibility without vreg spills.
        h_last, c_last = lax.fori_loop(0, Tt, step, (h_ref[...], c_ref[...]),
                                       unroll=min(8, Tt))
        h_ref[...] = h_last
        c_ref[...] = c_last

    # ---- Final Linear only on the last grid step. An (Hp, 1) MXU matmul would waste
    # a full MXU pass for one column -> VPU multiply + lane reduction instead.
    @pl.when(tt == nchunks)
    def _finalize():
        out_ref[...] = (jnp.sum(h_ref[...] * wfc_ref[...], axis=-1, keepdims=True)
                        + bfc_ref[...])


def lstm_model_forward(x, params, *, time_chunk=32, batch_block=None,
                       compute_dtype=jnp.float32, gx_dtype=jnp.float32,
                       single_buffer_weights=True):
    """x: (B, T, D) batch-first, like the PyTorch module. Returns (B, 1) float32."""
    B, T, D = x.shape
    H = params["w_hh"].shape[1]          # w_hh stored PyTorch-style (4H, H)
    Hp = _round_up(H, 128)               # lane-aligned hidden size (padded lanes stay 0)
    G = 4 * Hp

    # ---- Batch block: MXU-friendly rows, but keep >=2 blocks when B >= 16 so the
    # "parallel" grid axis can feed both v7x TensorCores.
    Bp8 = _round_up(B, 8)
    if batch_block is None:
        Bb = min(128, Bp8)
        if Bp8 >= 16 and (Bp8 + Bb - 1) // Bb < 2:
            Bb = _round_up((Bp8 + 1) // 2, 8)
    else:
        Bb = int(batch_block)
        assert Bb % 8 == 0, "batch_block must be a multiple of the 8-row sublane tile"
    Bp = _round_up(Bp8, Bb)
    nbb = Bp // Bb

    # ---- Generation-aware VMEM budget (v5e/v6e ~100 MiB of 128; v7x ~50 of 64).
    try:
        cap = int(getattr(pltpu.get_tpu_info(), "vmem_capacity_bytes", 64 << 20))
    except Exception:
        cap = 64 << 20
    budget = max(16 << 20, min((cap * 25) // 32, 100 << 20))

    itemsize = jnp.dtype(compute_dtype).itemsize
    gx_item = jnp.dtype(gx_dtype).itemsize
    D_lane = max(_round_up(D, 128), 128)
    D_sub = max(_round_up(D, 8), 8)

    def vmem_est(tt_len):
        x_buf = 2 * tt_len * Bb * D_lane * itemsize            # double-buffered x chunk
        gx_buf = 2 * tt_len * Bb * G * gx_item                 # 2-slot projection scratch
        w_buf = 2 * (D_sub * G + Hp * G) * itemsize            # conservative: 2 buffers
        state = 2 * Bb * Hp * 4
        misc = 4 * G * 4 + 2 * Bb * 128 * 4 + (2 << 20)
        return x_buf + gx_buf + w_buf + state + misc

    # Largest time chunk (<= time_chunk, <= T) that fits the VMEM budget; the last
    # chunk may be ragged (padded steps are masked in-kernel), so ANY T keeps a big Tt.
    Tt = 1
    for cand in range(max(1, min(int(time_chunk), T)), 0, -1):
        if vmem_est(cand) <= budget:
            Tt = cand
            break
    ntt = -(-T // Tt)
    Tp = ntt * Tt

    # ---- Inputs: pad batch & time with zeros, rows ordered (batch_block, t, b_within).
    xp = jnp.pad(x, ((0, Bp - B), (0, Tp - T), (0, 0)))
    x2d = (xp.reshape(nbb, Bb, Tp, D)
             .transpose(0, 2, 1, 3)
             .reshape(nbb * Tp * Bb, D)
             .astype(compute_dtype))

    # ---- Weights: per-gate pad H -> Hp (padded lanes stay exactly zero through the
    # recurrence: gates_pad = 0 -> i=f=o=0.5, g=0 -> c_pad=h_pad=0), then transpose.
    wih_t = _pad_gate_rows(params["w_ih"], H, Hp).T.astype(compute_dtype)          # (D, 4Hp)
    whh_t = _pad_gate_rows(jnp.pad(params["w_hh"], ((0, 0), (0, Hp - H))),
                           H, Hp).T.astype(compute_dtype)                          # (Hp, 4Hp)
    b = _pad_gate_rows(params["b_ih"] + params["b_hh"], H, Hp).reshape(1, G)
    b = b.astype(jnp.float32)
    wfc = jnp.pad(params["w_fc"].reshape(1, H), ((0, 0), (0, Hp - H))).astype(jnp.float32)
    bfc = params["b_fc"].reshape(1, 1).astype(jnp.float32)

    kernel_fn = functools.partial(_lstm_fc_kernel, seq_len=T)
    const_map = lambda bb, tt: (0, 0)
    # Projection runs one chunk ahead; clamp on the final (recurrence-only) grid step.
    x_map = lambda bb, tt: (bb * ntt + jnp.minimum(tt, ntt - 1), 0)

    def build_and_run(single_buf):
        wkw = dict(pipeline_mode=pl.Buffered(1)) if single_buf else {}
        in_specs = [
            pl.BlockSpec((Tt * Bb, D), x_map),                     # x chunk (double-buffered)
            pl.BlockSpec((D, G), const_map, **wkw),                # resident weights:
            pl.BlockSpec((Hp, G), const_map, **wkw),               #   single-buffered to
            pl.BlockSpec((1, G), const_map, **wkw),                #   halve their VMEM
            pl.BlockSpec((1, Hp), const_map, **wkw),
            pl.BlockSpec((1, 1), const_map, **wkw),
        ]
        return pl.pallas_call(
            kernel_fn,
            out_shape=jax.ShapeDtypeStruct((Bp, 1), jnp.float32),
            grid_spec=pltpu.PrefetchScalarGridSpec(
                num_scalar_prefetch=0,
                grid=(nbb, ntt + 1),                               # +1: pipeline drain step
                in_specs=in_specs,
                out_specs=pl.BlockSpec((Bb, 1), lambda bb, tt: (bb, 0)),
                scratch_shapes=[
                    pltpu.VMEM((Bb, Hp), jnp.float32),             # h state
                    pltpu.VMEM((Bb, Hp), jnp.float32),             # c state
                    pltpu.VMEM((2, Tt, Bb, G), gx_dtype),          # 2-slot x-projection
                ],
            ),
            compiler_params=pltpu.CompilerParams(
                dimension_semantics=("parallel", "arbitrary"),
                vmem_limit_bytes=int(budget),
            ),
        )(x2d, wih_t, whh_t, b, wfc, bfc)

    if single_buffer_weights:
        try:
            out = jax.block_until_ready(build_and_run(True))
        except Exception:
            # pl.Buffered(1) not supported on this jax/libtpu -> default double-buffering.
            out = build_and_run(False)
    else:
        out = build_and_run(False)
    return out[:B]


def init_params(key, input_dim, hidden_dim):
    """Deterministic init mimicking PyTorch's U(-1/sqrt(H), 1/sqrt(H))."""
    ks = jax.random.split(key, 6)
    s = 1.0 / jnp.sqrt(hidden_dim)
    u = lambda k, shape: jax.random.uniform(k, shape, jnp.float32, -s, s)
    return {
        "w_ih": u(ks[0], (4 * hidden_dim, input_dim)),
        "w_hh": u(ks[1], (4 * hidden_dim, hidden_dim)),
        "b_ih": u(ks[2], (4 * hidden_dim,)),
        "b_hh": u(ks[3], (4 * hidden_dim,)),
        "w_fc": u(ks[4], (1, hidden_dim)),
        "b_fc": u(ks[5], (1,)),
    }


def _reference(x, params):
    """Pure-JAX f32 reference of the same forward pass (PyTorch semantics)."""
    B, T, D = x.shape
    H = params["w_hh"].shape[1]
    wih_t = params["w_ih"].T
    whh_t = params["w_hh"].T
    b = params["b_ih"] + params["b_hh"]
    h = jnp.zeros((B, H), jnp.float32)
    c = jnp.zeros((B, H), jnp.float32)
    for t in range(T):
        gates = x[:, t, :] @ wih_t + h @ whh_t + b
        i = jax.nn.sigmoid(gates[:, :H])
        f = jax.nn.sigmoid(gates[:, H:2 * H])
        g = jnp.tanh(gates[:, 2 * H:3 * H])
        o = jax.nn.sigmoid(gates[:, 3 * H:])
        c = f * c + i * g
        h = o * jnp.tanh(c)
    return h @ params["w_fc"].T + params["b_fc"]


if __name__ == "__main__":
    B, T, D, H = 2, 8, 16, 32

    key = jax.random.PRNGKey(0)
    k_x, k_p, k_x2 = jax.random.split(key, 3)
    x = jax.random.normal(k_x, (B, T, D), jnp.float32)
    params = init_params(k_p, D, H)
    ref = _reference(x, params)

    # float32 path: exact module semantics, strict tolerance.
    out_f32 = jax.block_until_ready(lstm_model_forward(x, params))
    assert out_f32.shape == (B, 1)
    assert jnp.allclose(out_f32, ref, atol=1e-5, rtol=1e-5)

    # bfloat16 matmul-input path (v6e/v7x MXU native); state/nonlinearities stay f32.
    out_bf16 = jax.block_until_ready(
        lstm_model_forward(x, params, compute_dtype=jnp.bfloat16))
    assert out_bf16.shape == (B, 1)
    assert jnp.allclose(out_bf16, ref, atol=5e-2, rtol=5e-2)

    # Ragged-T + multi-chunk + multi-batch-block path (exercises padded-step masking,
    # the pipelined projection across chunks, and the 2-block parallel batch axis).
    B2, T2 = 10, 11
    x2 = jax.random.normal(k_x2, (B2, T2, D), jnp.float32)
    ref2 = _reference(x2, params)
    out2 = jax.block_until_ready(lstm_model_forward(x2, params, time_chunk=4))
    assert out2.shape == (B2, 1)
    assert jnp.allclose(out2, ref2, atol=1e-4, rtol=1e-4)

    print("KERNEL_OK")
</pallas_src>

<mosaic_0001>
module attributes {stable_mosaic.version = 11 : i64} {
  func.func @_lstm_fc_kernel(%arg0: i32, %arg1: i32, %arg2: memref<64x16xf32, #tpu.memory_space<vmem>>, %arg3: memref<16x512xf32, #tpu.memory_space<vmem>>, %arg4: memref<128x512xf32, #tpu.memory_space<vmem>>, %arg5: memref<1x512xf32, #tpu.memory_space<vmem>>, %arg6: memref<1x128xf32, #tpu.memory_space<vmem>>, %arg7: memref<1x1xf32, #tpu.memory_space<vmem>>, %arg8: memref<8x1xf32, #tpu.memory_space<vmem>>, %arg9: memref<8x128xf32, #tpu.memory_space<vmem>>, %arg10: memref<8x128xf32, #tpu.memory_space<vmem>>, %arg11: memref<2x8x8x512xf32, #tpu.memory_space<vmem>>) attributes {dimension_semantics = [#tpu.dimension_semantics<parallel>, #tpu.dimension_semantics<arbitrary>], iteration_bounds = array<i64: 1, 2>, scalar_prefetch = 0 : i64, scratch_operands = 3 : i64, tpu.core_type = #tpu.core_type<tc>, window_params = [{transform_indices = @transform_0, window_bounds = array<i64: 64, 16>}, {pipeline_mode = #tpu.pipeline_mode<synchronous>, transform_indices = @transform_1, window_bounds = array<i64: 16, 512>}, {pipeline_mode = #tpu.pipeline_mode<synchronous>, transform_indices = @transform_2, window_bounds = array<i64: 128, 512>}, {pipeline_mode = #tpu.pipeline_mode<synchronous>, transform_indices = @transform_3, window_bounds = array<i64: 1, 512>}, {pipeline_mode = #tpu.pipeline_mode<synchronous>, transform_indices = @transform_4, window_bounds = array<i64: 1, 128>}, {pipeline_mode = #tpu.pipeline_mode<synchronous>, transform_indices = @transform_5, window_bounds = array<i64: 1, 1>}, {transform_indices = @transform_6, window_bounds = array<i64: 8, 1>}]} {
    %c0_i32 = arith.constant 0 : i32
    %0 = arith.cmpi eq, %arg1, %c0_i32 : i32
    %1 = arith.extui %0 : i1 to i32
    %c0_i32_0 = arith.constant 0 : i32
    %2 = arith.cmpi ne, %1, %c0_i32_0 : i32
    scf.if %2 {
      %cst = arith.constant 0.000000e+00 : f32
      %12 = vector.broadcast %cst : f32 to vector<8x128xf32>
      %c0 = arith.constant 0 : index
      %c0_6 = arith.constant 0 : index
      %13 = vector.load %arg9[%c0, %c0_6] : memref<8x128xf32, #tpu.memory_space<vmem>>, vector<8x128xf32>
      tpu.vector_store %arg9[%c0, %c0_6], %12 {strides = array<i32>} : memref<8x128xf32, #tpu.memory_space<vmem>>, vector<8x128xf32>,
      %cst_7 = arith.constant 0.000000e+00 : f32
      %14 = vector.broadcast %cst_7 : f32 to vector<8x128xf32>
      %c0_8 = arith.constant 0 : index
      %c0_9 = arith.constant 0 : index
      %15 = vector.load %arg10[%c0_8, %c0_9] : memref<8x128xf32, #tpu.memory_space<vmem>>, vector<8x128xf32>
      tpu.vector_store %arg10[%c0_8, %c0_9], %14 {strides = array<i32>} : memref<8x128xf32, #tpu.memory_space<vmem>>, vector<8x128xf32>,
    } else {
    }
    %c1_i32 = arith.constant 1 : i32
    %3 = arith.cmpi slt, %arg1, %c1_i32 : i32
    %4 = arith.extui %3 : i1 to i32
    %c0_i32_1 = arith.constant 0 : i32
    %5 = arith.cmpi ne, %4, %c0_i32_1 : i32
    scf.if %5 {
      %c0 = arith.constant 0 : index
      %c0_6 = arith.constant 0 : index
      %12 = vector.load %arg2[%c0, %c0_6] : memref<64x16xf32, #tpu.memory_space<vmem>>, vector<64x16xf32>
      %c0_7 = arith.constant 0 : index
      %c0_8 = arith.constant 0 : index
      %13 = vector.load %arg3[%c0_7, %c0_8] : memref<16x512xf32, #tpu.memory_space<vmem>>, vector<16x512xf32>
      %cst = arith.constant dense<0.000000e+00> : vector<64x512xf32>
      %14 = tpu.matmul %12, %13, %cst {dimension_numbers = #tpu.dot_dimension_numbers<[1], [0], [0], [1], [0, 0, 1, 1], [], []>} : vector<64x16xf32>, vector<16x512xf32>, vector<64x512xf32> -> vector<64x512xf32>
      %c0_9 = arith.constant 0 : index
      %c0_10 = arith.constant 0 : index
      %15 = vector.load %arg5[%c0_9, %c0_10] : memref<1x512xf32, #tpu.memory_space<vmem>>, vector<1x512xf32>
      %16 = vector.broadcast %15 : vector<1x512xf32> to vector<64x512xf32>
      %17 = arith.addf %14, %16 : vector<64x512xf32>
      %18 = vector.shape_cast %17 : vector<64x512xf32> to vector<8x8x512xf32>
      %c2_i32 = arith.constant 2 : i32
      %c0_i32_11 = arith.constant 0 : i32
      %19 = arith.cmpi eq, %c2_i32, %c0_i32_11 : i32
      %c1_i32_12 = arith.constant 1 : i32
      %20 = arith.select %19, %c1_i32_12, %c2_i32 : i32
      %21 = arith.remsi %arg1, %20 : i32
      %c0_i32_13 = arith.constant 0 : i32
      %22 = arith.cmpi ne, %21, %c0_i32_13 : i32
      %c0_i32_14 = arith.constant 0 : i32
      %23 = arith.cmpi slt, %21, %c0_i32_14 : i32
      %c0_i32_15 = arith.constant 0 : i32
      %24 = arith.cmpi slt, %20, %c0_i32_15 : i32
      %25 = arith.xori %23, %24 : i1
      %26 = arith.andi %25, %22 : i1
      %27 = arith.addi %21, %20 : i32
      %28 = arith.select %26, %27, %21 : i32
      %29 = arith.index_cast %28 : i32 to index
      %c0_16 = arith.constant 0 : index
      %c0_17 = arith.constant 0 : index
      %c0_18 = arith.constant 0 : index
      %30 = vector.load %arg11[%29, %c0_16, %c0_17, %c0_18] : memref<2x8x8x512xf32, #tpu.memory_space<vmem>>, vector<1x8x8x512xf32>
      %31 = vector.shape_cast %30 : vector<1x8x8x512xf32> to vector<8x8x512xf32>
      %32 = vector.shape_cast %18 : vector<8x8x512xf32> to vector<1x8x8x512xf32>
      tpu.vector_store %arg11[%29, %c0_16, %c0_17, %c0_18], %32 {strides = array<i32>} : memref<2x8x8x512xf32, #tpu.memory_space<vmem>>, vector<1x8x8x512xf32>,
    } else {
    }
    %c0_i32_2 = arith.constant 0 : i32
    %6 = arith.cmpi sgt, %arg1, %c0_i32_2 : i32
    %7 = arith.extui %6 : i1 to i32
    %c0_i32_3 = arith.constant 0 : i32
    %8 = arith.cmpi ne, %7, %c0_i32_3 : i32
    scf.if %8 {
      %c1_i32_6 = arith.constant 1 : i32
      %12 = arith.subi %arg1, %c1_i32_6 : i32
      %c8_i32 = arith.constant 8 : i32
      %13 = arith.muli %12, %c8_i32 : i32
      %c8_i32_7 = arith.constant 8 : i32
      %14 = arith.subi %c8_i32_7, %13 : i32
      %c8_i32_8 = arith.constant 8 : i32
      %15 = arith.minsi %14, %c8_i32_8 : i32
      %c2_i32 = arith.constant 2 : i32
      %c0_i32_9 = arith.constant 0 : i32
      %16 = arith.cmpi eq, %c2_i32, %c0_i32_9 : i32
      %c1_i32_10 = arith.constant 1 : i32
      %17 = arith.select %16, %c1_i32_10, %c2_i32 : i32
      %18 = arith.remsi %12, %17 : i32
      %c0_i32_11 = arith.constant 0 : i32
      %19 = arith.cmpi ne, %18, %c0_i32_11 : i32
      %c0_i32_12 = arith.constant 0 : i32
      %20 = arith.cmpi slt, %18, %c0_i32_12 : i32
      %c0_i32_13 = arith.constant 0 : i32
      %21 = arith.cmpi slt, %17, %c0_i32_13 : i32
      %22 = arith.xori %20, %21 : i1
      %23 = arith.andi %22, %19 : i1
      %24 = arith.addi %18, %17 : i32
      %25 = arith.select %23, %24, %18 : i32
      %c0 = arith.constant 0 : index
      %c0_14 = arith.constant 0 : index
      %26 = vector.load %arg4[%c0, %c0_14] : memref<128x512xf32, #tpu.memory_space<vmem>>, vector<128x512xf32>
      %c0_15 = arith.constant 0 : index
      %c0_16 = arith.constant 0 : index
      %27 = vector.load %arg9[%c0_15, %c0_16] : memref<8x128xf32, #tpu.memory_space<vmem>>, vector<8x128xf32>
      %c0_17 = arith.constant 0 : index
      %c0_18 = arith.constant 0 : index
      %28 = vector.load %arg10[%c0_17, %c0_18] : memref<8x128xf32, #tpu.memory_space<vmem>>, vector<8x128xf32>
      %c0_i32_19 = arith.constant 0 : i32
      %cst = arith.constant dense<0.000000e+00> : vector<8x512xf32>
      %29 = tpu.matmul %27, %26, %cst {dimension_numbers = #tpu.dot_dimension_numbers<[1], [0], [0], [1], [0, 0, 1, 1], [], []>} : vector<8x128xf32>, vector<128x512xf32>, vector<8x512xf32> -> vector<8x512xf32>
      %30 = arith.index_cast %25 : i32 to index
      %31 = arith.index_cast %c0_i32_19 : i32 to index
      %c0_20 = arith.constant 0 : index
      %c0_21 = arith.constant 0 : index
      %32 = vector.load %arg11[%30, %31, %c0_20, %c0_21] : memref<2x8x8x512xf32, #tpu.memory_space<vmem>>, vector<1x1x8x512xf32>
      %33 = vector.shape_cast %32 : vector<1x1x8x512xf32> to vector<8x512xf32>
      %34 = arith.addf %29, %33 : vector<8x512xf32>
      %35 = vector.extract_strided_slice %34 {offsets = [0, 0], sizes = [8, 256], strides = [1, 1]} : vector<8x512xf32> to vector<8x256xf32>
      %36 = arith.negf %35 : vector<8x256xf32>
      %37 = math.exp %36 : vector<8x256xf32>
      %cst_22 = arith.constant 1.000000e+00 : f32
      %38 = vector.broadcast %cst_22 : f32 to vector<8x256xf32>
      %39 = arith.addf %38, %37 : vector<8x256xf32>
      %40 = arith.divf %38, %39 : vector<8x256xf32>
      %41 = vector.extract_strided_slice %34 {offsets = [0, 256], sizes = [8, 128], strides = [1, 1]} : vector<8x512xf32> to vector<8x128xf32>
      %42 = math.tanh %41 : vector<8x128xf32>
      %43 = vector.extract_strided_slice %34 {offsets = [0, 384], sizes = [8, 128], strides = [1, 1]} : vector<8x512xf32> to vector<8x128xf32>
      %44 = arith.negf %43 : vector<8x128xf32>
      %45 = math.exp %44 : vector<8x128xf32>
      %cst_23 = arith.constant 1.000000e+00 : f32
      %46 = vector.broadcast %cst_23 : f32 to vector<8x128xf32>
      %47 = arith.addf %46, %45 : vector<8x128xf32>
      %48 = arith.divf %46, %47 : vector<8x128xf32>
      %49 = vector.extract_strided_slice %40 {offsets = [0, 0], sizes = [8, 128], strides = [1, 1]} : vector<8x256xf32> to vector<8x128xf32>
      %50 = vector.extract_strided_slice %40 {offsets = [0, 128], sizes = [8, 128], strides = [1, 1]} : vector<8x256xf32> to vector<8x128xf32>
      %51 = arith.mulf %50, %28 : vector<8x128xf32>
      %52 = arith.mulf %49, %42 : vector<8x128xf32>
      %53 = arith.addf %51, %52 : vector<8x128xf32>
      %54 = math.tanh %53 : vector<8x128xf32>
      %55 = arith.mulf %48, %54 : vector<8x128xf32>
      %56 = arith.cmpi slt, %c0_i32_19, %15 : i32
      %57 = arith.select %56, %55, %27 : vector<8x128xf32>
      %58 = arith.select %56, %53, %28 : vector<8x128xf32>
      %c1_i32_24 = arith.constant 1 : i32
      %cst_25 = arith.constant dense<0.000000e+00> : vector<8x512xf32>
      %59 = tpu.matmul %57, %26, %cst_25 {dimension_numbers = #tpu.dot_dimension_numbers<[1], [0], [0], [1], [0, 0, 1, 1], [], []>} : vector<8x128xf32>, vector<128x512xf32>, vector<8x512xf32> -> vector<8x512xf32>
      %60 = arith.index_cast %25 : i32 to index
      %61 = arith.index_cast %c1_i32_24 : i32 to index
      %c0_26 = arith.constant 0 : index
      %c0_27 = arith.constant 0 : index
      %62 = vector.load %arg11[%60, %61, %c0_26, %c0_27] : memref<2x8x8x512xf32, #tpu.memory_space<vmem>>, vector<1x1x8x512xf32>
      %63 = vector.shape_cast %62 : vector<1x1x8x512xf32> to vector<8x512xf32>
      %64 = arith.addf %59, %63 : vector<8x512xf32>
      %65 = vector.extract_strided_slice %64 {offsets = [0, 0], sizes = [8, 256], strides = [1, 1]} : vector<8x512xf32> to vector<8x256xf32>
      %66 = arith.negf %65 : vector<8x256xf32>
      %67 = math.exp %66 : vector<8x256xf32>
      %cst_28 = arith.constant 1.000000e+00 : f32
      %68 = vector.broadcast %cst_28 : f32 to vector<8x256xf32>
      %69 = arith.addf %68, %67 : vector<8x256xf32>
      %70 = arith.divf %68, %69 : vector<8x256xf32>
      %71 = vector.extract_strided_slice %64 {offsets = [0, 256], sizes = [8, 128], strides = [1, 1]} : vector<8x512xf32> to vector<8x128xf32>
      %72 = math.tanh %71 : vector<8x128xf32>
      %73 = vector.extract_strided_slice %64 {offsets = [0, 384], sizes = [8, 128], strides = [1, 1]} : vector<8x512xf32> to vector<8x128xf32>
      %74 = arith.negf %73 : vector<8x128xf32>
      %75 = math.exp %74 : vector<8x128xf32>
      %cst_29 = arith.constant 1.000000e+00 : f32
      %76 = vector.broadcast %cst_29 : f32 to vector<8x128xf32>
      %77 = arith.addf %76, %75 : vector<8x128xf32>
      %78 = arith.divf %76, %77 : vector<8x128xf32>
      %79 = vector.extract_strided_slice %70 {offsets = [0, 0], sizes = [8, 128], strides = [1, 1]} : vector<8x256xf32> to vector<8x128xf32>
      %80 = vector.extract_strided_slice %70 {offsets = [0, 128], sizes = [8, 128], strides = [1, 1]} : vector<8x256xf32> to vector<8x128xf32>
      %81 = arith.mulf %80, %58 : vector<8x128xf32>
      %82 = arith.mulf %79, %72 : vector<8x128xf32>
      %83 = arith.addf %81, %82 : vector<8x128xf32>
      %84 = math.tanh %83 : vector<8x128xf32>
      %85 = arith.mulf %78, %84 : vector<8x128xf32>
      %86 = arith.cmpi slt, %c1_i32_24, %15 : i32
      %87 = arith.select %86, %85, %57 : vector<8x128xf32>
      %88 = arith.select %86, %83, %58 : vector<8x128xf32>
      %c2_i32_30 = arith.constant 2 : i32
      %cst_31 = arith.constant dense<0.000000e+00> : vector<8x512xf32>
      %89 = tpu.matmul %87, %26, %cst_31 {dimension_numbers = #tpu.dot_dimension_numbers<[1], [0], [0], [1], [0, 0, 1, 1], [], []>} : vector<8x128xf32>, vector<128x512xf32>, vector<8x512xf32> -> vector<8x512xf32>
      %90 = arith.index_cast %25 : i32 to index
      %91 = arith.index_cast %c2_i32_30 : i32 to index
      %c0_32 = arith.constant 0 : index
      %c0_33 = arith.constant 0 : index
      %92 = vector.load %arg11[%90, %91, %c0_32, %c0_33] : memref<2x8x8x512xf32, #tpu.memory_space<vmem>>, vector<1x1x8x512xf32>
      %93 = vector.shape_cast %92 : vector<1x1x8x512xf32> to vector<8x512xf32>
      %94 = arith.addf %89, %93 : vector<8x512xf32>
      %95 = vector.extract_strided_slice %94 {offsets = [0, 0], sizes = [8, 256], strides = [1, 1]} : vector<8x512xf32> to vector<8x256xf32>
      %96 = arith.negf %95 : vector<8x256xf32>
      %97 = math.exp %96 : vector<8x256xf32>
      %cst_34 = arith.constant 1.000000e+00 : f32
      %98 = vector.broadcast %cst_34 : f32 to vector<8x256xf32>
      %99 = arith.addf %98, %97 : vector<8x256xf32>
      %100 = arith.divf %98, %99 : vector<8x256xf32>
      %101 = vector.extract_strided_slice %94 {offsets = [0, 256], sizes = [8, 128], strides = [1, 1]} : vector<8x512xf32> to vector<8x128xf32>
      %102 = math.tanh %101 : vector<8x128xf32>
      %103 = vector.extract_strided_slice %94 {offsets = [0, 384], sizes = [8, 128], strides = [1, 1]} : vector<8x512xf32> to vector<8x128xf32>
      %104 = arith.negf %103 : vector<8x128xf32>
      %105 = math.exp %104 : vector<8x128xf32>
      %cst_35 = arith.constant 1.000000e+00 : f32
      %106 = vector.broadcast %cst_35 : f32 to vector<8x128xf32>
      %107 = arith.addf %106, %105 : vector<8x128xf32>
      %108 = arith.divf %106, %107 : vector<8x128xf32>
      %109 = vector.extract_strided_slice %100 {offsets = [0, 0], sizes = [8, 128], strides = [1, 1]} : vector<8x256xf32> to vector<8x128xf32>
      %110 = vector.extract_strided_slice %100 {offsets = [0, 128], sizes = [8, 128], strides = [1, 1]} : vector<8x256xf32> to vector<8x128xf32>
      %111 = arith.mulf %110, %88 : vector<8x128xf32>
      %112 = arith.mulf %109, %102 : vector<8x128xf32>
      %113 = arith.addf %111, %112 : vector<8x128xf32>
      %114 = math.tanh %113 : vector<8x128xf32>
      %115 = arith.mulf %108, %114 : vector<8x128xf32>
      %116 = arith.cmpi slt, %c2_i32_30, %15 : i32
      %117 = arith.select %116, %115, %87 : vector<8x128xf32>
      %118 = arith.select %116, %113, %88 : vector<8x128xf32>
      %c3_i32 = arith.constant 3 : i32
      %cst_36 = arith.constant dense<0.000000e+00> : vector<8x512xf32>
      %119 = tpu.matmul %117, %26, %cst_36 {dimension_numbers = #tpu.dot_dimension_numbers<[1], [0], [0], [1], [0, 0, 1, 1], [], []>} : vector<8x128xf32>, vector<128x512xf32>, vector<8x512xf32> -> vector<8x512xf32>
      %120 = arith.index_cast %25 : i32 to index
      %121 = arith.index_cast %c3_i32 : i32 to index
      %c0_37 = arith.constant 0 : index
      %c0_38 = arith.constant 0 : index
      %122 = vector.load %arg11[%120, %121, %c0_37, %c0_38] : memref<2x8x8x512xf32, #tpu.memory_space<vmem>>, vector<1x1x8x512xf32>
      %123 = vector.shape_cast %122 : vector<1x1x8x512xf32> to vector<8x512xf32>
      %124 = arith.addf %119, %123 : vector<8x512xf32>
      %125 = vector.extract_strided_slice %124 {offsets = [0, 0], sizes = [8, 256], strides = [1, 1]} : vector<8x512xf32> to vector<8x256xf32>
      %126 = arith.negf %125 : vector<8x256xf32>
      %127 = math.exp %126 : vector<8x256xf32>
      %cst_39 = arith.constant 1.000000e+00 : f32
      %128 = vector.broadcast %cst_39 : f32 to vector<8x256xf32>
      %129 = arith.addf %128, %127 : vector<8x256xf32>
      %130 = arith.divf %128, %129 : vector<8x256xf32>
      %131 = vector.extract_strided_slice %124 {offsets = [0, 256], sizes = [8, 128], strides = [1, 1]} : vector<8x512xf32> to vector<8x128xf32>
      %132 = math.tanh %131 : vector<8x128xf32>
      %133 = vector.extract_strided_slice %124 {offsets = [0, 384], sizes = [8, 128], strides = [1, 1]} : vector<8x512xf32> to vector<8x128xf32>
      %134 = arith.negf %133 : vector<8x128xf32>
      %135 = math.exp %134 : vector<8x128xf32>
      %cst_40 = arith.constant 1.000000e+00 : f32
      %136 = vector.broadcast %cst_40 : f32 to vector<8x128xf32>
      %137 = arith.addf %136, %135 : vector<8x128xf32>
      %138 = arith.divf %136, %137 : vector<8x128xf32>
      %139 = vector.extract_strided_slice %130 {offsets = [0, 0], sizes = [8, 128], strides = [1, 1]} : vector<8x256xf32> to vector<8x128xf32>
      %140 = vector.extract_strided_slice %130 {offsets = [0, 128], sizes = [8, 128], strides = [1, 1]} : vector<8x256xf32> to vector<8x128xf32>
      %141 = arith.mulf %140, %118 : vector<8x128xf32>
      %142 = arith.mulf %139, %132 : vector<8x128xf32>
      %143 = arith.addf %141, %142 : vector<8x128xf32>
      %144 = math.tanh %143 : vector<8x128xf32>
      %145 = arith.mulf %138, %144 : vector<8x128xf32>
      %146 = arith.cmpi slt, %c3_i32, %15 : i32
      %147 = arith.select %146, %145, %117 : vector<8x128xf32>
      %148 = arith.select %146, %143, %118 : vector<8x128xf32>
      %c4_i32 = arith.constant 4 : i32
      %cst_41 = arith.constant dense<0.000000e+00> : vector<8x512xf32>
      %149 = tpu.matmul %147, %26, %cst_41 {dimension_numbers = #tpu.dot_dimension_numbers<[1], [0], [0], [1], [0, 0, 1, 1], [], []>} : vector<8x128xf32>, vector<128x512xf32>, vector<8x512xf32> -> vector<8x512xf32>
      %150 = arith.index_cast %25 : i32 to index
      %151 = arith.index_cast %c4_i32 : i32 to index
      %c0_42 = arith.constant 0 : index
      %c0_43 = arith.constant 0 : index
      %152 = vector.load %arg11[%150, %151, %c0_42, %c0_43] : memref<2x8x8x512xf32, #tpu.memory_space<vmem>>, vector<1x1x8x512xf32>
      %153 = vector.shape_cast %152 : vector<1x1x8x512xf32> to vector<8x512xf32>
      %154 = arith.addf %149, %153 : vector<8x512xf32>
      %155 = vector.extract_strided_slice %154 {offsets = [0, 0], sizes = [8, 256], strides = [1, 1]} : vector<8x512xf32> to vector<8x256xf32>
      %156 = arith.negf %155 : vector<8x256xf32>
      %157 = math.exp %156 : vector<8x256xf32>
      %cst_44 = arith.constant 1.000000e+00 : f32
      %158 = vector.broadcast %cst_44 : f32 to vector<8x256xf32>
      %159 = arith.addf %158, %157 : vector<8x256xf32>
      %160 = arith.divf %158, %159 : vector<8x256xf32>
      %161 = vector.extract_strided_slice %154 {offsets = [0, 256], sizes = [8, 128], strides = [1, 1]} : vector<8x512xf32> to vector<8x128xf32>
      %162 = math.tanh %161 : vector<8x128xf32>
      %163 = vector.extract_strided_slice %154 {offsets = [0, 384], sizes = [8, 128], strides = [1, 1]} : vector<8x512xf32> to vector<8x128xf32>
      %164 = arith.negf %163 : vector<8x128xf32>
      %165 = math.exp %164 : vector<8x128xf32>
      %cst_45 = arith.constant 1.000000e+00 : f32
      %166 = vector.broadcast %cst_45 : f32 to vector<8x128xf32>
      %167 = arith.addf %166, %165 : vector<8x128xf32>
      %168 = arith.divf %166, %167 : vector<8x128xf32>
      %169 = vector.extract_strided_slice %160 {offsets = [0, 0], sizes = [8, 128], strides = [1, 1]} : vector<8x256xf32> to vector<8x128xf32>
      %170 = vector.extract_strided_slice %160 {offsets = [0, 128], sizes = [8, 128], strides = [1, 1]} : vector<8x256xf32> to vector<8x128xf32>
      %171 = arith.mulf %170, %148 : vector<8x128xf32>
      %172 = arith.mulf %169, %162 : vector<8x128xf32>
      %173 = arith.addf %171, %172 : vector<8x128xf32>
      %174 = math.tanh %173 : vector<8x128xf32>
      %175 = arith.mulf %168, %174 : vector<8x128xf32>
      %176 = arith.cmpi slt, %c4_i32, %15 : i32
      %177 = arith.select %176, %175, %147 : vector<8x128xf32>
      %178 = arith.select %176, %173, %148 : vector<8x128xf32>
      %c5_i32 = arith.constant 5 : i32
      %cst_46 = arith.constant dense<0.000000e+00> : vector<8x512xf32>
      %179 = tpu.matmul %177, %26, %cst_46 {dimension_numbers = #tpu.dot_dimension_numbers<[1], [0], [0], [1], [0, 0, 1, 1], [], []>} : vector<8x128xf32>, vector<128x512xf32>, vector<8x512xf32> -> vector<8x512xf32>
      %180 = arith.index_cast %25 : i32 to index
      %181 = arith.index_cast %c5_i32 : i32 to index
      %c0_47 = arith.constant 0 : index
      %c0_48 = arith.constant 0 : index
      %182 = vector.load %arg11[%180, %181, %c0_47, %c0_48] : memref<2x8x8x512xf32, #tpu.memory_space<vmem>>, vector<1x1x8x512xf32>
      %183 = vector.shape_cast %182 : vector<1x1x8x512xf32> to vector<8x512xf32>
      %184 = arith.addf %179, %183 : vector<8x512xf32>
      %185 = vector.extract_strided_slice %184 {offsets = [0, 0], sizes = [8, 256], strides = [1, 1]} : vector<8x512xf32> to vector<8x256xf32>
      %186 = arith.negf %185 : vector<8x256xf32>
      %187 = math.exp %186 : vector<8x256xf32>
      %cst_49 = arith.constant 1.000000e+00 : f32
      %188 = vector.broadcast %cst_49 : f32 to vector<8x256xf32>
      %189 = arith.addf %188, %187 : vector<8x256xf32>
      %190 = arith.divf %188, %189 : vector<8x256xf32>
      %191 = vector.extract_strided_slice %184 {offsets = [0, 256], sizes = [8, 128], strides = [1, 1]} : vector<8x512xf32> to vector<8x128xf32>
      %192 = math.tanh %191 : vector<8x128xf32>
      %193 = vector.extract_strided_slice %184 {offsets = [0, 384], sizes = [8, 128], strides = [1, 1]} : vector<8x512xf32> to vector<8x128xf32>
      %194 = arith.negf %193 : vector<8x128xf32>
      %195 = math.exp %194 : vector<8x128xf32>
      %cst_50 = arith.constant 1.000000e+00 : f32
      %196 = vector.broadcast %cst_50 : f32 to vector<8x128xf32>
      %197 = arith.addf %196, %195 : vector<8x128xf32>
      %198 = arith.divf %196, %197 : vector<8x128xf32>
      %199 = vector.extract_strided_slice %190 {offsets = [0, 0], sizes = [8, 128], strides = [1, 1]} : vector<8x256xf32> to vector<8x128xf32>
      %200 = vector.extract_strided_slice %190 {offsets = [0, 128], sizes = [8, 128], strides = [1, 1]} : vector<8x256xf32> to vector<8x128xf32>
      %201 = arith.mulf %200, %178 : vector<8x128xf32>
      %202 = arith.mulf %199, %192 : vector<8x128xf32>
      %203 = arith.addf %201, %202 : vector<8x128xf32>
      %204 = math.tanh %203 : vector<8x128xf32>
      %205 = arith.mulf %198, %204 : vector<8x128xf32>
      %206 = arith.cmpi slt, %c5_i32, %15 : i32
      %207 = arith.select %206, %205, %177 : vector<8x128xf32>
      %208 = arith.select %206, %203, %178 : vector<8x128xf32>
      %c6_i32 = arith.constant 6 : i32
      %cst_51 = arith.constant dense<0.000000e+00> : vector<8x512xf32>
      %209 = tpu.matmul %207, %26, %cst_51 {dimension_numbers = #tpu.dot_dimension_numbers<[1], [0], [0], [1], [0, 0, 1, 1], [], []>} : vector<8x128xf32>, vector<128x512xf32>, vector<8x512xf32> -> vector<8x512xf32>
      %210 = arith.index_cast %25 : i32 to index
      %211 = arith.index_cast %c6_i32 : i32 to index
      %c0_52 = arith.constant 0 : index
      %c0_53 = arith.constant 0 : index
      %212 = vector.load %arg11[%210, %211, %c0_52, %c0_53] : memref<2x8x8x512xf32, #tpu.memory_space<vmem>>, vector<1x1x8x512xf32>
      %213 = vector.shape_cast %212 : vector<1x1x8x512xf32> to vector<8x512xf32>
      %214 = arith.addf %209, %213 : vector<8x512xf32>
      %215 = vector.extract_strided_slice %214 {offsets = [0, 0], sizes = [8, 256], strides = [1, 1]} : vector<8x512xf32> to vector<8x256xf32>
      %216 = arith.negf %215 : vector<8x256xf32>
      %217 = math.exp %216 : vector<8x256xf32>
      %cst_54 = arith.constant 1.000000e+00 : f32
      %218 = vector.broadcast %cst_54 : f32 to vector<8x256xf32>
      %219 = arith.addf %218, %217 : vector<8x256xf32>
      %220 = arith.divf %218, %219 : vector<8x256xf32>
      %221 = vector.extract_strided_slice %214 {offsets = [0, 256], sizes = [8, 128], strides = [1, 1]} : vector<8x512xf32> to vector<8x128xf32>
      %222 = math.tanh %221 : vector<8x128xf32>
      %223 = vector.extract_strided_slice %214 {offsets = [0, 384], sizes = [8, 128], strides = [1, 1]} : vector<8x512xf32> to vector<8x128xf32>
      %224 = arith.negf %223 : vector<8x128xf32>
      %225 = math.exp %224 : vector<8x128xf32>
      %cst_55 = arith.constant 1.000000e+00 : f32
      %226 = vector.broadcast %cst_55 : f32 to vector<8x128xf32>
      %227 = arith.addf %226, %225 : vector<8x128xf32>
      %228 = arith.divf %226, %227 : vector<8x128xf32>
      %229 = vector.extract_strided_slice %220 {offsets = [0, 0], sizes = [8, 128], strides = [1, 1]} : vector<8x256xf32> to vector<8x128xf32>
      %230 = vector.extract_strided_slice %220 {offsets = [0, 128], sizes = [8, 128], strides = [1, 1]} : vector<8x256xf32> to vector<8x128xf32>
      %231 = arith.mulf %230, %208 : vector<8x128xf32>
      %232 = arith.mulf %229, %222 : vector<8x128xf32>
      %233 = arith.addf %231, %232 : vector<8x128xf32>
      %234 = math.tanh %233 : vector<8x128xf32>
      %235 = arith.mulf %228, %234 : vector<8x128xf32>
      %236 = arith.cmpi slt, %c6_i32, %15 : i32
      %237 = arith.select %236, %235, %207 : vector<8x128xf32>
      %238 = arith.select %236, %233, %208 : vector<8x128xf32>
      %c7_i32 = arith.constant 7 : i32
      %cst_56 = arith.constant dense<0.000000e+00> : vector<8x512xf32>
      %239 = tpu.matmul %237, %26, %cst_56 {dimension_numbers = #tpu.dot_dimension_numbers<[1], [0], [0], [1], [0, 0, 1, 1], [], []>} : vector<8x128xf32>, vector<128x512xf32>, vector<8x512xf32> -> vector<8x512xf32>
      %240 = arith.index_cast %25 : i32 to index
      %241 = arith.index_cast %c7_i32 : i32 to index
      %c0_57 = arith.constant 0 : index
      %c0_58 = arith.constant 0 : index
      %242 = vector.load %arg11[%240, %241, %c0_57, %c0_58] : memref<2x8x8x512xf32, #tpu.memory_space<vmem>>, vector<1x1x8x512xf32>
      %243 = vector.shape_cast %242 : vector<1x1x8x512xf32> to vector<8x512xf32>
      %244 = arith.addf %239, %243 : vector<8x512xf32>
      %245 = vector.extract_strided_slice %244 {offsets = [0, 0], sizes = [8, 256], strides = [1, 1]} : vector<8x512xf32> to vector<8x256xf32>
      %246 = arith.negf %245 : vector<8x256xf32>
      %247 = math.exp %246 : vector<8x256xf32>
      %cst_59 = arith.constant 1.000000e+00 : f32
      %248 = vector.broadcast %cst_59 : f32 to vector<8x256xf32>
      %249 = arith.addf %248, %247 : vector<8x256xf32>
      %250 = arith.divf %248, %249 : vector<8x256xf32>
      %251 = vector.extract_strided_slice %244 {offsets = [0, 256], sizes = [8, 128], strides = [1, 1]} : vector<8x512xf32> to vector<8x128xf32>
      %252 = math.tanh %251 : vector<8x128xf32>
      %253 = vector.extract_strided_slice %244 {offsets = [0, 384], sizes = [8, 128], strides = [1, 1]} : vector<8x512xf32> to vector<8x128xf32>
      %254 = arith.negf %253 : vector<8x128xf32>
      %255 = math.exp %254 : vector<8x128xf32>
      %cst_60 = arith.constant 1.000000e+00 : f32
      %256 = vector.broadcast %cst_60 : f32 to vector<8x128xf32>
      %257 = arith.addf %256, %255 : vector<8x128xf32>
      %258 = arith.divf %256, %257 : vector<8x128xf32>
      %259 = vector.extract_strided_slice %250 {offsets = [0, 0], sizes = [8, 128], strides = [1, 1]} : vector<8x256xf32> to vector<8x128xf32>
      %260 = vector.extract_strided_slice %250 {offsets = [0, 128], sizes = [8, 128], strides = [1, 1]} : vector<8x256xf32> to vector<8x128xf32>
      %261 = arith.mulf %260, %238 : vector<8x128xf32>
      %262 = arith.mulf %259, %252 : vector<8x128xf32>
      %263 = arith.addf %261, %262 : vector<8x128xf32>
      %264 = math.tanh %263 : vector<8x128xf32>
      %265 = arith.mulf %258, %264 : vector<8x128xf32>
      %266 = arith.cmpi slt, %c7_i32, %15 : i32
      %267 = arith.select %266, %265, %237 : vector<8x128xf32>
      %268 = arith.select %266, %263, %238 : vector<8x128xf32>
      %c8_i32_61 = arith.constant 8 : i32
      %c0_62 = arith.constant 0 : index
      %c0_63 = arith.constant 0 : index
      %269 = vector.load %arg9[%c0_62, %c0_63] : memref<8x128xf32, #tpu.memory_space<vmem>>, vector<8x128xf32>
      tpu.vector_store %arg9[%c0_62, %c0_63], %267 {strides = array<i32>} : memref<8x128xf32, #tpu.memory_space<vmem>>, vector<8x128xf32>,
      %c0_64 = arith.constant 0 : index
      %c0_65 = arith.constant 0 : index
      %270 = vector.load %arg10[%c0_64, %c0_65] : memref<8x128xf32, #tpu.memory_space<vmem>>, vector<8x128xf32>
      tpu.vector_store %arg10[%c0_64, %c0_65], %268 {strides = array<i32>} : memref<8x128xf32, #tpu.memory_space<vmem>>, vector<8x128xf32>,
    } else {
    }
    %c1_i32_4 = arith.constant 1 : i32
    %9 = arith.cmpi eq, %arg1, %c1_i32_4 : i32
    %10 = arith.extui %9 : i1 to i32
    %c0_i32_5 = arith.constant 0 : i32
    %11 = arith.cmpi ne, %10, %c0_i32_5 : i32
    scf.if %11 {
      %c0 = arith.constant 0 : index
      %c0_6 = arith.constant 0 : index
      %12 = vector.load %arg9[%c0, %c0_6] : memref<8x128xf32, #tpu.memory_space<vmem>>, vector<8x128xf32>
      %c0_7 = arith.constant 0 : index
      %c0_8 = arith.constant 0 : index
      %13 = vector.load %arg6[%c0_7, %c0_8] : memref<1x128xf32, #tpu.memory_space<vmem>>, vector<1x128xf32>
      %14 = vector.broadcast %13 : vector<1x128xf32> to vector<8x128xf32>
      %15 = arith.mulf %12, %14 : vector<8x128xf32>
      %cst = arith.constant dense<0.000000e+00> : vector<8xf32>
      %16 = vector.multi_reduction <add>, %15, %cst [1] : vector<8x128xf32> to vector<8xf32>
      %17 = vector.shape_cast %16 : vector<8xf32> to vector<8x1xf32>
      %c0_9 = arith.constant 0 : index
      %c0_10 = arith.constant 0 : index
      %18 = vector.load %arg7[%c0_9, %c0_10] : memref<1x1xf32, #tpu.memory_space<vmem>>, vector<1x1xf32>
      %19 = vector.broadcast %18 : vector<1x1xf32> to vector<8x1xf32>
      %20 = arith.addf %17, %19 : vector<8x1xf32>
      %c0_11 = arith.constant 0 : index
      %c0_12 = arith.constant 0 : index
      %21 = vector.load %arg8[%c0_11, %c0_12] : memref<8x1xf32, #tpu.memory_space<vmem>>, vector<8x1xf32>
      tpu.vector_store %arg8[%c0_11, %c0_12], %20 {strides = array<i32>} : memref<8x1xf32, #tpu.memory_space<vmem>>, vector<8x1xf32>,
    } else {
    }
    return
  }
  func.func @transform_0(%arg0: i32, %arg1: i32) -> (i32, i32) {
    %c1_i32 = arith.constant 1 : i32
    %0 = arith.muli %arg0, %c1_i32 : i32
    %c0_i32 = arith.constant 0 : i32
    %1 = arith.minsi %arg1, %c0_i32 : i32
    %2 = arith.addi %0, %1 : i32
    %c0_i32_0 = arith.constant 0 : i32
    %c0_i32_1 = arith.constant 0 : i32
    return %2, %c0_i32_0 : i32, i32
  }
  func.func @transform_1(%arg0: i32, %arg1: i32) -> (i32, i32) {
    %c0_i32 = arith.constant 0 : i32
    %c0_i32_0 = arith.constant 0 : i32
    %c0_i32_1 = arith.constant 0 : i32
    return %c0_i32, %c0_i32_0 : i32, i32
  }
  func.func @transform_2(%arg0: i32, %arg1: i32) -> (i32, i32) {
    %c0_i32 = arith.constant 0 : i32
    %c0_i32_0 = arith.constant 0 : i32
    %c0_i32_1 = arith.constant 0 : i32
    return %c0_i32, %c0_i32_0 : i32, i32
  }
  func.func @transform_3(%arg0: i32, %arg1: i32) -> (i32, i32) {
    %c0_i32 = arith.constant 0 : i32
    %c0_i32_0 = arith.constant 0 : i32
    %c0_i32_1 = arith.constant 0 : i32
    return %c0_i32, %c0_i32_0 : i32, i32
  }
  func.func @transform_4(%arg0: i32, %arg1: i32) -> (i32, i32) {
    %c0_i32 = arith.constant 0 : i32
    %c0_i32_0 = arith.constant 0 : i32
    %c0_i32_1 = arith.constant 0 : i32
    return %c0_i32, %c0_i32_0 : i32, i32
  }
  func.func @transform_5(%arg0: i32, %arg1: i32) -> (i32, i32) {
    %c0_i32 = arith.constant 0 : i32
    %c0_i32_0 = arith.constant 0 : i32
    %c0_i32_1 = arith.constant 0 : i32
    return %c0_i32, %c0_i32_0 : i32, i32
  }
  func.func @transform_6(%arg0: i32, %arg1: i32) -> (i32, i32) {
    %c0_i32 = arith.constant 0 : i32
    %c0_i32_0 = arith.constant 0 : i32
    return %arg0, %c0_i32 : i32, i32
  }
}

module attributes {stable_mosaic.version = 11 : i64} {
  func.func @_lstm_fc_kernel(%arg0: i32, %arg1: i32, %arg2: memref<64x16xf32, #tpu.memory_space<vmem>>, %arg3: memref<16x512xf32, #tpu.memory_space<vmem>>, %arg4: memref<128x512xf32, #tpu.memory_space<vmem>>, %arg5: memref<1x512xf32, #tpu.memory_space<vmem>>, %arg6: memref<1x128xf32, #tpu.memory_space<vmem>>, %arg7: memref<1x1xf32, #tpu.memory_space<vmem>>, %arg8: memref<8x1xf32, #tpu.memory_space<vmem>>, %arg9: memref<8x128xf32, #tpu.memory_space<vmem>>, %arg10: memref<8x128xf32, #tpu.memory_space<vmem>>, %arg11: memref<2x8x8x512xf32, #tpu.memory_space<vmem>>) attributes {dimension_semantics = [#tpu.dimension_semantics<parallel>, #tpu.dimension_semantics<arbitrary>], iteration_bounds = array<i64: 1, 2>, scalar_prefetch = 0 : i64, scratch_operands = 3 : i64, tpu.core_type = #tpu.core_type<tc>, window_params = [{transform_indices = @transform_0, window_bounds = array<i64: 64, 16>}, {pipeline_mode = #tpu.pipeline_mode<synchronous>, transform_indices = @transform_1, window_bounds = array<i64: 16, 512>}, {pipeline_mode = #tpu.pipeline_mode<synchronous>, transform_indices = @transform_2, window_bounds = array<i64: 128, 512>}, {pipeline_mode = #tpu.pipeline_mode<synchronous>, transform_indices = @transform_3, window_bounds = array<i64: 1, 512>}, {pipeline_mode = #tpu.pipeline_mode<synchronous>, transform_indices = @transform_4, window_bounds = array<i64: 1, 128>}, {pipeline_mode = #tpu.pipeline_mode<synchronous>, transform_indices = @transform_5, window_bounds = array<i64: 1, 1>}, {transform_indices = @transform_6, window_bounds = array<i64: 8, 1>}]} {
    %c0_i32 = arith.constant 0 : i32
    %0 = arith.cmpi eq, %arg1, %c0_i32 : i32
    %1 = arith.extui %0 : i1 to i32
    %c0_i32_0 = arith.constant 0 : i32
    %2 = arith.cmpi ne, %1, %c0_i32_0 : i32
    scf.if %2 {
      %cst = arith.constant 0.000000e+00 : f32
      %12 = vector.broadcast %cst : f32 to vector<8x128xf32>
      %c0 = arith.constant 0 : index
      %c0_6 = arith.constant 0 : index
      %13 = vector.load %arg9[%c0, %c0_6] : memref<8x128xf32, #tpu.memory_space<vmem>>, vector<8x128xf32>
      tpu.vector_store %arg9[%c0, %c0_6], %12 {strides = array<i32>} : memref<8x128xf32, #tpu.memory_space<vmem>>, vector<8x128xf32>,
      %cst_7 = arith.constant 0.000000e+00 : f32
      %14 = vector.broadcast %cst_7 : f32 to vector<8x128xf32>
      %c0_8 = arith.constant 0 : index
      %c0_9 = arith.constant 0 : index
      %15 = vector.load %arg10[%c0_8, %c0_9] : memref<8x128xf32, #tpu.memory_space<vmem>>, vector<8x128xf32>
      tpu.vector_store %arg10[%c0_8, %c0_9], %14 {strides = array<i32>} : memref<8x128xf32, #tpu.memory_space<vmem>>, vector<8x128xf32>,
    } else {
    }
    %c1_i32 = arith.constant 1 : i32
    %3 = arith.cmpi slt, %arg1, %c1_i32 : i32
    %4 = arith.extui %3 : i1 to i32
    %c0_i32_1 = arith.constant 0 : i32
    %5 = arith.cmpi ne, %4, %c0_i32_1 : i32
    scf.if %5 {
      %c0 = arith.constant 0 : index
      %c0_6 = arith.constant 0 : index
      %12 = vector.load %arg2[%c0, %c0_6] : memref<64x16xf32, #tpu.memory_space<vmem>>, vector<64x16xf32>
      %c0_7 = arith.constant 0 : index
      %c0_8 = arith.constant 0 : index
      %13 = vector.load %arg3[%c0_7, %c0_8] : memref<16x512xf32, #tpu.memory_space<vmem>>, vector<16x512xf32>
      %cst = arith.constant dense<0.000000e+00> : vector<64x512xf32>
      %14 = tpu.matmul %12, %13, %cst {dimension_numbers = #tpu.dot_dimension_numbers<[1], [0], [0], [1], [0, 0, 1, 1], [], []>} : vector<64x16xf32>, vector<16x512xf32>, vector<64x512xf32> -> vector<64x512xf32>
      %c0_9 = arith.constant 0 : index
      %c0_10 = arith.constant 0 : index
      %15 = vector.load %arg5[%c0_9, %c0_10] : memref<1x512xf32, #tpu.memory_space<vmem>>, vector<1x512xf32>
      %16 = vector.broadcast %15 : vector<1x512xf32> to vector<64x512xf32>
      %17 = arith.addf %14, %16 : vector<64x512xf32>
      %18 = vector.shape_cast %17 : vector<64x512xf32> to vector<8x8x512xf32>
      %c2_i32 = arith.constant 2 : i32
      %c0_i32_11 = arith.constant 0 : i32
      %19 = arith.cmpi eq, %c2_i32, %c0_i32_11 : i32
      %c1_i32_12 = arith.constant 1 : i32
      %20 = arith.select %19, %c1_i32_12, %c2_i32 : i32
      %21 = arith.remsi %arg1, %20 : i32
      %c0_i32_13 = arith.constant 0 : i32
      %22 = arith.cmpi ne, %21, %c0_i32_13 : i32
      %c0_i32_14 = arith.constant 0 : i32
      %23 = arith.cmpi slt, %21, %c0_i32_14 : i32
      %c0_i32_15 = arith.constant 0 : i32
      %24 = arith.cmpi slt, %20, %c0_i32_15 : i32
      %25 = arith.xori %23, %24 : i1
      %26 = arith.andi %25, %22 : i1
      %27 = arith.addi %21, %20 : i32
      %28 = arith.select %26, %27, %21 : i32
      %29 = arith.index_cast %28 : i32 to index
      %c0_16 = arith.constant 0 : index
      %c0_17 = arith.constant 0 : index
      %c0_18 = arith.constant 0 : index
      %30 = vector.load %arg11[%29, %c0_16, %c0_17, %c0_18] : memref<2x8x8x512xf32, #tpu.memory_space<vmem>>, vector<1x8x8x512xf32>
      %31 = vector.shape_cast %30 : vector<1x8x8x512xf32> to vector<8x8x512xf32>
      %32 = vector.shape_cast %18 : vector<8x8x512xf32> to vector<1x8x8x512xf32>
      tpu.vector_store %arg11[%29, %c0_16, %c0_17, %c0_18], %32 {strides = array<i32>} : memref<2x8x8x512xf32, #tpu.memory_space<vmem>>, vector<1x8x8x512xf32>,
    } else {
    }
    %c0_i32_2 = arith.constant 0 : i32
    %6 = arith.cmpi sgt, %arg1, %c0_i32_2 : i32
    %7 = arith.extui %6 : i1 to i32
    %c0_i32_3 = arith.constant 0 : i32
    %8 = arith.cmpi ne, %7, %c0_i32_3 : i32
    scf.if %8 {
      %c1_i32_6 = arith.constant 1 : i32
      %12 = arith.subi %arg1, %c1_i32_6 : i32
      %c8_i32 = arith.constant 8 : i32
      %13 = arith.muli %12, %c8_i32 : i32
      %c8_i32_7 = arith.constant 8 : i32
      %14 = arith.subi %c8_i32_7, %13 : i32
      %c8_i32_8 = arith.constant 8 : i32
      %15 = arith.minsi %14, %c8_i32_8 : i32
      %c2_i32 = arith.constant 2 : i32
      %c0_i32_9 = arith.constant 0 : i32
      %16 = arith.cmpi eq, %c2_i32, %c0_i32_9 : i32
      %c1_i32_10 = arith.constant 1 : i32
      %17 = arith.select %16, %c1_i32_10, %c2_i32 : i32
      %18 = arith.remsi %12, %17 : i32
      %c0_i32_11 = arith.constant 0 : i32
      %19 = arith.cmpi ne, %18, %c0_i32_11 : i32
      %c0_i32_12 = arith.constant 0 : i32
      %20 = arith.cmpi slt, %18, %c0_i32_12 : i32
      %c0_i32_13 = arith.constant 0 : i32
      %21 = arith.cmpi slt, %17, %c0_i32_13 : i32
      %22 = arith.xori %20, %21 : i1
      %23 = arith.andi %22, %19 : i1
      %24 = arith.addi %18, %17 : i32
      %25 = arith.select %23, %24, %18 : i32
      %c0 = arith.constant 0 : index
      %c0_14 = arith.constant 0 : index
      %26 = vector.load %arg4[%c0, %c0_14] : memref<128x512xf32, #tpu.memory_space<vmem>>, vector<128x512xf32>
      %c0_15 = arith.constant 0 : index
      %c0_16 = arith.constant 0 : index
      %27 = vector.load %arg9[%c0_15, %c0_16] : memref<8x128xf32, #tpu.memory_space<vmem>>, vector<8x128xf32>
      %c0_17 = arith.constant 0 : index
      %c0_18 = arith.constant 0 : index
      %28 = vector.load %arg10[%c0_17, %c0_18] : memref<8x128xf32, #tpu.memory_space<vmem>>, vector<8x128xf32>
      %c0_i32_19 = arith.constant 0 : i32
      %cst = arith.constant dense<0.000000e+00> : vector<8x512xf32>
      %29 = tpu.matmul %27, %26, %cst {dimension_numbers = #tpu.dot_dimension_numbers<[1], [0], [0], [1], [0, 0, 1, 1], [], []>} : vector<8x128xf32>, vector<128x512xf32>, vector<8x512xf32> -> vector<8x512xf32>
      %30 = arith.index_cast %25 : i32 to index
      %31 = arith.index_cast %c0_i32_19 : i32 to index
      %c0_20 = arith.constant 0 : index
      %c0_21 = arith.constant 0 : index
      %32 = vector.load %arg11[%30, %31, %c0_20, %c0_21] : memref<2x8x8x512xf32, #tpu.memory_space<vmem>>, vector<1x1x8x512xf32>
      %33 = vector.shape_cast %32 : vector<1x1x8x512xf32> to vector<8x512xf32>
      %34 = arith.addf %29, %33 : vector<8x512xf32>
      %35 = vector.extract_strided_slice %34 {offsets = [0, 0], sizes = [8, 256], strides = [1, 1]} : vector<8x512xf32> to vector<8x256xf32>
      %36 = arith.negf %35 : vector<8x256xf32>
      %37 = math.exp %36 : vector<8x256xf32>
      %cst_22 = arith.constant 1.000000e+00 : f32
      %38 = vector.broadcast %cst_22 : f32 to vector<8x256xf32>
      %39 = arith.addf %38, %37 : vector<8x256xf32>
      %40 = arith.divf %38, %39 : vector<8x256xf32>
      %41 = vector.extract_strided_slice %34 {offsets = [0, 256], sizes = [8, 128], strides = [1, 1]} : vector<8x512xf32> to vector<8x128xf32>
      %42 = math.tanh %41 : vector<8x128xf32>
      %43 = vector.extract_strided_slice %34 {offsets = [0, 384], sizes = [8, 128], strides = [1, 1]} : vector<8x512xf32> to vector<8x128xf32>
      %44 = arith.negf %43 : vector<8x128xf32>
      %45 = math.exp %44 : vector<8x128xf32>
      %cst_23 = arith.constant 1.000000e+00 : f32
      %46 = vector.broadcast %cst_23 : f32 to vector<8x128xf32>
      %47 = arith.addf %46, %45 : vector<8x128xf32>
      %48 = arith.divf %46, %47 : vector<8x128xf32>
      %49 = vector.extract_strided_slice %40 {offsets = [0, 0], sizes = [8, 128], strides = [1, 1]} : vector<8x256xf32> to vector<8x128xf32>
      %50 = vector.extract_strided_slice %40 {offsets = [0, 128], sizes = [8, 128], strides = [1, 1]} : vector<8x256xf32> to vector<8x128xf32>
      %51 = arith.mulf %50, %28 : vector<8x128xf32>
      %52 = arith.mulf %49, %42 : vector<8x128xf32>
      %53 = arith.addf %51, %52 : vector<8x128xf32>
      %54 = math.tanh %53 : vector<8x128xf32>
      %55 = arith.mulf %48, %54 : vector<8x128xf32>
      %56 = arith.cmpi slt, %c0_i32_19, %15 : i32
      %57 = arith.select %56, %55, %27 : vector<8x128xf32>
      %58 = arith.select %56, %53, %28 : vector<8x128xf32>
      %c1_i32_24 = arith.constant 1 : i32
      %cst_25 = arith.constant dense<0.000000e+00> : vector<8x512xf32>
      %59 = tpu.matmul %57, %26, %cst_25 {dimension_numbers = #tpu.dot_dimension_numbers<[1], [0], [0], [1], [0, 0, 1, 1], [], []>} : vector<8x128xf32>, vector<128x512xf32>, vector<8x512xf32> -> vector<8x512xf32>
      %60 = arith.index_cast %25 : i32 to index
      %61 = arith.index_cast %c1_i32_24 : i32 to index
      %c0_26 = arith.constant 0 : index
      %c0_27 = arith.constant 0 : index
      %62 = vector.load %arg11[%60, %61, %c0_26, %c0_27] : memref<2x8x8x512xf32, #tpu.memory_space<vmem>>, vector<1x1x8x512xf32>
      %63 = vector.shape_cast %62 : vector<1x1x8x512xf32> to vector<8x512xf32>
      %64 = arith.addf %59, %63 : vector<8x512xf32>
      %65 = vector.extract_strided_slice %64 {offsets = [0, 0], sizes = [8, 256], strides = [1, 1]} : vector<8x512xf32> to vector<8x256xf32>
      %66 = arith.negf %65 : vector<8x256xf32>
      %67 = math.exp %66 : vector<8x256xf32>
      %cst_28 = arith.constant 1.000000e+00 : f32
      %68 = vector.broadcast %cst_28 : f32 to vector<8x256xf32>
      %69 = arith.addf %68, %67 : vector<8x256xf32>
      %70 = arith.divf %68, %69 : vector<8x256xf32>
      %71 = vector.extract_strided_slice %64 {offsets = [0, 256], sizes = [8, 128], strides = [1, 1]} : vector<8x512xf32> to vector<8x128xf32>
      %72 = math.tanh %71 : vector<8x128xf32>
      %73 = vector.extract_strided_slice %64 {offsets = [0, 384], sizes = [8, 128], strides = [1, 1]} : vector<8x512xf32> to vector<8x128xf32>
      %74 = arith.negf %73 : vector<8x128xf32>
      %75 = math.exp %74 : vector<8x128xf32>
      %cst_29 = arith.constant 1.000000e+00 : f32
      %76 = vector.broadcast %cst_29 : f32 to vector<8x128xf32>
      %77 = arith.addf %76, %75 : vector<8x128xf32>
      %78 = arith.divf %76, %77 : vector<8x128xf32>
      %79 = vector.extract_strided_slice %70 {offsets = [0, 0], sizes = [8, 128], strides = [1, 1]} : vector<8x256xf32> to vector<8x128xf32>
      %80 = vector.extract_strided_slice %70 {offsets = [0, 128], sizes = [8, 128], strides = [1, 1]} : vector<8x256xf32> to vector<8x128xf32>
      %81 = arith.mulf %80, %58 : vector<8x128xf32>
      %82 = arith.mulf %79, %72 : vector<8x128xf32>
      %83 = arith.addf %81, %82 : vector<8x128xf32>
      %84 = math.tanh %83 : vector<8x128xf32>
      %85 = arith.mulf %78, %84 : vector<8x128xf32>
      %86 = arith.cmpi slt, %c1_i32_24, %15 : i32
      %87 = arith.select %86, %85, %57 : vector<8x128xf32>
      %88 = arith.select %86, %83, %58 : vector<8x128xf32>
      %c2_i32_30 = arith.constant 2 : i32
      %cst_31 = arith.constant dense<0.000000e+00> : vector<8x512xf32>
      %89 = tpu.matmul %87, %26, %cst_31 {dimension_numbers = #tpu.dot_dimension_numbers<[1], [0], [0], [1], [0, 0, 1, 1], [], []>} : vector<8x128xf32>, vector<128x512xf32>, vector<8x512xf32> -> vector<8x512xf32>
      %90 = arith.index_cast %25 : i32 to index
      %91 = arith.index_cast %c2_i32_30 : i32 to index
      %c0_32 = arith.constant 0 : index
      %c0_33 = arith.constant 0 : index
      %92 = vector.load %arg11[%90, %91, %c0_32, %c0_33] : memref<2x8x8x512xf32, #tpu.memory_space<vmem>>, vector<1x1x8x512xf32>
      %93 = vector.shape_cast %92 : vector<1x1x8x512xf32> to vector<8x512xf32>
      %94 = arith.addf %89, %93 : vector<8x512xf32>
      %95 = vector.extract_strided_slice %94 {offsets = [0, 0], sizes = [8, 256], strides = [1, 1]} : vector<8x512xf32> to vector<8x256xf32>
      %96 = arith.negf %95 : vector<8x256xf32>
      %97 = math.exp %96 : vector<8x256xf32>
      %cst_34 = arith.constant 1.000000e+00 : f32
      %98 = vector.broadcast %cst_34 : f32 to vector<8x256xf32>
      %99 = arith.addf %98, %97 : vector<8x256xf32>
      %100 = arith.divf %98, %99 : vector<8x256xf32>
      %101 = vector.extract_strided_slice %94 {offsets = [0, 256], sizes = [8, 128], strides = [1, 1]} : vector<8x512xf32> to vector<8x128xf32>
      %102 = math.tanh %101 : vector<8x128xf32>
      %103 = vector.extract_strided_slice %94 {offsets = [0, 384], sizes = [8, 128], strides = [1, 1]} : vector<8x512xf32> to vector<8x128xf32>
      %104 = arith.negf %103 : vector<8x128xf32>
      %105 = math.exp %104 : vector<8x128xf32>
      %cst_35 = arith.constant 1.000000e+00 : f32
      %106 = vector.broadcast %cst_35 : f32 to vector<8x128xf32>
      %107 = arith.addf %106, %105 : vector<8x128xf32>
      %108 = arith.divf %106, %107 : vector<8x128xf32>
      %109 = vector.extract_strided_slice %100 {offsets = [0, 0], sizes = [8, 128], strides = [1, 1]} : vector<8x256xf32> to vector<8x128xf32>
      %110 = vector.extract_strided_slice %100 {offsets = [0, 128], sizes = [8, 128], strides = [1, 1]} : vector<8x256xf32> to vector<8x128xf32>
      %111 = arith.mulf %110, %88 : vector<8x128xf32>
      %112 = arith.mulf %109, %102 : vector<8x128xf32>
      %113 = arith.addf %111, %112 : vector<8x128xf32>
      %114 = math.tanh %113 : vector<8x128xf32>
      %115 = arith.mulf %108, %114 : vector<8x128xf32>
      %116 = arith.cmpi slt, %c2_i32_30, %15 : i32
      %117 = arith.select %116, %115, %87 : vector<8x128xf32>
      %118 = arith.select %116, %113, %88 : vector<8x128xf32>
      %c3_i32 = arith.constant 3 : i32
      %cst_36 = arith.constant dense<0.000000e+00> : vector<8x512xf32>
      %119 = tpu.matmul %117, %26, %cst_36 {dimension_numbers = #tpu.dot_dimension_numbers<[1], [0], [0], [1], [0, 0, 1, 1], [], []>} : vector<8x128xf32>, vector<128x512xf32>, vector<8x512xf32> -> vector<8x512xf32>
      %120 = arith.index_cast %25 : i32 to index
      %121 = arith.index_cast %c3_i32 : i32 to index
      %c0_37 = arith.constant 0 : index
      %c0_38 = arith.constant 0 : index
      %122 = vector.load %arg11[%120, %121, %c0_37, %c0_38] : memref<2x8x8x512xf32, #tpu.memory_space<vmem>>, vector<1x1x8x512xf32>
      %123 = vector.shape_cast %122 : vector<1x1x8x512xf32> to vector<8x512xf32>
      %124 = arith.addf %119, %123 : vector<8x512xf32>
      %125 = vector.extract_strided_slice %124 {offsets = [0, 0], sizes = [8, 256], strides = [1, 1]} : vector<8x512xf32> to vector<8x256xf32>
      %126 = arith.negf %125 : vector<8x256xf32>
      %127 = math.exp %126 : vector<8x256xf32>
      %cst_39 = arith.constant 1.000000e+00 : f32
      %128 = vector.broadcast %cst_39 : f32 to vector<8x256xf32>
      %129 = arith.addf %128, %127 : vector<8x256xf32>
      %130 = arith.divf %128, %129 : vector<8x256xf32>
      %131 = vector.extract_strided_slice %124 {offsets = [0, 256], sizes = [8, 128], strides = [1, 1]} : vector<8x512xf32> to vector<8x128xf32>
      %132 = math.tanh %131 : vector<8x128xf32>
      %133 = vector.extract_strided_slice %124 {offsets = [0, 384], sizes = [8, 128], strides = [1, 1]} : vector<8x512xf32> to vector<8x128xf32>
      %134 = arith.negf %133 : vector<8x128xf32>
      %135 = math.exp %134 : vector<8x128xf32>
      %cst_40 = arith.constant 1.000000e+00 : f32
      %136 = vector.broadcast %cst_40 : f32 to vector<8x128xf32>
      %137 = arith.addf %136, %135 : vector<8x128xf32>
      %138 = arith.divf %136, %137 : vector<8x128xf32>
      %139 = vector.extract_strided_slice %130 {offsets = [0, 0], sizes = [8, 128], strides = [1, 1]} : vector<8x256xf32> to vector<8x128xf32>
      %140 = vector.extract_strided_slice %130 {offsets = [0, 128], sizes = [8, 128], strides = [1, 1]} : vector<8x256xf32> to vector<8x128xf32>
      %141 = arith.mulf %140, %118 : vector<8x128xf32>
      %142 = arith.mulf %139, %132 : vector<8x128xf32>
      %143 = arith.addf %141, %142 : vector<8x128xf32>
      %144 = math.tanh %143 : vector<8x128xf32>
      %145 = arith.mulf %138, %144 : vector<8x128xf32>
      %146 = arith.cmpi slt, %c3_i32, %15 : i32
      %147 = arith.select %146, %145, %117 : vector<8x128xf32>
      %148 = arith.select %146, %143, %118 : vector<8x128xf32>
      %c4_i32 = arith.constant 4 : i32
      %cst_41 = arith.constant dense<0.000000e+00> : vector<8x512xf32>
      %149 = tpu.matmul %147, %26, %cst_41 {dimension_numbers = #tpu.dot_dimension_numbers<[1], [0], [0], [1], [0, 0, 1, 1], [], []>} : vector<8x128xf32>, vector<128x512xf32>, vector<8x512xf32> -> vector<8x512xf32>
      %150 = arith.index_cast %25 : i32 to index
      %151 = arith.index_cast %c4_i32 : i32 to index
      %c0_42 = arith.constant 0 : index
      %c0_43 = arith.constant 0 : index
      %152 = vector.load %arg11[%150, %151, %c0_42, %c0_43] : memref<2x8x8x512xf32, #tpu.memory_space<vmem>>, vector<1x1x8x512xf32>
      %153 = vector.shape_cast %152 : vector<1x1x8x512xf32> to vector<8x512xf32>
      %154 = arith.addf %149, %153 : vector<8x512xf32>
      %155 = vector.extract_strided_slice %154 {offsets = [0, 0], sizes = [8, 256], strides = [1, 1]} : vector<8x512xf32> to vector<8x256xf32>
      %156 = arith.negf %155 : vector<8x256xf32>
      %157 = math.exp %156 : vector<8x256xf32>
      %cst_44 = arith.constant 1.000000e+00 : f32
      %158 = vector.broadcast %cst_44 : f32 to vector<8x256xf32>
      %159 = arith.addf %158, %157 : vector<8x256xf32>
      %160 = arith.divf %158, %159 : vector<8x256xf32>
      %161 = vector.extract_strided_slice %154 {offsets = [0, 256], sizes = [8, 128], strides = [1, 1]} : vector<8x512xf32> to vector<8x128xf32>
      %162 = math.tanh %161 : vector<8x128xf32>
      %163 = vector.extract_strided_slice %154 {offsets = [0, 384], sizes = [8, 128], strides = [1, 1]} : vector<8x512xf32> to vector<8x128xf32>
      %164 = arith.negf %163 : vector<8x128xf32>
      %165 = math.exp %164 : vector<8x128xf32>
      %cst_45 = arith.constant 1.000000e+00 : f32
      %166 = vector.broadcast %cst_45 : f32 to vector<8x128xf32>
      %167 = arith.addf %166, %165 : vector<8x128xf32>
      %168 = arith.divf %166, %167 : vector<8x128xf32>
      %169 = vector.extract_strided_slice %160 {offsets = [0, 0], sizes = [8, 128], strides = [1, 1]} : vector<8x256xf32> to vector<8x128xf32>
      %170 = vector.extract_strided_slice %160 {offsets = [0, 128], sizes = [8, 128], strides = [1, 1]} : vector<8x256xf32> to vector<8x128xf32>
      %171 = arith.mulf %170, %148 : vector<8x128xf32>
      %172 = arith.mulf %169, %162 : vector<8x128xf32>
      %173 = arith.addf %171, %172 : vector<8x128xf32>
      %174 = math.tanh %173 : vector<8x128xf32>
      %175 = arith.mulf %168, %174 : vector<8x128xf32>
      %176 = arith.cmpi slt, %c4_i32, %15 : i32
      %177 = arith.select %176, %175, %147 : vector<8x128xf32>
      %178 = arith.select %176, %173, %148 : vector<8x128xf32>
      %c5_i32 = arith.constant 5 : i32
      %cst_46 = arith.constant dense<0.000000e+00> : vector<8x512xf32>
      %179 = tpu.matmul %177, %26, %cst_46 {dimension_numbers = #tpu.dot_dimension_numbers<[1], [0], [0], [1], [0, 0, 1, 1], [], []>} : vector<8x128xf32>, vector<128x512xf32>, vector<8x512xf32> -> vector<8x512xf32>
      %180 = arith.index_cast %25 : i32 to index
      %181 = arith.index_cast %c5_i32 : i32 to index
      %c0_47 = arith.constant 0 : index
      %c0_48 = arith.constant 0 : index
      %182 = vector.load %arg11[%180, %181, %c0_47, %c0_48] : memref<2x8x8x512xf32, #tpu.memory_space<vmem>>, vector<1x1x8x512xf32>
      %183 = vector.shape_cast %182 : vector<1x1x8x512xf32> to vector<8x512xf32>
      %184 = arith.addf %179, %183 : vector<8x512xf32>
      %185 = vector.extract_strided_slice %184 {offsets = [0, 0], sizes = [8, 256], strides = [1, 1]} : vector<8x512xf32> to vector<8x256xf32>
      %186 = arith.negf %185 : vector<8x256xf32>
      %187 = math.exp %186 : vector<8x256xf32>
      %cst_49 = arith.constant 1.000000e+00 : f32
      %188 = vector.broadcast %cst_49 : f32 to vector<8x256xf32>
      %189 = arith.addf %188, %187 : vector<8x256xf32>
      %190 = arith.divf %188, %189 : vector<8x256xf32>
      %191 = vector.extract_strided_slice %184 {offsets = [0, 256], sizes = [8, 128], strides = [1, 1]} : vector<8x512xf32> to vector<8x128xf32>
      %192 = math.tanh %191 : vector<8x128xf32>
      %193 = vector.extract_strided_slice %184 {offsets = [0, 384], sizes = [8, 128], strides = [1, 1]} : vector<8x512xf32> to vector<8x128xf32>
      %194 = arith.negf %193 : vector<8x128xf32>
      %195 = math.exp %194 : vector<8x128xf32>
      %cst_50 = arith.constant 1.000000e+00 : f32
      %196 = vector.broadcast %cst_50 : f32 to vector<8x128xf32>
      %197 = arith.addf %196, %195 : vector<8x128xf32>
      %198 = arith.divf %196, %197 : vector<8x128xf32>
      %199 = vector.extract_strided_slice %190 {offsets = [0, 0], sizes = [8, 128], strides = [1, 1]} : vector<8x256xf32> to vector<8x128xf32>
      %200 = vector.extract_strided_slice %190 {offsets = [0, 128], sizes = [8, 128], strides = [1, 1]} : vector<8x256xf32> to vector<8x128xf32>
      %201 = arith.mulf %200, %178 : vector<8x128xf32>
      %202 = arith.mulf %199, %192 : vector<8x128xf32>
      %203 = arith.addf %201, %202 : vector<8x128xf32>
      %204 = math.tanh %203 : vector<8x128xf32>
      %205 = arith.mulf %198, %204 : vector<8x128xf32>
      %206 = arith.cmpi slt, %c5_i32, %15 : i32
      %207 = arith.select %206, %205, %177 : vector<8x128xf32>
      %208 = arith.select %206, %203, %178 : vector<8x128xf32>
      %c6_i32 = arith.constant 6 : i32
      %cst_51 = arith.constant dense<0.000000e+00> : vector<8x512xf32>
      %209 = tpu.matmul %207, %26, %cst_51 {dimension_numbers = #tpu.dot_dimension_numbers<[1], [0], [0], [1], [0, 0, 1, 1], [], []>} : vector<8x128xf32>, vector<128x512xf32>, vector<8x512xf32> -> vector<8x512xf32>
      %210 = arith.index_cast %25 : i32 to index
      %211 = arith.index_cast %c6_i32 : i32 to index
      %c0_52 = arith.constant 0 : index
      %c0_53 = arith.constant 0 : index
      %212 = vector.load %arg11[%210, %211, %c0_52, %c0_53] : memref<2x8x8x512xf32, #tpu.memory_space<vmem>>, vector<1x1x8x512xf32>
      %213 = vector.shape_cast %212 : vector<1x1x8x512xf32> to vector<8x512xf32>
      %214 = arith.addf %209, %213 : vector<8x512xf32>
      %215 = vector.extract_strided_slice %214 {offsets = [0, 0], sizes = [8, 256], strides = [1, 1]} : vector<8x512xf32> to vector<8x256xf32>
      %216 = arith.negf %215 : vector<8x256xf32>
      %217 = math.exp %216 : vector<8x256xf32>
      %cst_54 = arith.constant 1.000000e+00 : f32
      %218 = vector.broadcast %cst_54 : f32 to vector<8x256xf32>
      %219 = arith.addf %218, %217 : vector<8x256xf32>
      %220 = arith.divf %218, %219 : vector<8x256xf32>
      %221 = vector.extract_strided_slice %214 {offsets = [0, 256], sizes = [8, 128], strides = [1, 1]} : vector<8x512xf32> to vector<8x128xf32>
      %222 = math.tanh %221 : vector<8x128xf32>
      %223 = vector.extract_strided_slice %214 {offsets = [0, 384], sizes = [8, 128], strides = [1, 1]} : vector<8x512xf32> to vector<8x128xf32>
      %224 = arith.negf %223 : vector<8x128xf32>
      %225 = math.exp %224 : vector<8x128xf32>
      %cst_55 = arith.constant 1.000000e+00 : f32
      %226 = vector.broadcast %cst_55 : f32 to vector<8x128xf32>
      %227 = arith.addf %226, %225 : vector<8x128xf32>
      %228 = arith.divf %226, %227 : vector<8x128xf32>
      %229 = vector.extract_strided_slice %220 {offsets = [0, 0], sizes = [8, 128], strides = [1, 1]} : vector<8x256xf32> to vector<8x128xf32>
      %230 = vector.extract_strided_slice %220 {offsets = [0, 128], sizes = [8, 128], strides = [1, 1]} : vector<8x256xf32> to vector<8x128xf32>
      %231 = arith.mulf %230, %208 : vector<8x128xf32>
      %232 = arith.mulf %229, %222 : vector<8x128xf32>
      %233 = arith.addf %231, %232 : vector<8x128xf32>
      %234 = math.tanh %233 : vector<8x128xf32>
      %235 = arith.mulf %228, %234 : vector<8x128xf32>
      %236 = arith.cmpi slt, %c6_i32, %15 : i32
      %237 = arith.select %236, %235, %207 : vector<8x128xf32>
      %238 = arith.select %236, %233, %208 : vector<8x128xf32>
      %c7_i32 = arith.constant 7 : i32
      %cst_56 = arith.constant dense<0.000000e+00> : vector<8x512xf32>
      %239 = tpu.matmul %237, %26, %cst_56 {dimension_numbers = #tpu.dot_dimension_numbers<[1], [0], [0], [1], [0, 0, 1, 1], [], []>} : vector<8x128xf32>, vector<128x512xf32>, vector<8x512xf32> -> vector<8x512xf32>
      %240 = arith.index_cast %25 : i32 to index
      %241 = arith.index_cast %c7_i32 : i32 to index
      %c0_57 = arith.constant 0 : index
      %c0_58 = arith.constant 0 : index
      %242 = vector.load %arg11[%240, %241, %c0_57, %c0_58] : memref<2x8x8x512xf32, #tpu.memory_space<vmem>>, vector<1x1x8x512xf32>
      %243 = vector.shape_cast %242 : vector<1x1x8x512xf32> to vector<8x512xf32>
      %244 = arith.addf %239, %243 : vector<8x512xf32>
      %245 = vector.extract_strided_slice %244 {offsets = [0, 0], sizes = [8, 256], strides = [1, 1]} : vector<8x512xf32> to vector<8x256xf32>
      %246 = arith.negf %245 : vector<8x256xf32>
      %247 = math.exp %246 : vector<8x256xf32>
      %cst_59 = arith.constant 1.000000e+00 : f32
      %248 = vector.broadcast %cst_59 : f32 to vector<8x256xf32>
      %249 = arith.addf %248, %247 : vector<8x256xf32>
      %250 = arith.divf %248, %249 : vector<8x256xf32>
      %251 = vector.extract_strided_slice %244 {offsets = [0, 256], sizes = [8, 128], strides = [1, 1]} : vector<8x512xf32> to vector<8x128xf32>
      %252 = math.tanh %251 : vector<8x128xf32>
      %253 = vector.extract_strided_slice %244 {offsets = [0, 384], sizes = [8, 128], strides = [1, 1]} : vector<8x512xf32> to vector<8x128xf32>
      %254 = arith.negf %253 : vector<8x128xf32>
      %255 = math.exp %254 : vector<8x128xf32>
      %cst_60 = arith.constant 1.000000e+00 : f32
      %256 = vector.broadcast %cst_60 : f32 to vector<8x128xf32>
      %257 = arith.addf %256, %255 : vector<8x128xf32>
      %258 = arith.divf %256, %257 : vector<8x128xf32>
      %259 = vector.extract_strided_slice %250 {offsets = [0, 0], sizes = [8, 128], strides = [1, 1]} : vector<8x256xf32> to vector<8x128xf32>
      %260 = vector.extract_strided_slice %250 {offsets = [0, 128], sizes = [8, 128], strides = [1, 1]} : vector<8x256xf32> to vector<8x128xf32>
      %261 = arith.mulf %260, %238 : vector<8x128xf32>
      %262 = arith.mulf %259, %252 : vector<8x128xf32>
      %263 = arith.addf %261, %262 : vector<8x128xf32>
      %264 = math.tanh %263 : vector<8x128xf32>
      %265 = arith.mulf %258, %264 : vector<8x128xf32>
      %266 = arith.cmpi slt, %c7_i32, %15 : i32
      %267 = arith.select %266, %265, %237 : vector<8x128xf32>
      %268 = arith.select %266, %263, %238 : vector<8x128xf32>
      %c8_i32_61 = arith.constant 8 : i32
      %c0_62 = arith.constant 0 : index
      %c0_63 = arith.constant 0 : index
      %269 = vector.load %arg9[%c0_62, %c0_63] : memref<8x128xf32, #tpu.memory_space<vmem>>, vector<8x128xf32>
      tpu.vector_store %arg9[%c0_62, %c0_63], %267 {strides = array<i32>} : memref<8x128xf32, #tpu.memory_space<vmem>>, vector<8x128xf32>,
      %c0_64 = arith.constant 0 : index
      %c0_65 = arith.constant 0 : index
      %270 = vector.load %arg10[%c0_64, %c0_65] : memref<8x128xf32, #tpu.memory_space<vmem>>, vector<8x128xf32>
      tpu.vector_store %arg10[%c0_64, %c0_65], %268 {strides = array<i32>} : memref<8x128xf32, #tpu.memory_space<vmem>>, vector<8x128xf32>,
    } else {
    }
    %c1_i32_4 = arith.constant 1 : i32
    %9 = arith.cmpi eq, %arg1, %c1_i32_4 : i32
    %10 = arith.extui %9 : i1 to i32
    %c0_i32_5 = arith.constant 0 : i32
    %11 = arith.cmpi ne, %10, %c0_i32_5 : i32
    scf.if %11 {
      %c0 = arith.constant 0 : index
      %c0_6 = arith.constant 0 : index
      %12 = vector.load %arg9[%c0, %c0_6] : memref<8x128xf32, #tpu.memory_space<vmem>>, vector<8x128xf32>
      %c0_7 = arith.constant 0 : index
      %c0_8 = arith.constant 0 : index
      %13 = vector.load %arg6[%c0_7, %c0_8] : memref<1x128xf32, #tpu.memory_space<vmem>>, vector<1x128xf32>
      %14 = vector.broadcast %13 : vector<1x128xf32> to vector<8x128xf32>
      %15 = arith.mulf %12, %14 : vector<8x128xf32>
      %cst = arith.constant dense<0.000000e+00> : vector<8xf32>
      %16 = vector.multi_reduction <add>, %15, %cst [1] : vector<8x128xf32> to vector<8xf32>
      %17 = vector.shape_cast %16 : vector<8xf32> to vector<8x1xf32>
      %c0_9 = arith.constant 0 : index
      %c0_10 = arith.constant 0 : index
      %18 = vector.load %arg7[%c0_9, %c0_10] : memref<1x1xf32, #tpu.memory_space<vmem>>, vector<1x1xf32>
      %19 = vector.broadcast %18 : vector<1x1xf32> to vector<8x1xf32>
      %20 = arith.addf %17, %19 : vector<8x1xf32>
      %c0_11 = arith.constant 0 : index
      %c0_12 = arith.constant 0 : index
      %21 = vector.load %arg8[%c0_11, %c0_12] : memref<8x1xf32, #tpu.memory_space<vmem>>, vector<8x1xf32>
      tpu.vector_store %arg8[%c0_11, %c0_12], %20 {strides = array<i32>} : memref<8x1xf32, #tpu.memory_space<vmem>>, vector<8x1xf32>,
    } else {
    }
    return
  }
  func.func @transform_0(%arg0: i32, %arg1: i32) -> (i32, i32) {
    %c1_i32 = arith.constant 1 : i32
    %0 = arith.muli %arg0, %c1_i32 : i32
    %c0_i32 = arith.constant 0 : i32
    %1 = arith.minsi %arg1, %c0_i32 : i32
    %2 = arith.addi %0, %1 : i32
    %c0_i32_0 = arith.constant 0 : i32
    %c0_i32_1 = arith.constant 0 : i32
    return %2, %c0_i32_0 : i32, i32
  }
  func.func @transform_1(%arg0: i32, %arg1: i32) -> (i32, i32) {
    %c0_i32 = arith.constant 0 : i32
    %c0_i32_0 = arith.constant 0 : i32
    %c0_i32_1 = arith.constant 0 : i32
    return %c0_i32, %c0_i32_0 : i32, i32
  }
  func.func @transform_2(%arg0: i32, %arg1: i32) -> (i32, i32) {
    %c0_i32 = arith.constant 0 : i32
    %c0_i32_0 = arith.constant 0 : i32
    %c0_i32_1 = arith.constant 0 : i32
    return %c0_i32, %c0_i32_0 : i32, i32
  }
  func.func @transform_3(%arg0: i32, %arg1: i32) -> (i32, i32) {
    %c0_i32 = arith.constant 0 : i32
    %c0_i32_0 = arith.constant 0 : i32
    %c0_i32_1 = arith.constant 0 : i32
    return %c0_i32, %c0_i32_0 : i32, i32
  }
  func.func @transform_4(%arg0: i32, %arg1: i32) -> (i32, i32) {
    %c0_i32 = arith.constant 0 : i32
    %c0_i32_0 = arith.constant 0 : i32
    %c0_i32_1 = arith.constant 0 : i32
    return %c0_i32, %c0_i32_0 : i32, i32
  }
  func.func @transform_5(%arg0: i32, %arg1: i32) -> (i32, i32) {
    %c0_i32 = arith.constant 0 : i32
    %c0_i32_0 = arith.constant 0 : i32
    %c0_i32_1 = arith.constant 0 : i32
    return %c0_i32, %c0_i32_0 : i32, i32
  }
  func.func @transform_6(%arg0: i32, %arg1: i32) -> (i32, i32) {
    %c0_i32 = arith.constant 0 : i32
    %c0_i32_0 = arith.constant 0 : i32
    return %arg0, %c0_i32 : i32, i32
  }
}

</mosaic_0001>

<llo_original>
// kernel: tpu_custom_call.1
$region0: #{tpu_custom_call.1}
  #allocation0 [shape = 'u32[]', space=smem, size = 0x4, offset = 0x4, fixed_abs, tag = 'smem constant byte address 0x4 - core index']
  #allocation1 [shape = 'u32[144,128]{1,0:T(1,128)}', space=vmem, size = 0x12000, scoped, tag = 'internal scratch']
  #allocation2 [shape = 'f32[8,128]{1,0:T(8,128)}', space=vmem, size = 0x1000, scoped, tag = 'scratch operand']
  #allocation3 [shape = 'f32[8,128]{1,0:T(8,128)}', space=vmem, size = 0x1000, scoped, tag = 'scratch operand']
  #allocation4 [shape = 'f32[2,8,8,512]{3,2,1,0:T(8,128)}', space=vmem, size = 0x40000, scoped, tag = 'scratch operand']
  #allocation5 [shape = 'f32[1,1]{1,0:T(1,128)S(1)}', space=vmem, size = 0x200, scoped, tag = 'scoped memory for tpu_custom_call.1']
  %s0 = inlined_call_operand.vmem [shape: f32[64,16], index: 0, kind: input, shape index: {}]
  %s1 = inlined_call_operand.vmem [shape: f32[16,512], index: 1, kind: input, shape index: {}]
  %s2 = inlined_call_operand.hbm [shape: f32[128,512], index: 2, kind: input, shape index: {}]
  %s3 = inlined_call_operand.vmem [shape: f32[1,512], index: 3, kind: input, shape index: {}]
  %s4 = inlined_call_operand.vmem [shape: f32[1,128], index: 4, kind: input, shape index: {}]
  %s5 = inlined_call_operand.<no memory space> [shape: f32[1,1], index: 5, kind: input, shape index: {}]
  %s6 = inlined_call_operand.vmem [shape: f32[8,1], index: 6, kind: output, shape index: {}]
  %s7 = sld [smem:[#allocation0]]
  $region77: #{tpu_custom_call.1} parent=0
    _
  %s9 = ssub.s32 1, %s7
  %s10 = scalar_select 0, %s9, %s7
  %v11 = vstv %s5
  %12 = vst [vmem:[#allocation5] sm:$0x1] %v11
  $region1: #{tpu_custom_call.1} parent=0
    #allocation6 [shape = 'u8[262144]{0}', space=vmem, size = 0x40000, scoped, tag = 'input window, operand 2, single buffered']
    #allocation7 [shape = 's32[2]{0}', space=sflag, size = 0x8, scoped, tag = 'scoped memory for tpu_custom_call.1']
    %13 = vsyncpa [#allocation7], 0
    loop: start=0, step=1, limit=4
    $region2: #{tpu_custom_call.1} parent=1 // loop_pre_header
      _
    $region3: #{tpu_custom_call.1} parent=1 // loop_header
      %s15 = sphi 0, %s19
      %p16 = scmp.ge.s32.totalorder %s15, 4
      %s22 = sphi 0, %s34
      %s23 = sphi 0, %s30
      %s24 = sphi 0, %s22
      %s25 = sphi 0, %s23
      %s26 = sphi 0, %s24
      %s27 = sphi 0, %s25
      %s43 = sphi 0, %s45
      %s46 = sphi 0, %s43
      %s47 = sphi 0, %s46
      %s63 = sphi 0, %s47
      %s67 = sphi 0, %s67
      %s69 = sphi 0, %s67
      %s70 = sphi 0, %s69
      %s84 = sphi 0, %s70
      %s88 = sphi 0, %s88
      %s90 = sphi 0, %s88
      %s91 = sphi 0, %s90
      %s105 = sphi 0, %s91
      %s109 = sphi 0, %s109
      %s111 = sphi 0, %s109
      %s112 = sphi 0, %s111
      %s126 = sphi 0, %s112
      %s130 = sphi 0, %s130
      %s132 = sphi 0, %s130
      %s133 = sphi 0, %s132
      %s147 = sphi 0, %s133
      %s151 = sphi 0, %s151
      %s153 = sphi 0, %s151
      %s154 = sphi 0, %s153
      %s168 = sphi 0, %s154
      %s174 = sphi 0, %s176
      %s177 = sphi 0, %s174
      %s178 = sphi 0, %s177
      %s194 = sphi 0, %s178
    $region4: #{tpu_custom_call.1} parent=1 // loop_header_branch
      %18 = sbr.rel (%p16) target = $region8
    $region5: #{tpu_custom_call.1} parent=1 // loop_body
      %s20 = ssub.s32 %s15, 1
      %s21 = ssub.s32 %s15, 2
      %s28 = sadd.s32 1, %s23
      %p29 = scmp.ge.s32.totalorder %s28, 2
      %s30 = scalar_select %p29, 0, %s28
      %s31 = sadd.s32 1, %s22
      %s32 = scalar_select %p29, %s31, %s22
      %p33 = scmp.ge.s32.totalorder %s32, 1
      %s34 = scalar_select %p33, 0, %s32
      %p35 = scmp.lt.s32.totalorder %s23, 0
      %s36 = scalar_select %p35, %s23, 0
      %s37 = sadd.s32 %s22, %s36
      %p38 = scmp.lt.s32.totalorder %s30, 0
      %s39 = scalar_select %p38, %s30, 0
      %s40 = sadd.s32 %s34, %s39
      %s41 = ssub.s32 %s37, %s40
      %p42 = scmp.eq.s32.totalorder %s41, 0
      %s44 = sadd.s32 %s43, 1
      %s45 = scalar_select %p42, %s43, %s44
      %p48 = pneg %p42
      %p49 = scmp.eq.s32.totalorder %s15, 1
      %p50 = por %p48, %p49
      %p51 = scmp.ne.s32.totalorder %s43, %s46
      %p52 = scmp.eq.s32.totalorder %s15, 0
      %p53 = por %p51, %p52
      %p54 = scmp.ne.s32.totalorder %s43, %s46
      %p55 = scmp.eq.s32.totalorder %s20, 1
      %p56 = por %p54, %p55
      %p57 = scmp.ne.s32.totalorder %s46, %s47
      %p58 = scmp.eq.s32.totalorder %s20, 0
      %p59 = por %p57, %p58
      %p60 = scmp.ne.s32.totalorder %s46, %s47
      %p61 = scmp.eq.s32.totalorder %s21, 1
      %p62 = por %p60, %p61
      %p64 = scmp.ne.s32.totalorder %s47, %s63
      %p65 = scmp.eq.s32.totalorder %s21, 0
      %p66 = por %p64, %p65
      %s68 = sadd.s32 %s67, 1
      %p71 = scmp.eq.s32.totalorder %s15, 1
      %p72 = scmp.ne.s32.totalorder %s67, %s69
      %p73 = scmp.eq.s32.totalorder %s15, 0
      %p74 = por %p72, %p73
      %p75 = scmp.ne.s32.totalorder %s67, %s69
      %p76 = scmp.eq.s32.totalorder %s20, 1
      %p77 = por %p75, %p76
      %p78 = scmp.ne.s32.totalorder %s69, %s70
      %p79 = scmp.eq.s32.totalorder %s20, 0
      %p80 = por %p78, %p79
      %p81 = scmp.ne.s32.totalorder %s69, %s70
      %p82 = scmp.eq.s32.totalorder %s21, 1
      %p83 = por %p81, %p82
      %p85 = scmp.ne.s32.totalorder %s70, %s84
      %p86 = scmp.eq.s32.totalorder %s21, 0
      %p87 = por %p85, %p86
      %s89 = sadd.s32 %s88, 1
      %p92 = scmp.eq.s32.totalorder %s15, 1
      %p93 = scmp.ne.s32.totalorder %s88, %s90
      %p94 = scmp.eq.s32.totalorder %s15, 0
      %p95 = por %p93, %p94
      %p96 = scmp.ne.s32.totalorder %s88, %s90
      %p97 = scmp.eq.s32.totalorder %s20, 1
      %p98 = por %p96, %p97
      %p99 = scmp.ne.s32.totalorder %s90, %s91
      %p100 = scmp.eq.s32.totalorder %s20, 0
      %p101 = por %p99, %p100
      %p102 = scmp.ne.s32.totalorder %s90, %s91
      %p103 = scmp.eq.s32.totalorder %s21, 1
      %p104 = por %p102, %p103
      %p106 = scmp.ne.s32.totalorder %s91, %s105
      %p107 = scmp.eq.s32.totalorder %s21, 0
      %p108 = por %p106, %p107
      %s110 = sadd.s32 %s109, 1
      %p113 = scmp.eq.s32.totalorder %s15, 1
      %p114 = scmp.ne.s32.totalorder %s109, %s111
      %p115 = scmp.eq.s32.totalorder %s15, 0
      %p116 = por %p114, %p115
      %p117 = scmp.ne.s32.totalorder %s109, %s111
      %p118 = scmp.eq.s32.totalorder %s20, 1
      %p119 = por %p117, %p118
      %p120 = scmp.ne.s32.totalorder %s111, %s112
      %p121 = scmp.eq.s32.totalorder %s20, 0
      %p122 = por %p120, %p121
      %p123 = scmp.ne.s32.totalorder %s111, %s112
      %p124 = scmp.eq.s32.totalorder %s21, 1
      %p125 = por %p123, %p124
      %p127 = scmp.ne.s32.totalorder %s112, %s126
      %p128 = scmp.eq.s32.totalorder %s21, 0
      %p129 = por %p127, %p128
      %s131 = sadd.s32 %s130, 1
      %p134 = scmp.eq.s32.totalorder %s15, 1
      %p135 = scmp.ne.s32.totalorder %s130, %s132
      %p136 = scmp.eq.s32.totalorder %s15, 0
      %p137 = por %p135, %p136
      %p138 = scmp.ne.s32.totalorder %s130, %s132
      %p139 = scmp.eq.s32.totalorder %s20, 1
      %p140 = por %p138, %p139
      %p141 = scmp.ne.s32.totalorder %s132, %s133
      %p142 = scmp.eq.s32.totalorder %s20, 0
      %p143 = por %p141, %p142
      %p144 = scmp.ne.s32.totalorder %s132, %s133
      %p145 = scmp.eq.s32.totalorder %s21, 1
      %p146 = por %p144, %p145
      %p148 = scmp.ne.s32.totalorder %s133, %s147
      %p149 = scmp.eq.s32.totalorder %s21, 0
      %p150 = por %p148, %p149
      %s152 = sadd.s32 %s151, 1
      %p155 = scmp.eq.s32.totalorder %s15, 1
      %p156 = scmp.ne.s32.totalorder %s151, %s153
      %p157 = scmp.eq.s32.totalorder %s15, 0
      %p158 = por %p156, %p157
      %p159 = scmp.ne.s32.totalorder %s151, %s153
      %p160 = scmp.eq.s32.totalorder %s20, 1
      %p161 = por %p159, %p160
      %p162 = scmp.ne.s32.totalorder %s153, %s154
      %p163 = scmp.eq.s32.totalorder %s20, 0
      %p164 = por %p162, %p163
      %p165 = scmp.ne.s32.totalorder %s153, %s154
      %p166 = scmp.eq.s32.totalorder %s21, 1
      %p167 = por %p165, %p166
      %p169 = scmp.ne.s32.totalorder %s154, %s168
      %p170 = scmp.eq.s32.totalorder %s21, 0
      %p171 = por %p169, %p170
      %s172 = ssub.s32 %s22, %s34
      %p173 = scmp.eq.s32.totalorder %s172, 0
      %s175 = sadd.s32 %s174, 1
      %s176 = scalar_select %p173, %s174, %s175
      %p179 = pneg %p173
      %p180 = scmp.eq.s32.totalorder %s15, 1
      %p181 = por %p179, %p180
      %p182 = scmp.ne.s32.totalorder %s174, %s177
      %p183 = scmp.eq.s32.totalorder %s15, 0
      %p184 = por %p182, %p183
      %p185 = scmp.ne.s32.totalorder %s174, %s177
      %p186 = scmp.eq.s32.totalorder %s20, 1
      %p187 = por %p185, %p186
      %p188 = scmp.ne.s32.totalorder %s177, %s178
      %p189 = scmp.eq.s32.totalorder %s20, 0
      %p190 = por %p188, %p189
      %p191 = scmp.ne.s32.totalorder %s177, %s178
      %p192 = scmp.eq.s32.totalorder %s21, 1
      %p193 = por %p191, %p192
      %p195 = scmp.ne.s32.totalorder %s178, %s194
      %p196 = scmp.eq.s32.totalorder %s21, 0
      %p197 = por %p195, %p196
      %p198 = scmp.le.s32.totalorder 1, %s15
      %p199 = scmp.lt.s32.totalorder %s15, 3
      %p200 = pnand %p198, %p199
      %p201 = pneg %p200
      // Predicated region
      $region9: #{tpu_custom_call.1} parent=5 // pred_check
        _
      $region10: #{tpu_custom_call.1} parent=5 // pred_check_branch
        %203 = sbr.rel (%p200) target = $region12
      $region11: #{tpu_custom_call.1} parent=5 // pred_region
        %s204 = ssub.s32 %s15, 1
        // Predicated region
        $region13: #{tpu_custom_call.1} parent=11 // pred_check
          %p205 = pneg %p80
        $region14: #{tpu_custom_call.1} parent=11 // pred_check_branch
          %207 = sbr.rel (%p205) target = $region16
        $region15: #{tpu_custom_call.1} parent=11 // pred_region
          _
        $region16: #{tpu_custom_call.1} parent=11 // pred_fallthru
          _
        // Predicated region
        $region17: #{tpu_custom_call.1} parent=11 // pred_check
          %p208 = pneg %p101
        $region18: #{tpu_custom_call.1} parent=11 // pred_check_branch
          %210 = sbr.rel (%p208) target = $region20
        $region19: #{tpu_custom_call.1} parent=11 // pred_region
          %s212 = ssub.s32 8192, 8192
          %213 = vsyncadd [#allocation7], %s212
          %s214 = sshll.u32 [#allocation6], 4
          %s215 = int_to_ptr.vmem [resolvable:$true] %s214
          %220 = dma.hbm_to_vmem [thread:$0]  %s2, 8192, %s215, [#allocation7], 512, 512, 32
        $region20: #{tpu_custom_call.1} parent=11 // pred_fallthru
          _
        // Predicated region
        $region21: #{tpu_custom_call.1} parent=11 // pred_check
          %p221 = pneg %p122
        $region22: #{tpu_custom_call.1} parent=11 // pred_check_branch
          %223 = sbr.rel (%p221) target = $region24
        $region23: #{tpu_custom_call.1} parent=11 // pred_region
          _
        $region24: #{tpu_custom_call.1} parent=11 // pred_fallthru
          _
        // Predicated region
        $region25: #{tpu_custom_call.1} parent=11 // pred_check
          %p224 = pneg %p143
        $region26: #{tpu_custom_call.1} parent=11 // pred_check_branch
          %226 = sbr.rel (%p224) target = $region28
        $region27: #{tpu_custom_call.1} parent=11 // pred_region
          _
        $region28: #{tpu_custom_call.1} parent=11 // pred_fallthru
          _
        // Predicated region
        $region29: #{tpu_custom_call.1} parent=11 // pred_check
          %p227 = pneg %p164
        $region30: #{tpu_custom_call.1} parent=11 // pred_check_branch
          %229 = sbr.rel (%p227) target = $region32
        $region31: #{tpu_custom_call.1} parent=11 // pred_region
          _
        $region32: #{tpu_custom_call.1} parent=11 // pred_fallthru
          _
      $region12: #{tpu_custom_call.1} parent=5 // pred_fallthru
        _
      %p230 = scmp.lt.s32.totalorder %s15, 2
      // Predicated region
      $region33: #{tpu_custom_call.1} parent=5 // pred_check
        %p231 = pneg %p230
      $region34: #{tpu_custom_call.1} parent=5 // pred_check_branch
        %233 = sbr.rel (%p231) target = $region36
      $region35: #{tpu_custom_call.1} parent=5 // pred_region
        // Predicated region
        $region37: #{tpu_custom_call.1} parent=35 // pred_check
          %p234 = pneg %p53
        $region38: #{tpu_custom_call.1} parent=35 // pred_check_branch
          %236 = sbr.rel (%p234) target = $region40
        $region39: #{tpu_custom_call.1} parent=35 // pred_region
          %p237 = scmp.lt.s32.totalorder %s23, 0
          %s238 = scalar_select %p237, %s23, 0
          %s239 = sadd.s32 %s22, %s238
          %s240 = smul.u32 8, %s239
          %p241 = scmp.lt.s32.totalorder %s240, 7
          %s242 = scalar_select %p241, %s240, 7
          %s243 = smul.addr %s242, 8
          %s244 = scalar_lea.vmem %s0, %s243
          %p245 = scmp.lt.s32.totalorder %s23, 0
          %s246 = scalar_select %p245, %s23, 0
          %s247 = sadd.s32 %s22, %s246
          %s248 = smul.u32 8, %s247
        $region40: #{tpu_custom_call.1} parent=35 // pred_fallthru
          _
      $region36: #{tpu_custom_call.1} parent=5 // pred_fallthru
        _
      %p249 = scmp.le.s32.totalorder 1, %s15
      %p250 = scmp.lt.s32.totalorder %s15, 3
      %p251 = pnand %p249, %p250
      %p252 = pneg %p251
      // Predicated region
      $region41: #{tpu_custom_call.1} parent=5 // pred_check
        _
      $region42: #{tpu_custom_call.1} parent=5 // pred_check_branch
        %254 = sbr.rel (%p251) target = $region44
      $region43: #{tpu_custom_call.1} parent=5 // pred_region
        %s255 = ssub.s32 %s15, 1
        // Predicated region
        $region45: #{tpu_custom_call.1} parent=43 // pred_check
          %p256 = pneg %p101
        $region46: #{tpu_custom_call.1} parent=43 // pred_check_branch
          %258 = sbr.rel (%p256) target = $region48
        $region47: #{tpu_custom_call.1} parent=43 // pred_region
          %259 = dma.done [#allocation7], 8192
        $region48: #{tpu_custom_call.1} parent=43 // pred_fallthru
          _
        %p260 = scmp.lt.s32.totalorder %s25, 0
        %s261 = scalar_select %p260, %s25, 0
        %s262 = sadd.s32 %s24, %s261
        %s263 = smul.u32 8, %s262
        %p264 = scmp.lt.s32.totalorder %s263, 7
        %s265 = scalar_select %p264, %s263, 7
        %s266 = smul.addr %s265, 8
        %s267 = scalar_lea.vmem %s0, %s266
        %p268 = pneg %p59
        %p269 = pneg %p56
        %p270 = pneg %p80
        %p271 = pneg %p77
        %p272 = pneg %p101
        %p273 = pneg %p98
        %p274 = pneg %p122
        %p275 = pneg %p119
        %p276 = pneg %p143
        %p277 = pneg %p140
        %p278 = pneg %p164
        %p279 = pneg %p161
        %p280 = pneg %p190
        %p281 = pneg %p187
        %p282 = scmp.lt.s32.totalorder %s24, 0
        %s283 = scalar_select %p282, %s24, 0
        %s284 = smul.addr %s283, 8
        %s285 = scalar_lea.vmem %s6, %s284
        %p286 = scmp.lt.s32.totalorder %s25, 0
        %s287 = scalar_select %p286, %s25, 0
        %s288 = sadd.s32 %s24, %s287
        %s289 = smul.u32 8, %s288
        %p290 = scmp.lt.s32.totalorder %s289, 7
        %s291 = scalar_select %p290, %s289, 7
        %s292 = smul.addr %s291, 8
        %s293 = scalar_lea.vmem %s0, %s292
        %p294 = scmp.lt.s32.totalorder %s25, 0
        %s295 = scalar_select %p294, %s25, 0
        %s296 = sadd.s32 %s24, %s295
        %s297 = smul.u32 8, %s296
        %p298 = scmp.lt.s32.totalorder %s24, 0
        %s299 = scalar_select %p298, %s24, 0
        %s300 = smul.addr %s299, 8
        %s301 = scalar_lea.vmem %s6, %s300
        %p302 = scmp.eq.s32.totalorder %s25, 0
        // Predicated region
        $region49: #{tpu_custom_call.1} parent=43 // pred_check
          %p303 = pneg %p302
        $region50: #{tpu_custom_call.1} parent=43 // pred_check_branch
          %305 = sbr.rel (%p303) target = $region52
        $region51: #{tpu_custom_call.1} parent=43 // pred_region
          %306 = vst [vmem:[#allocation2] sm:$0xff] 0.0
          %307 = vst [vmem:[#allocation3] sm:$0xff] 0.0
        $region52: #{tpu_custom_call.1} parent=43 // pred_fallthru
          _
        %p308 = scmp.lt.s32.totalorder %s25, 1
        // Predicated region
        $region53: #{tpu_custom_call.1} parent=43 // pred_check
          %p309 = pneg %p308
        $region54: #{tpu_custom_call.1} parent=43 // pred_check_branch
          %311 = sbr.rel (%p309) target = $region56
        $region55: #{tpu_custom_call.1} parent=43 // pred_region
          %v312 = vld [vmem:[%s293] sm:$0xff]
          %v313 = vld [vmem:[%s293 + $0x8] sm:$0xff]
          %v314 = vld [vmem:[%s293 + $0x10] sm:$0xff]
          %v315 = vld [vmem:[%s293 + $0x18] sm:$0xff]
          %v316 = vld [vmem:[%s293 + $0x20] sm:$0xff]
          %v317 = vld [vmem:[%s293 + $0x28] sm:$0xff]
          %v318 = vld [vmem:[%s293 + $0x30] sm:$0xff]
          %v319 = vld [vmem:[%s293 + $0x38] sm:$0xff]
          %v320 = vld [vmem:[%s1] sm:$0xff]
          %v321 = vld [vmem:[%s1 + $0x8] sm:$0xff]
          %v322 = vld [vmem:[%s1 + $0x10] sm:$0xff]
          %v323 = vld [vmem:[%s1 + $0x18] sm:$0xff]
          %v324 = vld [vmem:[%s1 + $0x20] sm:$0xff]
          %v325 = vld [vmem:[%s1 + $0x28] sm:$0xff]
          %v326 = vld [vmem:[%s1 + $0x30] sm:$0xff]
          %v327 = vld [vmem:[%s1 + $0x38] sm:$0xff]
          %v328 = vld [vmem:[%s3] sm:$0xf]
          %v330 = vlaneseq
          %v331 = vshrl.u32 %v330, 7
          %v332 = vsub.s32 0, %v331
          %v333 = vrot.slane %v328, %v332
          %v334 = vlaneseq
          %v335 = vshrl.u32 %v334, 7
          %v336 = vsub.s32 1, %v335
          %v337 = vrot.slane %v328, %v336
          %v338 = vlaneseq
          %v339 = vshrl.u32 %v338, 7
          %v340 = vsub.s32 2, %v339
          %v341 = vrot.slane %v328, %v340
          %v342 = vlaneseq
          %v343 = vshrl.u32 %v342, 7
          %v344 = vsub.s32 3, %v343
          %v345 = vrot.slane %v328, %v344
          %vm350 = vcmask 130048
          %v352 = vsel %vm350, %v312, 0
          %v355 = vsel %vm350, %v313, 0
          %v358 = vsel %vm350, %v314, 0
          %v361 = vsel %vm350, %v315, 0
          %v364 = vsel %vm350, %v316, 0
          %v367 = vsel %vm350, %v317, 0
          %v370 = vsel %vm350, %v318, 0
          %v373 = vsel %vm350, %v319, 0
          %375 = vmatprep.subr.mxu0 %v321
          %376 = vmatpush1.msra.mxu0 %v320
          %377 = vmatprep.subr.mxu0 %v325
          %378 = vmatpush1.msra.mxu0 %v324
          %379 = vmatprep.subr.mxu0 0.0
          %380 = vmatpush1.msra.mxu0 0.0
          %381 = vmatprep.subr.mxu0 0.0
          %382 = vmatpush1.msra.mxu0 0.0
          %383 = vmatprep.subr.mxu0 0.0
          %384 = vmatpush1.msra.mxu0 0.0
          %385 = vmatprep.subr.mxu0 0.0
          %386 = vmatpush1.msra.mxu0 0.0
          %387 = vmatprep.subr.mxu0 0.0
          %388 = vmatpush1.msra.mxu0 0.0
          %389 = vmatprep.subr.mxu0 0.0
          %390 = vmatpush1.msra.mxu0 0.0
          %391 = vmatprep.subr.mxu0 0.0
          %392 = vmatpush1.msra.mxu0 0.0
          %393 = vmatprep.subr.mxu0 0.0
          %394 = vmatpush1.msra.mxu0 0.0
          %395 = vmatprep.subr.mxu0 0.0
          %396 = vmatpush1.msra.mxu0 0.0
          %397 = vmatprep.subr.mxu0 0.0
          %398 = vmatpush1.msra.mxu0 0.0
          %399 = vmatprep.subr.mxu0 0.0
          %400 = vmatpush1.msra.mxu0 0.0
          %401 = vmatprep.subr.mxu0 0.0
          %402 = vmatpush1.msra.mxu0 0.0
          %403 = vmatprep.subr.mxu0 0.0
          %404 = vmatpush1.msra.mxu0 0.0
          %405 = vmatprep.subr.mxu0 0.0
          %406 = vmatpush1.msra.mxu0 0.0
          %407 = vmatprep.subr.mxu0 0.0
          %408 = vmatpush1.msra.mxu0 0.0
          %409 = vmatprep.subr.mxu0 0.0
          %410 = vmatpush1.msra.mxu0 0.0
          %411 = vmatprep.subr.mxu0 0.0
          %412 = vmatpush1.msra.mxu0 0.0
          %413 = vmatprep.subr.mxu0 0.0
          %414 = vmatpush1.msra.mxu0 0.0
          %415 = vmatprep.subr.mxu0 0.0
          %416 = vmatpush1.msra.mxu0 0.0
          %417 = vmatprep.subr.mxu0 0.0
          %418 = vmatpush1.msra.mxu0 0.0
          %419 = vmatprep.subr.mxu0 0.0
          %420 = vmatpush1.msra.mxu0 0.0
          %421 = vmatprep.subr.mxu0 0.0
          %422 = vmatpush1.msra.mxu0 0.0
          %423 = vmatprep.subr.mxu0 0.0
          %424 = vmatpush1.msra.mxu0 0.0
          %425 = vmatprep.subr.mxu0 0.0
          %426 = vmatpush1.msra.mxu0 0.0
          %427 = vmatprep.subr.mxu0 0.0
          %428 = vmatpush1.msra.mxu0 0.0
          %429 = vmatprep.subr.mxu0 0.0
          %430 = vmatpush1.msra.mxu0 0.0
          %431 = vmatprep.subr.mxu0 0.0
          %432 = vmatpush1.msra.mxu0 0.0
          %433 = vmatprep.subr.mxu0 0.0
          %434 = vmatpush1.msra.mxu0 0.0
          %435 = vmatprep.subr.mxu0 0.0
          %436 = vmatpush1.msra.mxu0 0.0
          %437 = vmatprep.subr.mxu0 0.0
          %438 = vmatpush1.msra.mxu0 0.0
          %439 = vmatprep.mubr.f32.mxu0 0.0
          %440 = vmatmul.mubr.f32.gmra.mrb[0].mxu0 %v352
          %v441 = vpop.f32.mrb[0].mxu0
          %v442 = vadd.f32 %v333, %v441
          %v443 = vpop.f32.mrb[0].mxu0
          %v444 = vadd.f32 %v337, %v443
          %445 = vmatprep.mubr.f32.mxu0 0.0
          %446 = vmatmul.mubr.f32.gmra.mrb[0].mxu0 %v355
          %v447 = vpop.f32.mrb[0].mxu0
          %v448 = vadd.f32 %v333, %v447
          %v449 = vpop.f32.mrb[0].mxu0
          %v450 = vadd.f32 %v337, %v449
          %451 = vmatprep.mubr.f32.mxu0 0.0
          %452 = vmatmul.mubr.f32.gmra.mrb[0].mxu0 %v358
          %v453 = vpop.f32.mrb[0].mxu0
          %v454 = vadd.f32 %v333, %v453
          %v455 = vpop.f32.mrb[0].mxu0
          %v456 = vadd.f32 %v337, %v455
          %457 = vmatprep.mubr.f32.mxu0 0.0
          %458 = vmatmul.mubr.f32.gmra.mrb[0].mxu0 %v361
          %v459 = vpop.f32.mrb[0].mxu0
          %v460 = vadd.f32 %v333, %v459
          %v461 = vpop.f32.mrb[0].mxu0
          %v462 = vadd.f32 %v337, %v461
          %463 = vmatprep.mubr.f32.mxu0 0.0
          %464 = vmatmul.mubr.f32.gmra.mrb[0].mxu0 %v364
          %v465 = vpop.f32.mrb[0].mxu0
          %v466 = vadd.f32 %v333, %v465
          %v467 = vpop.f32.mrb[0].mxu0
          %v468 = vadd.f32 %v337, %v467
          %469 = vmatprep.mubr.f32.mxu0 0.0
          %470 = vmatmul.mubr.f32.gmra.mrb[0].mxu0 %v367
          %v471 = vpop.f32.mrb[0].mxu0
          %v472 = vadd.f32 %v333, %v471
          %v473 = vpop.f32.mrb[0].mxu0
          %v474 = vadd.f32 %v337, %v473
          %475 = vmatprep.mubr.f32.mxu0 0.0
          %476 = vmatmul.mubr.f32.gmra.mrb[0].mxu0 %v370
          %v477 = vpop.f32.mrb[0].mxu0
          %v478 = vadd.f32 %v333, %v477
          %v479 = vpop.f32.mrb[0].mxu0
          %v480 = vadd.f32 %v337, %v479
          %481 = vmatprep.mubr.f32.mxu0 0.0
          %482 = vmatmul.mubr.f32.gmra.mrb[0].mxu0 %v373
          %v483 = vpop.f32.mrb[0].mxu0
          %v484 = vadd.f32 %v333, %v483
          %v485 = vpop.f32.mrb[0].mxu0
          %v486 = vadd.f32 %v337, %v485
          %487 = vdwg.mxu0
          %488 = vmatprep.subr.mxu0 %v323
          %489 = vmatpush1.msra.mxu0 %v322
          %490 = vmatprep.subr.mxu0 %v327
          %491 = vmatpush1.msra.mxu0 %v326
          %492 = vmatprep.subr.mxu0 0.0
          %493 = vmatpush1.msra.mxu0 0.0
          %494 = vmatprep.subr.mxu0 0.0
          %495 = vmatpush1.msra.mxu0 0.0
          %496 = vmatprep.subr.mxu0 0.0
          %497 = vmatpush1.msra.mxu0 0.0
          %498 = vmatprep.subr.mxu0 0.0
          %499 = vmatpush1.msra.mxu0 0.0
          %500 = vmatprep.subr.mxu0 0.0
          %501 = vmatpush1.msra.mxu0 0.0
          %502 = vmatprep.subr.mxu0 0.0
          %503 = vmatpush1.msra.mxu0 0.0
          %504 = vmatprep.subr.mxu0 0.0
          %505 = vmatpush1.msra.mxu0 0.0
          %506 = vmatprep.subr.mxu0 0.0
          %507 = vmatpush1.msra.mxu0 0.0
          %508 = vmatprep.subr.mxu0 0.0
          %509 = vmatpush1.msra.mxu0 0.0
          %510 = vmatprep.subr.mxu0 0.0
          %511 = vmatpush1.msra.mxu0 0.0
          %512 = vmatprep.subr.mxu0 0.0
          %513 = vmatpush1.msra.mxu0 0.0
          %514 = vmatprep.subr.mxu0 0.0
          %515 = vmatpush1.msra.mxu0 0.0
          %516 = vmatprep.subr.mxu0 0.0
          %517 = vmatpush1.msra.mxu0 0.0
          %518 = vmatprep.subr.mxu0 0.0
          %519 = vmatpush1.msra.mxu0 0.0
          %520 = vmatprep.subr.mxu0 0.0
          %521 = vmatpush1.msra.mxu0 0.0
          %522 = vmatprep.subr.mxu0 0.0
          %523 = vmatpush1.msra.mxu0 0.0
          %524 = vmatprep.subr.mxu0 0.0
          %525 = vmatpush1.msra.mxu0 0.0
          %526 = vmatprep.subr.mxu0 0.0
          %527 = vmatpush1.msra.mxu0 0.0
          %528 = vmatprep.subr.mxu0 0.0
          %529 = vmatpush1.msra.mxu0 0.0
          %530 = vmatprep.subr.mxu0 0.0
          %531 = vmatpush1.msra.mxu0 0.0
          %532 = vmatprep.subr.mxu0 0.0
          %533 = vmatpush1.msra.mxu0 0.0
          %534 = vmatprep.subr.mxu0 0.0
          %535 = vmatpush1.msra.mxu0 0.0
          %536 = vmatprep.subr.mxu0 0.0
          %537 = vmatpush1.msra.mxu0 0.0
          %538 = vmatprep.subr.mxu0 0.0
          %539 = vmatpush1.msra.mxu0 0.0
          %540 = vmatprep.subr.mxu0 0.0
          %541 = vmatpush1.msra.mxu0 0.0
          %542 = vmatprep.subr.mxu0 0.0
          %543 = vmatpush1.msra.mxu0 0.0
          %544 = vmatprep.subr.mxu0 0.0
          %545 = vmatpush1.msra.mxu0 0.0
          %546 = vmatprep.subr.mxu0 0.0
          %547 = vmatpush1.msra.mxu0 0.0
          %548 = vmatprep.subr.mxu0 0.0
          %549 = vmatpush1.msra.mxu0 0.0
          %550 = vmatprep.subr.mxu0 0.0
          %551 = vmatpush1.msra.mxu0 0.0
          %552 = vmatprep.mubr.f32.mxu0 0.0
          %553 = vmatmul.mubr.f32.gmra.mrb[0].mxu0 %v352
          %v554 = vpop.f32.mrb[0].mxu0
          %v555 = vadd.f32 %v341, %v554
          %v556 = vpop.f32.mrb[0].mxu0
          %v557 = vadd.f32 %v345, %v556
          %558 = vmatprep.mubr.f32.mxu0 0.0
          %559 = vmatmul.mubr.f32.gmra.mrb[0].mxu0 %v355
          %v560 = vpop.f32.mrb[0].mxu0
          %v561 = vadd.f32 %v341, %v560
          %v562 = vpop.f32.mrb[0].mxu0
          %v563 = vadd.f32 %v345, %v562
          %564 = vmatprep.mubr.f32.mxu0 0.0
          %565 = vmatmul.mubr.f32.gmra.mrb[0].mxu0 %v358
          %v566 = vpop.f32.mrb[0].mxu0
          %v567 = vadd.f32 %v341, %v566
          %v568 = vpop.f32.mrb[0].mxu0
          %v569 = vadd.f32 %v345, %v568
          %570 = vmatprep.mubr.f32.mxu0 0.0
          %571 = vmatmul.mubr.f32.gmra.mrb[0].mxu0 %v361
          %v572 = vpop.f32.mrb[0].mxu0
          %v573 = vadd.f32 %v341, %v572
          %v574 = vpop.f32.mrb[0].mxu0
          %v575 = vadd.f32 %v345, %v574
          %576 = vmatprep.mubr.f32.mxu0 0.0
          %577 = vmatmul.mubr.f32.gmra.mrb[0].mxu0 %v364
          %v578 = vpop.f32.mrb[0].mxu0
          %v579 = vadd.f32 %v341, %v578
          %v580 = vpop.f32.mrb[0].mxu0
          %v581 = vadd.f32 %v345, %v580
          %582 = vmatprep.mubr.f32.mxu0 0.0
          %583 = vmatmul.mubr.f32.gmra.mrb[0].mxu0 %v367
          %v584 = vpop.f32.mrb[0].mxu0
          %v585 = vadd.f32 %v341, %v584
          %v586 = vpop.f32.mrb[0].mxu0
          %v587 = vadd.f32 %v345, %v586
          %588 = vmatprep.mubr.f32.mxu0 0.0
          %589 = vmatmul.mubr.f32.gmra.mrb[0].mxu0 %v370
          %v590 = vpop.f32.mrb[0].mxu0
          %v591 = vadd.f32 %v341, %v590
          %v592 = vpop.f32.mrb[0].mxu0
          %v593 = vadd.f32 %v345, %v592
          %594 = vmatprep.mubr.f32.mxu0 0.0
          %595 = vmatmul.mubr.f32.gmra.mrb[0].mxu0 %v373
          %v596 = vpop.f32.mrb[0].mxu0
          %v597 = vadd.f32 %v341, %v596
          %v598 = vpop.f32.mrb[0].mxu0
          %v599 = vadd.f32 %v345, %v598
          %600 = vdwg.mxu0
          %p601 = scmp.lt.s32.totalorder %s25, 0
          %s602 = ssub.s32 0, %s25
          %s603 = scalar_select %p601, %s602, %s25
          %s604 = sand.u32 %s603, 1
          %s605 = ssub.s32 0, %s604
          %s606 = scalar_select %p601, %s605, %s604
          %p607 = scmp.ne.s32.totalorder %s606, 0
          %p608 = scmp.lt.s32.totalorder %s606, 0
          %p609 = pnand %p608, %p607
          %p610 = pneg %p609
          %s611 = sadd.s32 %s606, 2
          %s612 = scalar_select %p610, %s611, %s606
          %s613 = smul.u32 %s612, 32
          %s614 = smul.addr %s613, 8
          %s615 = scalar_lea.vmem [#allocation4], %s614
          %616 = vst [vmem:[%s615] sm:$0xff] %v442
          %617 = vst [vmem:[%s615 + $0x8] sm:$0xff] %v444
          %618 = vst [vmem:[%s615 + $0x10] sm:$0xff] %v555
          %619 = vst [vmem:[%s615 + $0x18] sm:$0xff] %v557
          %620 = vst [vmem:[%s615 + $0x20] sm:$0xff] %v448
          %621 = vst [vmem:[%s615 + $0x28] sm:$0xff] %v450
          %622 = vst [vmem:[%s615 + $0x30] sm:$0xff] %v561
          %623 = vst [vmem:[%s615 + $0x38] sm:$0xff] %v563
          %624 = vst [vmem:[%s615 + $0x40] sm:$0xff] %v454
          %625 = vst [vmem:[%s615 + $0x48] sm:$0xff] %v456
          %626 = vst [vmem:[%s615 + $0x50] sm:$0xff] %v567
          %627 = vst [vmem:[%s615 + $0x58] sm:$0xff] %v569
          %628 = vst [vmem:[%s615 + $0x60] sm:$0xff] %v460
          %629 = vst [vmem:[%s615 + $0x68] sm:$0xff] %v462
          %630 = vst [vmem:[%s615 + $0x70] sm:$0xff] %v573
          %631 = vst [vmem:[%s615 + $0x78] sm:$0xff] %v575
          %632 = vst [vmem:[%s615 + $0x80] sm:$0xff] %v466
          %633 = vst [vmem:[%s615 + $0x88] sm:$0xff] %v468
          %634 = vst [vmem:[%s615 + $0x90] sm:$0xff] %v579
          %635 = vst [vmem:[%s615 + $0x98] sm:$0xff] %v581
          %636 = vst [vmem:[%s615 + $0xa0] sm:$0xff] %v472
          %637 = vst [vmem:[%s615 + $0xa8] sm:$0xff] %v474
          %638 = vst [vmem:[%s615 + $0xb0] sm:$0xff] %v585
          %639 = vst [vmem:[%s615 + $0xb8] sm:$0xff] %v587
          %640 = vst [vmem:[%s615 + $0xc0] sm:$0xff] %v478
          %641 = vst [vmem:[%s615 + $0xc8] sm:$0xff] %v480
          %642 = vst [vmem:[%s615 + $0xd0] sm:$0xff] %v591
          %643 = vst [vmem:[%s615 + $0xd8] sm:$0xff] %v593
          %644 = vst [vmem:[%s615 + $0xe0] sm:$0xff] %v484
          %645 = vst [vmem:[%s615 + $0xe8] sm:$0xff] %v486
          %646 = vst [vmem:[%s615 + $0xf0] sm:$0xff] %v597
          %647 = vst [vmem:[%s615 + $0xf8] sm:$0xff] %v599
        $region56: #{tpu_custom_call.1} parent=43 // pred_fallthru
          _
        %p648 = scmp.gt.s32.totalorder %s25, 0
        // Predicated region
        $region57: #{tpu_custom_call.1} parent=43 // pred_check
          %p649 = pneg %p648
        $region58: #{tpu_custom_call.1} parent=43 // pred_check_branch
          %651 = sbr.rel (%p649) target = $region60
        $region59: #{tpu_custom_call.1} parent=43 // pred_region
          %s652 = ssub.s32 %s25, 1
          %s653 = smul.u32 %s652, 8
          %s654 = ssub.s32 8, %s653
          %p655 = scmp.lt.s32.totalorder %s654, 8
          %s656 = scalar_select %p655, %s654, 8
          %p657 = scmp.lt.s32.totalorder %s652, 0
          %s658 = ssub.s32 0, %s652
          %s659 = scalar_select %p657, %s658, %s652
          %s660 = sand.u32 %s659, 1
          %s661 = ssub.s32 0, %s660
          %s662 = scalar_select %p657, %s661, %s660
          %p663 = scmp.ne.s32.totalorder %s662, 0
          %p664 = scmp.lt.s32.totalorder %s662, 0
          %p665 = pnand %p664, %p663
          %p666 = pneg %p665
          %s667 = sadd.s32 %s662, 2
          %s668 = scalar_select %p666, %s667, %s662
          %v669 = vld [vmem:[#allocation6] sm:$0xff]
          %v670 = vld [vmem:[#allocation6 + $0x8] sm:$0xff]
          %v671 = vld [vmem:[#allocation6 + $0x10] sm:$0xff]
          %v672 = vld [vmem:[#allocation6 + $0x18] sm:$0xff]
          %v673 = vld [vmem:[#allocation6 + $0x20] sm:$0xff]
          %v674 = vld [vmem:[#allocation6 + $0x28] sm:$0xff]
          %v675 = vld [vmem:[#allocation6 + $0x30] sm:$0xff]
          %v676 = vld [vmem:[#allocation6 + $0x38] sm:$0xff]
          %v677 = vld [vmem:[#allocation6 + $0x40] sm:$0xff]
          %v678 = vld [vmem:[#allocation6 + $0x48] sm:$0xff]
          %v679 = vld [vmem:[#allocation6 + $0x50] sm:$0xff]
          %v680 = vld [vmem:[#allocation6 + $0x58] sm:$0xff]
          %v681 = vld [vmem:[#allocation6 + $0x60] sm:$0xff]
          %v682 = vld [vmem:[#allocation6 + $0x68] sm:$0xff]
          %v683 = vld [vmem:[#allocation6 + $0x70] sm:$0xff]
          %v684 = vld [vmem:[#allocation6 + $0x78] sm:$0xff]
          %v685 = vld [vmem:[#allocation6 + $0x80] sm:$0xff]
          %v686 = vld [vmem:[#allocation6 + $0x88] sm:$0xff]
          %v687 = vld [vmem:[#allocation6 + $0x90] sm:$0xff]
          %v688 = vld [vmem:[#allocation6 + $0x98] sm:$0xff]
          %v689 = vld [vmem:[#allocation6 + $0xa0] sm:$0xff]
          %v690 = vld [vmem:[#allocation6 + $0xa8] sm:$0xff]
          %v691 = vld [vmem:[#allocation6 + $0xb0] sm:$0xff]
          %v692 = vld [vmem:[#allocation6 + $0xb8] sm:$0xff]
          %v693 = vld [vmem:[#allocation6 + $0xc0] sm:$0xff]
          %v694 = vld [vmem:[#allocation6 + $0xc8] sm:$0xff]
          %v695 = vld [vmem:[#allocation6 + $0xd0] sm:$0xff]
          %v696 = vld [vmem:[#allocation6 + $0xd8] sm:$0xff]
          %v697 = vld [vmem:[#allocation6 + $0xe0] sm:$0xff]
          %v698 = vld [vmem:[#allocation6 + $0xe8] sm:$0xff]
          %v699 = vld [vmem:[#allocation6 + $0xf0] sm:$0xff]
          %v700 = vld [vmem:[#allocation6 + $0xf8] sm:$0xff]
          %v701 = vld [vmem:[#allocation6 + $0x100] sm:$0xff]
          %v702 = vld [vmem:[#allocation6 + $0x108] sm:$0xff]
          %v703 = vld [vmem:[#allocation6 + $0x110] sm:$0xff]
          %v704 = vld [vmem:[#allocation6 + $0x118] sm:$0xff]
          %v705 = vld [vmem:[#allocation6 + $0x120] sm:$0xff]
          %v706 = vld [vmem:[#allocation6 + $0x128] sm:$0xff]
          %v707 = vld [vmem:[#allocation6 + $0x130] sm:$0xff]
          %v708 = vld [vmem:[#allocation6 + $0x138] sm:$0xff]
          %v709 = vld [vmem:[#allocation6 + $0x140] sm:$0xff]
          %v710 = vld [vmem:[#allocation6 + $0x148] sm:$0xff]
          %v711 = vld [vmem:[#allocation6 + $0x150] sm:$0xff]
          %v712 = vld [vmem:[#allocation6 + $0x158] sm:$0xff]
          %v713 = vld [vmem:[#allocation6 + $0x160] sm:$0xff]
          %v714 = vld [vmem:[#allocation6 + $0x168] sm:$0xff]
          %v715 = vld [vmem:[#allocation6 + $0x170] sm:$0xff]
          %v716 = vld [vmem:[#allocation6 + $0x178] sm:$0xff]
          %v717 = vld [vmem:[#allocation6 + $0x180] sm:$0xff]
          %v718 = vld [vmem:[#allocation6 + $0x188] sm:$0xff]
          %v719 = vld [vmem:[#allocation6 + $0x190] sm:$0xff]
          %v720 = vld [vmem:[#allocation6 + $0x198] sm:$0xff]
          %v721 = vld [vmem:[#allocation6 + $0x1a0] sm:$0xff]
          %v722 = vld [vmem:[#allocation6 + $0x1a8] sm:$0xff]
          %v723 = vld [vmem:[#allocation6 + $0x1b0] sm:$0xff]
          %v724 = vld [vmem:[#allocation6 + $0x1b8] sm:$0xff]
          %v725 = vld [vmem:[#allocation6 + $0x1c0] sm:$0xff]
          %v726 = vld [vmem:[#allocation6 + $0x1c8] sm:$0xff]
          %v727 = vld [vmem:[#allocation6 + $0x1d0] sm:$0xff]
          %v728 = vld [vmem:[#allocation6 + $0x1d8] sm:$0xff]
          %v729 = vld [vmem:[#allocation6 + $0x1e0] sm:$0xff]
          %v730 = vld [vmem:[#allocation6 + $0x1e8] sm:$0xff]
          %v731 = vld [vmem:[#allocation6 + $0x1f0] sm:$0xff]
          %v732 = vld [vmem:[#allocation6 + $0x1f8] sm:$0xff]
          %v733 = vld [vmem:[#allocation2] sm:$0xff]
          %v734 = vld [vmem:[#allocation3] sm:$0xff]
          %s735 = smul.u32 %s668, 32
          %s736 = smul.addr %s735, 8
          %s737 = scalar_lea.vmem [#allocation4], %s736
          %v738 = vld [vmem:[%s737] sm:$0xff]
          %v739 = vld [vmem:[%s737 + $0x8] sm:$0xff]
          %v740 = vld [vmem:[%s737 + $0x10] sm:$0xff]
          %v741 = vld [vmem:[%s737 + $0x18] sm:$0xff]
          %742 = vmatprep.subr.mxu0 %v670
          %743 = vmatpush1.msra.mxu0 %v669
          %744 = vmatprep.subr.mxu0 %v674
          %745 = vmatpush1.msra.mxu0 %v673
          %746 = vmatprep.subr.mxu0 %v678
          %747 = vmatpush1.msra.mxu0 %v677
          %748 = vmatprep.subr.mxu0 %v682
          %749 = vmatpush1.msra.mxu0 %v681
          %750 = vmatprep.subr.mxu0 %v686
          %751 = vmatpush1.msra.mxu0 %v685
          %752 = vmatprep.subr.mxu0 %v690
          %753 = vmatpush1.msra.mxu0 %v689
          %754 = vmatprep.subr.mxu0 %v694
          %755 = vmatpush1.msra.mxu0 %v693
          %756 = vmatprep.subr.mxu0 %v698
          %757 = vmatpush1.msra.mxu0 %v697
          %758 = vmatprep.subr.mxu0 %v702
          %759 = vmatpush1.msra.mxu0 %v701
          %760 = vmatprep.subr.mxu0 %v706
          %761 = vmatpush1.msra.mxu0 %v705
          %762 = vmatprep.subr.mxu0 %v710
          %763 = vmatpush1.msra.mxu0 %v709
          %764 = vmatprep.subr.mxu0 %v714
          %765 = vmatpush1.msra.mxu0 %v713
          %766 = vmatprep.subr.mxu0 %v718
          %767 = vmatpush1.msra.mxu0 %v717
          %768 = vmatprep.subr.mxu0 %v722
          %769 = vmatpush1.msra.mxu0 %v721
          %770 = vmatprep.subr.mxu0 %v726
          %771 = vmatpush1.msra.mxu0 %v725
          %772 = vmatprep.subr.mxu0 %v730
          %773 = vmatpush1.msra.mxu0 %v729
          %774 = vmatprep.subr.mxu0 0.0
          %775 = vmatpush1.msra.mxu0 0.0
          %776 = vmatprep.subr.mxu0 0.0
          %777 = vmatpush1.msra.mxu0 0.0
          %778 = vmatprep.subr.mxu0 0.0
          %779 = vmatpush1.msra.mxu0 0.0
          %780 = vmatprep.subr.mxu0 0.0
          %781 = vmatpush1.msra.mxu0 0.0
          %782 = vmatprep.subr.mxu0 0.0
          %783 = vmatpush1.msra.mxu0 0.0
          %784 = vmatprep.subr.mxu0 0.0
          %785 = vmatpush1.msra.mxu0 0.0
          %786 = vmatprep.subr.mxu0 0.0
          %787 = vmatpush1.msra.mxu0 0.0
          %788 = vmatprep.subr.mxu0 0.0
          %789 = vmatpush1.msra.mxu0 0.0
          %790 = vmatprep.subr.mxu0 0.0
          %791 = vmatpush1.msra.mxu0 0.0
          %792 = vmatprep.subr.mxu0 0.0
          %793 = vmatpush1.msra.mxu0 0.0
          %794 = vmatprep.subr.mxu0 0.0
          %795 = vmatpush1.msra.mxu0 0.0
          %796 = vmatprep.subr.mxu0 0.0
          %797 = vmatpush1.msra.mxu0 0.0
          %798 = vmatprep.subr.mxu0 0.0
          %799 = vmatpush1.msra.mxu0 0.0
          %800 = vmatprep.subr.mxu0 0.0
          %801 = vmatpush1.msra.mxu0 0.0
          %802 = vmatprep.subr.mxu0 0.0
          %803 = vmatpush1.msra.mxu0 0.0
          %804 = vmatprep.subr.mxu0 0.0
          %805 = vmatpush1.msra.mxu0 0.0
          %806 = vmatprep.mubr.f32.mxu0 0.0
          %807 = vmatmul.mubr.f32.gmra.mrb[0].mxu0 %v733
          %v808 = vpop.f32.mrb[0].mxu0
          %v809 = vadd.f32 %v738, %v808
          %v810 = vpop.f32.mrb[0].mxu0
          %v811 = vadd.f32 %v739, %v810
          %812 = vdwg.mxu0
          %813 = vmatprep.subr.mxu0 %v672
          %814 = vmatpush1.msra.mxu0 %v671
          %815 = vmatprep.subr.mxu0 %v676
          %816 = vmatpush1.msra.mxu0 %v675
          %817 = vmatprep.subr.mxu0 %v680
          %818 = vmatpush1.msra.mxu0 %v679
          %819 = vmatprep.subr.mxu0 %v684
          %820 = vmatpush1.msra.mxu0 %v683
          %821 = vmatprep.subr.mxu0 %v688
          %822 = vmatpush1.msra.mxu0 %v687
          %823 = vmatprep.subr.mxu0 %v692
          %824 = vmatpush1.msra.mxu0 %v691
          %825 = vmatprep.subr.mxu0 %v696
          %826 = vmatpush1.msra.mxu0 %v695
          %827 = vmatprep.subr.mxu0 %v700
          %828 = vmatpush1.msra.mxu0 %v699
          %829 = vmatprep.subr.mxu0 %v704
          %830 = vmatpush1.msra.mxu0 %v703
          %831 = vmatprep.subr.mxu0 %v708
          %832 = vmatpush1.msra.mxu0 %v707
          %833 = vmatprep.subr.mxu0 %v712
          %834 = vmatpush1.msra.mxu0 %v711
          %835 = vmatprep.subr.mxu0 %v716
          %836 = vmatpush1.msra.mxu0 %v715
          %837 = vmatprep.subr.mxu0 %v720
          %838 = vmatpush1.msra.mxu0 %v719
          %839 = vmatprep.subr.mxu0 %v724
          %840 = vmatpush1.msra.mxu0 %v723
          %841 = vmatprep.subr.mxu0 %v728
          %842 = vmatpush1.msra.mxu0 %v727
          %843 = vmatprep.subr.mxu0 %v732
          %844 = vmatpush1.msra.mxu0 %v731
          %845 = vmatprep.subr.mxu0 0.0
          %846 = vmatpush1.msra.mxu0 0.0
          %847 = vmatprep.subr.mxu0 0.0
          %848 = vmatpush1.msra.mxu0 0.0
          %849 = vmatprep.subr.mxu0 0.0
          %850 = vmatpush1.msra.mxu0 0.0
          %851 = vmatprep.subr.mxu0 0.0
          %852 = vmatpush1.msra.mxu0 0.0
          %853 = vmatprep.subr.mxu0 0.0
          %854 = vmatpush1.msra.mxu0 0.0
          %855 = vmatprep.subr.mxu0 0.0
          %856 = vmatpush1.msra.mxu0 0.0
          %857 = vmatprep.subr.mxu0 0.0
          %858 = vmatpush1.msra.mxu0 0.0
          %859 = vmatprep.subr.mxu0 0.0
          %860 = vmatpush1.msra.mxu0 0.0
          %861 = vmatprep.subr.mxu0 0.0
          %862 = vmatpush1.msra.mxu0 0.0
          %863 = vmatprep.subr.mxu0 0.0
          %864 = vmatpush1.msra.mxu0 0.0
          %865 = vmatprep.subr.mxu0 0.0
          %866 = vmatpush1.msra.mxu0 0.0
          %867 = vmatprep.subr.mxu0 0.0
          %868 = vmatpush1.msra.mxu0 0.0
          %869 = vmatprep.subr.mxu0 0.0
          %870 = vmatpush1.msra.mxu0 0.0
          %871 = vmatprep.subr.mxu0 0.0
          %872 = vmatpush1.msra.mxu0 0.0
          %873 = vmatprep.subr.mxu0 0.0
          %874 = vmatpush1.msra.mxu0 0.0
          %875 = vmatprep.subr.mxu0 0.0
          %876 = vmatpush1.msra.mxu0 0.0
          %877 = vmatprep.mubr.f32.mxu0 0.0
          %878 = vmatmul.mubr.f32.gmra.mrb[0].mxu0 %v733
          %v879 = vpop.f32.mrb[0].mxu0
          %v880 = vadd.f32 %v740, %v879
          %v881 = vpop.f32.mrb[0].mxu0
          %v882 = vadd.f32 %v741, %v881
          %883 = vdwg.mxu0
          %v884 = vxor.u32 %v809, 2147483648
          %v885 = vxor.u32 %v811, 2147483648
          %v886 = vmul.f32 %v884, 1.442695
          %v887 = vpow.pop %v886
          %v888 = vmul.f32 %v885, 1.442695
          %v889 = vpow.pop %v888
          %v890 = vadd.f32 %v887, 1.0
          %v891 = vadd.f32 %v889, 1.0
          %v892 = vrcp.pop %v890
          %v893 = vmul.f32 1.0, %v892
          %v894 = vrcp.pop %v891
          %v895 = vmul.f32 1.0, %v894
          %v896 = vtanh.pop %v880
          %v897 = vxor.u32 %v882, 2147483648
          %v898 = vmul.f32 %v897, 1.442695
          %v899 = vpow.pop %v898
          %v900 = vadd.f32 %v899, 1.0
          %v901 = vrcp.pop %v900
          %v902 = vmul.f32 1.0, %v901
          %v903 = vmul.f32 %v895, %v734
          %v904 = vmul.f32 %v893, %v896
          %v905 = vadd.f32 %v903, %v904
          %v906 = vtanh.pop %v905
          %v907 = vmul.f32 %v902, %v906
          %p908 = scmp.gt.s32.totalorder %s656, 0
          %s909 = scalar_select %p908, 1, 0
          %v910 = vstv %s909
          %vm911 = vcmp.eq.s32.totalorder %v910, 1
          %v912 = vsel %vm911, %v907, %v733
          %v913 = vsel %vm911, %v905, %v734
          %s914 = sadd.s32 4, %s735
          %s915 = smul.addr %s914, 8
          %s916 = scalar_lea.vmem [#allocation4], %s915
          %v917 = vld [vmem:[%s916] sm:$0xff]
          %v918 = vld [vmem:[%s916 + $0x8] sm:$0xff]
          %v919 = vld [vmem:[%s916 + $0x10] sm:$0xff]
          %v920 = vld [vmem:[%s916 + $0x18] sm:$0xff]
          %921 = vmatprep.subr.mxu0 %v670
          %922 = vmatpush1.msra.mxu0 %v669
          %923 = vmatprep.subr.mxu0 %v674
          %924 = vmatpush1.msra.mxu0 %v673
          %925 = vmatprep.subr.mxu0 %v678
          %926 = vmatpush1.msra.mxu0 %v677
          %927 = vmatprep.subr.mxu0 %v682
          %928 = vmatpush1.msra.mxu0 %v681
          %929 = vmatprep.subr.mxu0 %v686
          %930 = vmatpush1.msra.mxu0 %v685
          %931 = vmatprep.subr.mxu0 %v690
          %932 = vmatpush1.msra.mxu0 %v689
          %933 = vmatprep.subr.mxu0 %v694
          %934 = vmatpush1.msra.mxu0 %v693
          %935 = vmatprep.subr.mxu0 %v698
          %936 = vmatpush1.msra.mxu0 %v697
          %937 = vmatprep.subr.mxu0 %v702
          %938 = vmatpush1.msra.mxu0 %v701
          %939 = vmatprep.subr.mxu0 %v706
          %940 = vmatpush1.msra.mxu0 %v705
          %941 = vmatprep.subr.mxu0 %v710
          %942 = vmatpush1.msra.mxu0 %v709
          %943 = vmatprep.subr.mxu0 %v714
          %944 = vmatpush1.msra.mxu0 %v713
          %945 = vmatprep.subr.mxu0 %v718
          %946 = vmatpush1.msra.mxu0 %v717
          %947 = vmatprep.subr.mxu0 %v722
          %948 = vmatpush1.msra.mxu0 %v721
          %949 = vmatprep.subr.mxu0 %v726
          %950 = vmatpush1.msra.mxu0 %v725
          %951 = vmatprep.subr.mxu0 %v730
          %952 = vmatpush1.msra.mxu0 %v729
          %953 = vmatprep.subr.mxu0 0.0
          %954 = vmatpush1.msra.mxu0 0.0
          %955 = vmatprep.subr.mxu0 0.0
          %956 = vmatpush1.msra.mxu0 0.0
          %957 = vmatprep.subr.mxu0 0.0
          %958 = vmatpush1.msra.mxu0 0.0
          %959 = vmatprep.subr.mxu0 0.0
          %960 = vmatpush1.msra.mxu0 0.0
          %961 = vmatprep.subr.mxu0 0.0
          %962 = vmatpush1.msra.mxu0 0.0
          %963 = vmatprep.subr.mxu0 0.0
          %964 = vmatpush1.msra.mxu0 0.0
          %965 = vmatprep.subr.mxu0 0.0
          %966 = vmatpush1.msra.mxu0 0.0
          %967 = vmatprep.subr.mxu0 0.0
          %968 = vmatpush1.msra.mxu0 0.0
          %969 = vmatprep.subr.mxu0 0.0
          %970 = vmatpush1.msra.mxu0 0.0
          %971 = vmatprep.subr.mxu0 0.0
          %972 = vmatpush1.msra.mxu0 0.0
          %973 = vmatprep.subr.mxu0 0.0
          %974 = vmatpush1.msra.mxu0 0.0
          %975 = vmatprep.subr.mxu0 0.0
          %976 = vmatpush1.msra.mxu0 0.0
          %977 = vmatprep.subr.mxu0 0.0
          %978 = vmatpush1.msra.mxu0 0.0
          %979 = vmatprep.subr.mxu0 0.0
          %980 = vmatpush1.msra.mxu0 0.0
          %981 = vmatprep.subr.mxu0 0.0
          %982 = vmatpush1.msra.mxu0 0.0
          %983 = vmatprep.subr.mxu0 0.0
          %984 = vmatpush1.msra.mxu0 0.0
          %985 = vmatprep.mubr.f32.mxu0 0.0
          %986 = vmatmul.mubr.f32.gmra.mrb[0].mxu0 %v912
          %v987 = vpop.f32.mrb[0].mxu0
          %v988 = vadd.f32 %v917, %v987
          %v989 = vpop.f32.mrb[0].mxu0
          %v990 = vadd.f32 %v918, %v989
          %991 = vdwg.mxu0
          %992 = vmatprep.subr.mxu0 %v672
          %993 = vmatpush1.msra.mxu0 %v671
          %994 = vmatprep.subr.mxu0 %v676
          %995 = vmatpush1.msra.mxu0 %v675
          %996 = vmatprep.subr.mxu0 %v680
          %997 = vmatpush1.msra.mxu0 %v679
          %998 = vmatprep.subr.mxu0 %v684
          %999 = vmatpush1.msra.mxu0 %v683
          %1000 = vmatprep.subr.mxu0 %v688
          %1001 = vmatpush1.msra.mxu0 %v687
          %1002 = vmatprep.subr.mxu0 %v692
          %1003 = vmatpush1.msra.mxu0 %v691
          %1004 = vmatprep.subr.mxu0 %v696
          %1005 = vmatpush1.msra.mxu0 %v695
          %1006 = vmatprep.subr.mxu0 %v700
          %1007 = vmatpush1.msra.mxu0 %v699
          %1008 = vmatprep.subr.mxu0 %v704
          %1009 = vmatpush1.msra.mxu0 %v703
          %1010 = vmatprep.subr.mxu0 %v708
          %1011 = vmatpush1.msra.mxu0 %v707
          %1012 = vmatprep.subr.mxu0 %v712
          %1013 = vmatpush1.msra.mxu0 %v711
          %1014 = vmatprep.subr.mxu0 %v716
          %1015 = vmatpush1.msra.mxu0 %v715
          %1016 = vmatprep.subr.mxu0 %v720
          %1017 = vmatpush1.msra.mxu0 %v719
          %1018 = vmatprep.subr.mxu0 %v724
          %1019 = vmatpush1.msra.mxu0 %v723
          %1020 = vmatprep.subr.mxu0 %v728
          %1021 = vmatpush1.msra.mxu0 %v727
          %1022 = vmatprep.subr.mxu0 %v732
          %1023 = vmatpush1.msra.mxu0 %v731
          %1024 = vmatprep.subr.mxu0 0.0
          %1025 = vmatpush1.msra.mxu0 0.0
          %1026 = vmatprep.subr.mxu0 0.0
          %1027 = vmatpush1.msra.mxu0 0.0
          %1028 = vmatprep.subr.mxu0 0.0
          %1029 = vmatpush1.msra.mxu0 0.0
          %1030 = vmatprep.subr.mxu0 0.0
          %1031 = vmatpush1.msra.mxu0 0.0
          %1032 = vmatprep.subr.mxu0 0.0
          %1033 = vmatpush1.msra.mxu0 0.0
          %1034 = vmatprep.subr.mxu0 0.0
          %1035 = vmatpush1.msra.mxu0 0.0
          %1036 = vmatprep.subr.mxu0 0.0
          %1037 = vmatpush1.msra.mxu0 0.0
          %1038 = vmatprep.subr.mxu0 0.0
          %1039 = vmatpush1.msra.mxu0 0.0
          %1040 = vmatprep.subr.mxu0 0.0
          %1041 = vmatpush1.msra.mxu0 0.0
          %1042 = vmatprep.subr.mxu0 0.0
          %1043 = vmatpush1.msra.mxu0 0.0
          %1044 = vmatprep.subr.mxu0 0.0
          %1045 = vmatpush1.msra.mxu0 0.0
          %1046 = vmatprep.subr.mxu0 0.0
          %1047 = vmatpush1.msra.mxu0 0.0
          %1048 = vmatprep.subr.mxu0 0.0
          %1049 = vmatpush1.msra.mxu0 0.0
          %1050 = vmatprep.subr.mxu0 0.0
          %1051 = vmatpush1.msra.mxu0 0.0
          %1052 = vmatprep.subr.mxu0 0.0
          %1053 = vmatpush1.msra.mxu0 0.0
          %1054 = vmatprep.subr.mxu0 0.0
          %1055 = vmatpush1.msra.mxu0 0.0
          %1056 = vmatprep.mubr.f32.mxu0 0.0
          %1057 = vmatmul.mubr.f32.gmra.mrb[0].mxu0 %v912
          %v1058 = vpop.f32.mrb[0].mxu0
          %v1059 = vadd.f32 %v919, %v1058
          %v1060 = vpop.f32.mrb[0].mxu0
          %v1061 = vadd.f32 %v920, %v1060
          %1062 = vdwg.mxu0
          %v1063 = vxor.u32 %v988, 2147483648
          %v1064 = vxor.u32 %v990, 2147483648
          %v1065 = vmul.f32 %v1063, 1.442695
          %v1066 = vpow.pop %v1065
          %v1067 = vmul.f32 %v1064, 1.442695
          %v1068 = vpow.pop %v1067
          %v1069 = vadd.f32 %v1066, 1.0
          %v1070 = vadd.f32 %v1068, 1.0
          %v1071 = vrcp.pop %v1069
          %v1072 = vmul.f32 1.0, %v1071
          %v1073 = vrcp.pop %v1070
          %v1074 = vmul.f32 1.0, %v1073
          %v1075 = vtanh.pop %v1059
          %v1076 = vxor.u32 %v1061, 2147483648
          %v1077 = vmul.f32 %v1076, 1.442695
          %v1078 = vpow.pop %v1077
          %v1079 = vadd.f32 %v1078, 1.0
          %v1080 = vrcp.pop %v1079
          %v1081 = vmul.f32 1.0, %v1080
          %v1082 = vmul.f32 %v1074, %v913
          %v1083 = vmul.f32 %v1072, %v1075
          %v1084 = vadd.f32 %v1082, %v1083
          %v1085 = vtanh.pop %v1084
          %v1086 = vmul.f32 %v1081, %v1085
          %p1087 = scmp.gt.s32.totalorder %s656, 1
          %s1088 = scalar_select %p1087, 1, 0
          %v1089 = vstv %s1088
          %vm1090 = vcmp.eq.s32.totalorder %v1089, 1
          %v1091 = vsel %vm1090, %v1086, %v912
          %v1092 = vsel %vm1090, %v1084, %v913
          %s1093 = sadd.s32 8, %s735
          %s1094 = smul.addr %s1093, 8
          %s1095 = scalar_lea.vmem [#allocation4], %s1094
          %v1096 = vld [vmem:[%s1095] sm:$0xff]
          %v1097 = vld [vmem:[%s1095 + $0x8] sm:$0xff]
          %v1098 = vld [vmem:[%s1095 + $0x10] sm:$0xff]
          %v1099 = vld [vmem:[%s1095 + $0x18] sm:$0xff]
          %1100 = vmatprep.subr.mxu0 %v670
          %1101 = vmatpush1.msra.mxu0 %v669
          %1102 = vmatprep.subr.mxu0 %v674
          %1103 = vmatpush1.msra.mxu0 %v673
          %1104 = vmatprep.subr.mxu0 %v678
          %1105 = vmatpush1.msra.mxu0 %v677
          %1106 = vmatprep.subr.mxu0 %v682
          %1107 = vmatpush1.msra.mxu0 %v681
          %1108 = vmatprep.subr.mxu0 %v686
          %1109 = vmatpush1.msra.mxu0 %v685
          %1110 = vmatprep.subr.mxu0 %v690
          %1111 = vmatpush1.msra.mxu0 %v689
          %1112 = vmatprep.subr.mxu0 %v694
          %1113 = vmatpush1.msra.mxu0 %v693
          %1114 = vmatprep.subr.mxu0 %v698
          %1115 = vmatpush1.msra.mxu0 %v697
          %1116 = vmatprep.subr.mxu0 %v702
          %1117 = vmatpush1.msra.mxu0 %v701
          %1118 = vmatprep.subr.mxu0 %v706
          %1119 = vmatpush1.msra.mxu0 %v705
          %1120 = vmatprep.subr.mxu0 %v710
          %1121 = vmatpush1.msra.mxu0 %v709
          %1122 = vmatprep.subr.mxu0 %v714
          %1123 = vmatpush1.msra.mxu0 %v713
          %1124 = vmatprep.subr.mxu0 %v718
          %1125 = vmatpush1.msra.mxu0 %v717
          %1126 = vmatprep.subr.mxu0 %v722
          %1127 = vmatpush1.msra.mxu0 %v721
          %1128 = vmatprep.subr.mxu0 %v726
          %1129 = vmatpush1.msra.mxu0 %v725
          %1130 = vmatprep.subr.mxu0 %v730
          %1131 = vmatpush1.msra.mxu0 %v729
          %1132 = vmatprep.subr.mxu0 0.0
          %1133 = vmatpush1.msra.mxu0 0.0
          %1134 = vmatprep.subr.mxu0 0.0
          %1135 = vmatpush1.msra.mxu0 0.0
          %1136 = vmatprep.subr.mxu0 0.0
          %1137 = vmatpush1.msra.mxu0 0.0
          %1138 = vmatprep.subr.mxu0 0.0
          %1139 = vmatpush1.msra.mxu0 0.0
          %1140 = vmatprep.subr.mxu0 0.0
          %1141 = vmatpush1.msra.mxu0 0.0
          %1142 = vmatprep.subr.mxu0 0.0
          %1143 = vmatpush1.msra.mxu0 0.0
          %1144 = vmatprep.subr.mxu0 0.0
          %1145 = vmatpush1.msra.mxu0 0.0
          %1146 = vmatprep.subr.mxu0 0.0
          %1147 = vmatpush1.msra.mxu0 0.0
          %1148 = vmatprep.subr.mxu0 0.0
          %1149 = vmatpush1.msra.mxu0 0.0
          %1150 = vmatprep.subr.mxu0 0.0
          %1151 = vmatpush1.msra.mxu0 0.0
          %1152 = vmatprep.subr.mxu0 0.0
          %1153 = vmatpush1.msra.mxu0 0.0
          %1154 = vmatprep.subr.mxu0 0.0
          %1155 = vmatpush1.msra.mxu0 0.0
          %1156 = vmatprep.subr.mxu0 0.0
          %1157 = vmatpush1.msra.mxu0 0.0
          %1158 = vmatprep.subr.mxu0 0.0
          %1159 = vmatpush1.msra.mxu0 0.0
          %1160 = vmatprep.subr.mxu0 0.0
          %1161 = vmatpush1.msra.mxu0 0.0
          %1162 = vmatprep.subr.mxu0 0.0
          %1163 = vmatpush1.msra.mxu0 0.0
          %1164 = vmatprep.mubr.f32.mxu0 0.0
          %1165 = vmatmul.mubr.f32.gmra.mrb[0].mxu0 %v1091
          %v1166 = vpop.f32.mrb[0].mxu0
          %v1167 = vadd.f32 %v1096, %v1166
          %v1168 = vpop.f32.mrb[0].mxu0
          %v1169 = vadd.f32 %v1097, %v1168
          %1170 = vdwg.mxu0
          %1171 = vmatprep.subr.mxu0 %v672
          %1172 = vmatpush1.msra.mxu0 %v671
          %1173 = vmatprep.subr.mxu0 %v676
          %1174 = vmatpush1.msra.mxu0 %v675
          %1175 = vmatprep.subr.mxu0 %v680
          %1176 = vmatpush1.msra.mxu0 %v679
          %1177 = vmatprep.subr.mxu0 %v684
          %1178 = vmatpush1.msra.mxu0 %v683
          %1179 = vmatprep.subr.mxu0 %v688
          %1180 = vmatpush1.msra.mxu0 %v687
          %1181 = vmatprep.subr.mxu0 %v692
          %1182 = vmatpush1.msra.mxu0 %v691
          %1183 = vmatprep.subr.mxu0 %v696
          %1184 = vmatpush1.msra.mxu0 %v695
          %1185 = vmatprep.subr.mxu0 %v700
          %1186 = vmatpush1.msra.mxu0 %v699
          %1187 = vmatprep.subr.mxu0 %v704
          %1188 = vmatpush1.msra.mxu0 %v703
          %1189 = vmatprep.subr.mxu0 %v708
          %1190 = vmatpush1.msra.mxu0 %v707
          %1191 = vmatprep.subr.mxu0 %v712
          %1192 = vmatpush1.msra.mxu0 %v711
          %1193 = vmatprep.subr.mxu0 %v716
          %1194 = vmatpush1.msra.mxu0 %v715
          %1195 = vmatprep.subr.mxu0 %v720
          %1196 = vmatpush1.msra.mxu0 %v719
          %1197 = vmatprep.subr.mxu0 %v724
          %1198 = vmatpush1.msra.mxu0 %v723
          %1199 = vmatprep.subr.mxu0 %v728
          %1200 = vmatpush1.msra.mxu0 %v727
          %1201 = vmatprep.subr.mxu0 %v732
          %1202 = vmatpush1.msra.mxu0 %v731
          %1203 = vmatprep.subr.mxu0 0.0
          %1204 = vmatpush1.msra.mxu0 0.0
          %1205 = vmatprep.subr.mxu0 0.0
          %1206 = vmatpush1.msra.mxu0 0.0
          %1207 = vmatprep.subr.mxu0 0.0
          %1208 = vmatpush1.msra.mxu0 0.0
          %1209 = vmatprep.subr.mxu0 0.0
          %1210 = vmatpush1.msra.mxu0 0.0
          %1211 = vmatprep.subr.mxu0 0.0
          %1212 = vmatpush1.msra.mxu0 0.0
          %1213 = vmatprep.subr.mxu0 0.0
          %1214 = vmatpush1.msra.mxu0 0.0
          %1215 = vmatprep.subr.mxu0 0.0
          %1216 = vmatpush1.msra.mxu0 0.0
          %1217 = vmatprep.subr.mxu0 0.0
          %1218 = vmatpush1.msra.mxu0 0.0
          %1219 = vmatprep.subr.mxu0 0.0
          %1220 = vmatpush1.msra.mxu0 0.0
          %1221 = vmatprep.subr.mxu0 0.0
          %1222 = vmatpush1.msra.mxu0 0.0
          %1223 = vmatprep.subr.mxu0 0.0
          %1224 = vmatpush1.msra.mxu0 0.0
          %1225 = vmatprep.subr.mxu0 0.0
          %1226 = vmatpush1.msra.mxu0 0.0
          %1227 = vmatprep.subr.mxu0 0.0
          %1228 = vmatpush1.msra.mxu0 0.0
          %1229 = vmatprep.subr.mxu0 0.0
          %1230 = vmatpush1.msra.mxu0 0.0
          %1231 = vmatprep.subr.mxu0 0.0
          %1232 = vmatpush1.msra.mxu0 0.0
          %1233 = vmatprep.subr.mxu0 0.0
          %1234 = vmatpush1.msra.mxu0 0.0
          %1235 = vmatprep.mubr.f32.mxu0 0.0
          %1236 = vmatmul.mubr.f32.gmra.mrb[0].mxu0 %v1091
          %v1237 = vpop.f32.mrb[0].mxu0
          %v1238 = vadd.f32 %v1098, %v1237
          %v1239 = vpop.f32.mrb[0].mxu0
          %v1240 = vadd.f32 %v1099, %v1239
          %1241 = vdwg.mxu0
          %v1242 = vxor.u32 %v1167, 2147483648
          %v1243 = vxor.u32 %v1169, 2147483648
          %v1244 = vmul.f32 %v1242, 1.442695
          %v1245 = vpow.pop %v1244
          %v1246 = vmul.f32 %v1243, 1.442695
          %v1247 = vpow.pop %v1246
          %v1248 = vadd.f32 %v1245, 1.0
          %v1249 = vadd.f32 %v1247, 1.0
          %v1250 = vrcp.pop %v1248
          %v1251 = vmul.f32 1.0, %v1250
          %v1252 = vrcp.pop %v1249
          %v1253 = vmul.f32 1.0, %v1252
          %v1254 = vtanh.pop %v1238
          %v1255 = vxor.u32 %v1240, 2147483648
          %v1256 = vmul.f32 %v1255, 1.442695
          %v1257 = vpow.pop %v1256
          %v1258 = vadd.f32 %v1257, 1.0
          %v1259 = vrcp.pop %v1258
          %v1260 = vmul.f32 1.0, %v1259
          %v1261 = vmul.f32 %v1253, %v1092
          %v1262 = vmul.f32 %v1251, %v1254
          %v1263 = vadd.f32 %v1261, %v1262
          %v1264 = vtanh.pop %v1263
          %v1265 = vmul.f32 %v1260, %v1264
          %p1266 = scmp.gt.s32.totalorder %s656, 2
          %s1267 = scalar_select %p1266, 1, 0
          %v1268 = vstv %s1267
          %vm1269 = vcmp.eq.s32.totalorder %v1268, 1
          %v1270 = vsel %vm1269, %v1265, %v1091
          %v1271 = vsel %vm1269, %v1263, %v1092
          %s1272 = sadd.s32 12, %s735
          %s1273 = smul.addr %s1272, 8
          %s1274 = scalar_lea.vmem [#allocation4], %s1273
          %v1275 = vld [vmem:[%s1274] sm:$0xff]
          %v1276 = vld [vmem:[%s1274 + $0x8] sm:$0xff]
          %v1277 = vld [vmem:[%s1274 + $0x10] sm:$0xff]
          %v1278 = vld [vmem:[%s1274 + $0x18] sm:$0xff]
          %1279 = vmatprep.subr.mxu0 %v670
          %1280 = vmatpush1.msra.mxu0 %v669
          %1281 = vmatprep.subr.mxu0 %v674
          %1282 = vmatpush1.msra.mxu0 %v673
          %1283 = vmatprep.subr.mxu0 %v678
          %1284 = vmatpush1.msra.mxu0 %v677
          %1285 = vmatprep.subr.mxu0 %v682
          %1286 = vmatpush1.msra.mxu0 %v681
          %1287 = vmatprep.subr.mxu0 %v686
          %1288 = vmatpush1.msra.mxu0 %v685
          %1289 = vmatprep.subr.mxu0 %v690
          %1290 = vmatpush1.msra.mxu0 %v689
          %1291 = vmatprep.subr.mxu0 %v694
          %1292 = vmatpush1.msra.mxu0 %v693
          %1293 = vmatprep.subr.mxu0 %v698
          %1294 = vmatpush1.msra.mxu0 %v697
          %1295 = vmatprep.subr.mxu0 %v702
          %1296 = vmatpush1.msra.mxu0 %v701
          %1297 = vmatprep.subr.mxu0 %v706
          %1298 = vmatpush1.msra.mxu0 %v705
          %1299 = vmatprep.subr.mxu0 %v710
          %1300 = vmatpush1.msra.mxu0 %v709
          %1301 = vmatprep.subr.mxu0 %v714
          %1302 = vmatpush1.msra.mxu0 %v713
          %1303 = vmatprep.subr.mxu0 %v718
          %1304 = vmatpush1.msra.mxu0 %v717
          %1305 = vmatprep.subr.mxu0 %v722
          %1306 = vmatpush1.msra.mxu0 %v721
          %1307 = vmatprep.subr.mxu0 %v726
          %1308 = vmatpush1.msra.mxu0 %v725
          %1309 = vmatprep.subr.mxu0 %v730
          %1310 = vmatpush1.msra.mxu0 %v729
          %1311 = vmatprep.subr.mxu0 0.0
          %1312 = vmatpush1.msra.mxu0 0.0
          %1313 = vmatprep.subr.mxu0 0.0
          %1314 = vmatpush1.msra.mxu0 0.0
          %1315 = vmatprep.subr.mxu0 0.0
          %1316 = vmatpush1.msra.mxu0 0.0
          %1317 = vmatprep.subr.mxu0 0.0
          %1318 = vmatpush1.msra.mxu0 0.0
          %1319 = vmatprep.subr.mxu0 0.0
          %1320 = vmatpush1.msra.mxu0 0.0
          %1321 = vmatprep.subr.mxu0 0.0
          %1322 = vmatpush1.msra.mxu0 0.0
          %1323 = vmatprep.subr.mxu0 0.0
          %1324 = vmatpush1.msra.mxu0 0.0
          %1325 = vmatprep.subr.mxu0 0.0
          %1326 = vmatpush1.msra.mxu0 0.0
          %1327 = vmatprep.subr.mxu0 0.0
          %1328 = vmatpush1.msra.mxu0 0.0
          %1329 = vmatprep.subr.mxu0 0.0
          %1330 = vmatpush1.msra.mxu0 0.0
          %1331 = vmatprep.subr.mxu0 0.0
          %1332 = vmatpush1.msra.mxu0 0.0
          %1333 = vmatprep.subr.mxu0 0.0
          %1334 = vmatpush1.msra.mxu0 0.0
          %1335 = vmatprep.subr.mxu0 0.0
          %1336 = vmatpush1.msra.mxu0 0.0
          %1337 = vmatprep.subr.mxu0 0.0
          %1338 = vmatpush1.msra.mxu0 0.0
          %1339 = vmatprep.subr.mxu0 0.0
          %1340 = vmatpush1.msra.mxu0 0.0
          %1341 = vmatprep.subr.mxu0 0.0
          %1342 = vmatpush1.msra.mxu0 0.0
          %1343 = vmatprep.mubr.f32.mxu0 0.0
          %1344 = vmatmul.mubr.f32.gmra.mrb[0].mxu0 %v1270
          %v1345 = vpop.f32.mrb[0].mxu0
          %v1346 = vadd.f32 %v1275, %v1345
          %v1347 = vpop.f32.mrb[0].mxu0
          %v1348 = vadd.f32 %v1276, %v1347
          %1349 = vdwg.mxu0
          %1350 = vmatprep.subr.mxu0 %v672
          %1351 = vmatpush1.msra.mxu0 %v671
          %1352 = vmatprep.subr.mxu0 %v676
          %1353 = vmatpush1.msra.mxu0 %v675
          %1354 = vmatprep.subr.mxu0 %v680
          %1355 = vmatpush1.msra.mxu0 %v679
          %1356 = vmatprep.subr.mxu0 %v684
          %1357 = vmatpush1.msra.mxu0 %v683
          %1358 = vmatprep.subr.mxu0 %v688
          %1359 = vmatpush1.msra.mxu0 %v687
          %1360 = vmatprep.subr.mxu0 %v692
          %1361 = vmatpush1.msra.mxu0 %v691
          %1362 = vmatprep.subr.mxu0 %v696
          %1363 = vmatpush1.msra.mxu0 %v695
          %1364 = vmatprep.subr.mxu0 %v700
          %1365 = vmatpush1.msra.mxu0 %v699
          %1366 = vmatprep.subr.mxu0 %v704
          %1367 = vmatpush1.msra.mxu0 %v703
          %1368 = vmatprep.subr.mxu0 %v708
          %1369 = vmatpush1.msra.mxu0 %v707
          %1370 = vmatprep.subr.mxu0 %v712
          %1371 = vmatpush1.msra.mxu0 %v711
          %1372 = vmatprep.subr.mxu0 %v716
          %1373 = vmatpush1.msra.mxu0 %v715
          %1374 = vmatprep.subr.mxu0 %v720
          %1375 = vmatpush1.msra.mxu0 %v719
          %1376 = vmatprep.subr.mxu0 %v724
          %1377 = vmatpush1.msra.mxu0 %v723
          %1378 = vmatprep.subr.mxu0 %v728
          %1379 = vmatpush1.msra.mxu0 %v727
          %1380 = vmatprep.subr.mxu0 %v732
          %1381 = vmatpush1.msra.mxu0 %v731
          %1382 = vmatprep.subr.mxu0 0.0
          %1383 = vmatpush1.msra.mxu0 0.0
          %1384 = vmatprep.subr.mxu0 0.0
          %1385 = vmatpush1.msra.mxu0 0.0
          %1386 = vmatprep.subr.mxu0 0.0
          %1387 = vmatpush1.msra.mxu0 0.0
          %1388 = vmatprep.subr.mxu0 0.0
          %1389 = vmatpush1.msra.mxu0 0.0
          %1390 = vmatprep.subr.mxu0 0.0
          %1391 = vmatpush1.msra.mxu0 0.0
          %1392 = vmatprep.subr.mxu0 0.0
          %1393 = vmatpush1.msra.mxu0 0.0
          %1394 = vmatprep.subr.mxu0 0.0
          %1395 = vmatpush1.msra.mxu0 0.0
          %1396 = vmatprep.subr.mxu0 0.0
          %1397 = vmatpush1.msra.mxu0 0.0
          %1398 = vmatprep.subr.mxu0 0.0
          %1399 = vmatpush1.msra.mxu0 0.0
          %1400 = vmatprep.subr.mxu0 0.0
          %1401 = vmatpush1.msra.mxu0 0.0
          %1402 = vmatprep.subr.mxu0 0.0
          %1403 = vmatpush1.msra.mxu0 0.0
          %1404 = vmatprep.subr.mxu0 0.0
          %1405 = vmatpush1.msra.mxu0 0.0
          %1406 = vmatprep.subr.mxu0 0.0
          %1407 = vmatpush1.msra.mxu0 0.0
          %1408 = vmatprep.subr.mxu0 0.0
          %1409 = vmatpush1.msra.mxu0 0.0
          %1410 = vmatprep.subr.mxu0 0.0
          %1411 = vmatpush1.msra.mxu0 0.0
          %1412 = vmatprep.subr.mxu0 0.0
          %1413 = vmatpush1.msra.mxu0 0.0
          %1414 = vmatprep.mubr.f32.mxu0 0.0
          %1415 = vmatmul.mubr.f32.gmra.mrb[0].mxu0 %v1270
          %v1416 = vpop.f32.mrb[0].mxu0
          %v1417 = vadd.f32 %v1277, %v1416
          %v1418 = vpop.f32.mrb[0].mxu0
          %v1419 = vadd.f32 %v1278, %v1418
          %1420 = vdwg.mxu0
          %v1421 = vxor.u32 %v1346, 2147483648
          %v1422 = vxor.u32 %v1348, 2147483648
          %v1423 = vmul.f32 %v1421, 1.442695
          %v1424 = vpow.pop %v1423
          %v1425 = vmul.f32 %v1422, 1.442695
          %v1426 = vpow.pop %v1425
          %v1427 = vadd.f32 %v1424, 1.0
          %v1428 = vadd.f32 %v1426, 1.0
          %v1429 = vrcp.pop %v1427
          %v1430 = vmul.f32 1.0, %v1429
          %v1431 = vrcp.pop %v1428
          %v1432 = vmul.f32 1.0, %v1431
          %v1433 = vtanh.pop %v1417
          %v1434 = vxor.u32 %v1419, 2147483648
          %v1435 = vmul.f32 %v1434, 1.442695
          %v1436 = vpow.pop %v1435
          %v1437 = vadd.f32 %v1436, 1.0
          %v1438 = vrcp.pop %v1437
          %v1439 = vmul.f32 1.0, %v1438
          %v1440 = vmul.f32 %v1432, %v1271
          %v1441 = vmul.f32 %v1430, %v1433
          %v1442 = vadd.f32 %v1440, %v1441
          %v1443 = vtanh.pop %v1442
          %v1444 = vmul.f32 %v1439, %v1443
          %p1445 = scmp.gt.s32.totalorder %s656, 3
          %s1446 = scalar_select %p1445, 1, 0
          %v1447 = vstv %s1446
          %vm1448 = vcmp.eq.s32.totalorder %v1447, 1
          %v1449 = vsel %vm1448, %v1444, %v1270
          %v1450 = vsel %vm1448, %v1442, %v1271
          %s1451 = sadd.s32 16, %s735
          %s1452 = smul.addr %s1451, 8
          %s1453 = scalar_lea.vmem [#allocation4], %s1452
          %v1454 = vld [vmem:[%s1453] sm:$0xff]
          %v1455 = vld [vmem:[%s1453 + $0x8] sm:$0xff]
          %v1456 = vld [vmem:[%s1453 + $0x10] sm:$0xff]
          %v1457 = vld [vmem:[%s1453 + $0x18] sm:$0xff]
          %1458 = vmatprep.subr.mxu0 %v670
          %1459 = vmatpush1.msra.mxu0 %v669
          %1460 = vmatprep.subr.mxu0 %v674
          %1461 = vmatpush1.msra.mxu0 %v673
          %1462 = vmatprep.subr.mxu0 %v678
          %1463 = vmatpush1.msra.mxu0 %v677
          %1464 = vmatprep.subr.mxu0 %v682
          %1465 = vmatpush1.msra.mxu0 %v681
          %1466 = vmatprep.subr.mxu0 %v686
          %1467 = vmatpush1.msra.mxu0 %v685
          %1468 = vmatprep.subr.mxu0 %v690
          %1469 = vmatpush1.msra.mxu0 %v689
          %1470 = vmatprep.subr.mxu0 %v694
          %1471 = vmatpush1.msra.mxu0 %v693
          %1472 = vmatprep.subr.mxu0 %v698
          %1473 = vmatpush1.msra.mxu0 %v697
          %1474 = vmatprep.subr.mxu0 %v702
          %1475 = vmatpush1.msra.mxu0 %v701
          %1476 = vmatprep.subr.mxu0 %v706
          %1477 = vmatpush1.msra.mxu0 %v705
          %1478 = vmatprep.subr.mxu0 %v710
          %1479 = vmatpush1.msra.mxu0 %v709
          %1480 = vmatprep.subr.mxu0 %v714
          %1481 = vmatpush1.msra.mxu0 %v713
          %1482 = vmatprep.subr.mxu0 %v718
          %1483 = vmatpush1.msra.mxu0 %v717
          %1484 = vmatprep.subr.mxu0 %v722
          %1485 = vmatpush1.msra.mxu0 %v721
          %1486 = vmatprep.subr.mxu0 %v726
          %1487 = vmatpush1.msra.mxu0 %v725
          %1488 = vmatprep.subr.mxu0 %v730
          %1489 = vmatpush1.msra.mxu0 %v729
          %1490 = vmatprep.subr.mxu0 0.0
          %1491 = vmatpush1.msra.mxu0 0.0
          %1492 = vmatprep.subr.mxu0 0.0
          %1493 = vmatpush1.msra.mxu0 0.0
          %1494 = vmatprep.subr.mxu0 0.0
          %1495 = vmatpush1.msra.mxu0 0.0
          %1496 = vmatprep.subr.mxu0 0.0
          %1497 = vmatpush1.msra.mxu0 0.0
          %1498 = vmatprep.subr.mxu0 0.0
          %1499 = vmatpush1.msra.mxu0 0.0
          %1500 = vmatprep.subr.mxu0 0.0
          %1501 = vmatpush1.msra.mxu0 0.0
          %1502 = vmatprep.subr.mxu0 0.0
          %1503 = vmatpush1.msra.mxu0 0.0
          %1504 = vmatprep.subr.mxu0 0.0
          %1505 = vmatpush1.msra.mxu0 0.0
          %1506 = vmatprep.subr.mxu0 0.0
          %1507 = vmatpush1.msra.mxu0 0.0
          %1508 = vmatprep.subr.mxu0 0.0
          %1509 = vmatpush1.msra.mxu0 0.0
          %1510 = vmatprep.subr.mxu0 0.0
          %1511 = vmatpush1.msra.mxu0 0.0
          %1512 = vmatprep.subr.mxu0 0.0
          %1513 = vmatpush1.msra.mxu0 0.0
          %1514 = vmatprep.subr.mxu0 0.0
          %1515 = vmatpush1.msra.mxu0 0.0
          %1516 = vmatprep.subr.mxu0 0.0
          %1517 = vmatpush1.msra.mxu0 0.0
          %1518 = vmatprep.subr.mxu0 0.0
          %1519 = vmatpush1.msra.mxu0 0.0
          %1520 = vmatprep.subr.mxu0 0.0
          %1521 = vmatpush1.msra.mxu0 0.0
          %1522 = vmatprep.mubr.f32.mxu0 0.0
          %1523 = vmatmul.mubr.f32.gmra.mrb[0].mxu0 %v1449
          %v1524 = vpop.f32.mrb[0].mxu0
          %v1525 = vadd.f32 %v1454, %v1524
          %v1526 = vpop.f32.mrb[0].mxu0
          %v1527 = vadd.f32 %v1455, %v1526
          %1528 = vdwg.mxu0
          %1529 = vmatprep.subr.mxu0 %v672
          %1530 = vmatpush1.msra.mxu0 %v671
          %1531 = vmatprep.subr.mxu0 %v676
          %1532 = vmatpush1.msra.mxu0 %v675
          %1533 = vmatprep.subr.mxu0 %v680
          %1534 = vmatpush1.msra.mxu0 %v679
          %1535 = vmatprep.subr.mxu0 %v684
          %1536 = vmatpush1.msra.mxu0 %v683
          %1537 = vmatprep.subr.mxu0 %v688
          %1538 = vmatpush1.msra.mxu0 %v687
          %1539 = vmatprep.subr.mxu0 %v692
          %1540 = vmatpush1.msra.mxu0 %v691
          %1541 = vmatprep.subr.mxu0 %v696
          %1542 = vmatpush1.msra.mxu0 %v695
          %1543 = vmatprep.subr.mxu0 %v700
          %1544 = vmatpush1.msra.mxu0 %v699
          %1545 = vmatprep.subr.mxu0 %v704
          %1546 = vmatpush1.msra.mxu0 %v703
          %1547 = vmatprep.subr.mxu0 %v708
          %1548 = vmatpush1.msra.mxu0 %v707
          %1549 = vmatprep.subr.mxu0 %v712
          %1550 = vmatpush1.msra.mxu0 %v711
          %1551 = vmatprep.subr.mxu0 %v716
          %1552 = vmatpush1.msra.mxu0 %v715
          %1553 = vmatprep.subr.mxu0 %v720
          %1554 = vmatpush1.msra.mxu0 %v719
          %1555 = vmatprep.subr.mxu0 %v724
          %1556 = vmatpush1.msra.mxu0 %v723
          %1557 = vmatprep.subr.mxu0 %v728
          %1558 = vmatpush1.msra.mxu0 %v727
          %1559 = vmatprep.subr.mxu0 %v732
          %1560 = vmatpush1.msra.mxu0 %v731
          %1561 = vmatprep.subr.mxu0 0.0
          %1562 = vmatpush1.msra.mxu0 0.0
          %1563 = vmatprep.subr.mxu0 0.0
          %1564 = vmatpush1.msra.mxu0 0.0
          %1565 = vmatprep.subr.mxu0 0.0
          %1566 = vmatpush1.msra.mxu0 0.0
          %1567 = vmatprep.subr.mxu0 0.0
          %1568 = vmatpush1.msra.mxu0 0.0
          %1569 = vmatprep.subr.mxu0 0.0
          %1570 = vmatpush1.msra.mxu0 0.0
          %1571 = vmatprep.subr.mxu0 0.0
          %1572 = vmatpush1.msra.mxu0 0.0
          %1573 = vmatprep.subr.mxu0 0.0
          %1574 = vmatpush1.msra.mxu0 0.0
          %1575 = vmatprep.subr.mxu0 0.0
          %1576 = vmatpush1.msra.mxu0 0.0
          %1577 = vmatprep.subr.mxu0 0.0
          %1578 = vmatpush1.msra.mxu0 0.0
          %1579 = vmatprep.subr.mxu0 0.0
          %1580 = vmatpush1.msra.mxu0 0.0
          %1581 = vmatprep.subr.mxu0 0.0
          %1582 = vmatpush1.msra.mxu0 0.0
          %1583 = vmatprep.subr.mxu0 0.0
          %1584 = vmatpush1.msra.mxu0 0.0
          %1585 = vmatprep.subr.mxu0 0.0
          %1586 = vmatpush1.msra.mxu0 0.0
          %1587 = vmatprep.subr.mxu0 0.0
          %1588 = vmatpush1.msra.mxu0 0.0
          %1589 = vmatprep.subr.mxu0 0.0
          %1590 = vmatpush1.msra.mxu0 0.0
          %1591 = vmatprep.subr.mxu0 0.0
          %1592 = vmatpush1.msra.mxu0 0.0
          %1593 = vmatprep.mubr.f32.mxu0 0.0
          %1594 = vmatmul.mubr.f32.gmra.mrb[0].mxu0 %v1449
          %v1595 = vpop.f32.mrb[0].mxu0
          %v1596 = vadd.f32 %v1456, %v1595
          %v1597 = vpop.f32.mrb[0].mxu0
          %v1598 = vadd.f32 %v1457, %v1597
          %1599 = vdwg.mxu0
          %v1600 = vxor.u32 %v1525, 2147483648
          %v1601 = vxor.u32 %v1527, 2147483648
          %v1602 = vmul.f32 %v1600, 1.442695
          %v1603 = vpow.pop %v1602
          %v1604 = vmul.f32 %v1601, 1.442695
          %v1605 = vpow.pop %v1604
          %v1606 = vadd.f32 %v1603, 1.0
          %v1607 = vadd.f32 %v1605, 1.0
          %v1608 = vrcp.pop %v1606
          %v1609 = vmul.f32 1.0, %v1608
          %v1610 = vrcp.pop %v1607
          %v1611 = vmul.f32 1.0, %v1610
          %v1612 = vtanh.pop %v1596
          %v1613 = vxor.u32 %v1598, 2147483648
          %v1614 = vmul.f32 %v1613, 1.442695
          %v1615 = vpow.pop %v1614
          %v1616 = vadd.f32 %v1615, 1.0
          %v1617 = vrcp.pop %v1616
          %v1618 = vmul.f32 1.0, %v1617
          %v1619 = vmul.f32 %v1611, %v1450
          %v1620 = vmul.f32 %v1609, %v1612
          %v1621 = vadd.f32 %v1619, %v1620
          %v1622 = vtanh.pop %v1621
          %v1623 = vmul.f32 %v1618, %v1622
          %p1624 = scmp.gt.s32.totalorder %s656, 4
          %s1625 = scalar_select %p1624, 1, 0
          %v1626 = vstv %s1625
          %vm1627 = vcmp.eq.s32.totalorder %v1626, 1
          %v1628 = vsel %vm1627, %v1623, %v1449
          %v1629 = vsel %vm1627, %v1621, %v1450
          %s1630 = sadd.s32 20, %s735
          %s1631 = smul.addr %s1630, 8
          %s1632 = scalar_lea.vmem [#allocation4], %s1631
          %v1633 = vld [vmem:[%s1632] sm:$0xff]
          %v1634 = vld [vmem:[%s1632 + $0x8] sm:$0xff]
          %v1635 = vld [vmem:[%s1632 + $0x10] sm:$0xff]
          %v1636 = vld [vmem:[%s1632 + $0x18] sm:$0xff]
          %1637 = vmatprep.subr.mxu0 %v670
          %1638 = vmatpush1.msra.mxu0 %v669
          %1639 = vmatprep.subr.mxu0 %v674
          %1640 = vmatpush1.msra.mxu0 %v673
          %1641 = vmatprep.subr.mxu0 %v678
          %1642 = vmatpush1.msra.mxu0 %v677
          %1643 = vmatprep.subr.mxu0 %v682
          %1644 = vmatpush1.msra.mxu0 %v681
          %1645 = vmatprep.subr.mxu0 %v686
          %1646 = vmatpush1.msra.mxu0 %v685
          %1647 = vmatprep.subr.mxu0 %v690
          %1648 = vmatpush1.msra.mxu0 %v689
          %1649 = vmatprep.subr.mxu0 %v694
          %1650 = vmatpush1.msra.mxu0 %v693
          %1651 = vmatprep.subr.mxu0 %v698
          %1652 = vmatpush1.msra.mxu0 %v697
          %1653 = vmatprep.subr.mxu0 %v702
          %1654 = vmatpush1.msra.mxu0 %v701
          %1655 = vmatprep.subr.mxu0 %v706
          %1656 = vmatpush1.msra.mxu0 %v705
          %1657 = vmatprep.subr.mxu0 %v710
          %1658 = vmatpush1.msra.mxu0 %v709
          %1659 = vmatprep.subr.mxu0 %v714
          %1660 = vmatpush1.msra.mxu0 %v713
          %1661 = vmatprep.subr.mxu0 %v718
          %1662 = vmatpush1.msra.mxu0 %v717
          %1663 = vmatprep.subr.mxu0 %v722
          %1664 = vmatpush1.msra.mxu0 %v721
          %1665 = vmatprep.subr.mxu0 %v726
          %1666 = vmatpush1.msra.mxu0 %v725
          %1667 = vmatprep.subr.mxu0 %v730
          %1668 = vmatpush1.msra.mxu0 %v729
          %1669 = vmatprep.subr.mxu0 0.0
          %1670 = vmatpush1.msra.mxu0 0.0
          %1671 = vmatprep.subr.mxu0 0.0
          %1672 = vmatpush1.msra.mxu0 0.0
          %1673 = vmatprep.subr.mxu0 0.0
          %1674 = vmatpush1.msra.mxu0 0.0
          %1675 = vmatprep.subr.mxu0 0.0
          %1676 = vmatpush1.msra.mxu0 0.0
          %1677 = vmatprep.subr.mxu0 0.0
          %1678 = vmatpush1.msra.mxu0 0.0
          %1679 = vmatprep.subr.mxu0 0.0
          %1680 = vmatpush1.msra.mxu0 0.0
          %1681 = vmatprep.subr.mxu0 0.0
          %1682 = vmatpush1.msra.mxu0 0.0
          %1683 = vmatprep.subr.mxu0 0.0
          %1684 = vmatpush1.msra.mxu0 0.0
          %1685 = vmatprep.subr.mxu0 0.0
          %1686 = vmatpush1.msra.mxu0 0.0
          %1687 = vmatprep.subr.mxu0 0.0
          %1688 = vmatpush1.msra.mxu0 0.0
          %1689 = vmatprep.subr.mxu0 0.0
          %1690 = vmatpush1.msra.mxu0 0.0
          %1691 = vmatprep.subr.mxu0 0.0
          %1692 = vmatpush1.msra.mxu0 0.0
          %1693 = vmatprep.subr.mxu0 0.0
          %1694 = vmatpush1.msra.mxu0 0.0
          %1695 = vmatprep.subr.mxu0 0.0
          %1696 = vmatpush1.msra.mxu0 0.0
          %1697 = vmatprep.subr.mxu0 0.0
          %1698 = vmatpush1.msra.mxu0 0.0
          %1699 = vmatprep.subr.mxu0 0.0
          %1700 = vmatpush1.msra.mxu0 0.0
          %1701 = vmatprep.mubr.f32.mxu0 0.0
          %1702 = vmatmul.mubr.f32.gmra.mrb[0].mxu0 %v1628
          %v1703 = vpop.f32.mrb[0].mxu0
          %v1704 = vadd.f32 %v1633, %v1703
          %v1705 = vpop.f32.mrb[0].mxu0
          %v1706 = vadd.f32 %v1634, %v1705
          %1707 = vdwg.mxu0
          %1708 = vmatprep.subr.mxu0 %v672
          %1709 = vmatpush1.msra.mxu0 %v671
          %1710 = vmatprep.subr.mxu0 %v676
          %1711 = vmatpush1.msra.mxu0 %v675
          %1712 = vmatprep.subr.mxu0 %v680
          %1713 = vmatpush1.msra.mxu0 %v679
          %1714 = vmatprep.subr.mxu0 %v684
          %1715 = vmatpush1.msra.mxu0 %v683
          %1716 = vmatprep.subr.mxu0 %v688
          %1717 = vmatpush1.msra.mxu0 %v687
          %1718 = vmatprep.subr.mxu0 %v692
          %1719 = vmatpush1.msra.mxu0 %v691
          %1720 = vmatprep.subr.mxu0 %v696
          %1721 = vmatpush1.msra.mxu0 %v695
          %1722 = vmatprep.subr.mxu0 %v700
          %1723 = vmatpush1.msra.mxu0 %v699
          %1724 = vmatprep.subr.mxu0 %v704
          %1725 = vmatpush1.msra.mxu0 %v703
          %1726 = vmatprep.subr.mxu0 %v708
          %1727 = vmatpush1.msra.mxu0 %v707
          %1728 = vmatprep.subr.mxu0 %v712
          %1729 = vmatpush1.msra.mxu0 %v711
          %1730 = vmatprep.subr.mxu0 %v716
          %1731 = vmatpush1.msra.mxu0 %v715
          %1732 = vmatprep.subr.mxu0 %v720
          %1733 = vmatpush1.msra.mxu0 %v719
          %1734 = vmatprep.subr.mxu0 %v724
          %1735 = vmatpush1.msra.mxu0 %v723
          %1736 = vmatprep.subr.mxu0 %v728
          %1737 = vmatpush1.msra.mxu0 %v727
          %1738 = vmatprep.subr.mxu0 %v732
          %1739 = vmatpush1.msra.mxu0 %v731
          %1740 = vmatprep.subr.mxu0 0.0
          %1741 = vmatpush1.msra.mxu0 0.0
          %1742 = vmatprep.subr.mxu0 0.0
          %1743 = vmatpush1.msra.mxu0 0.0
          %1744 = vmatprep.subr.mxu0 0.0
          %1745 = vmatpush1.msra.mxu0 0.0
          %1746 = vmatprep.subr.mxu0 0.0
          %1747 = vmatpush1.msra.mxu0 0.0
          %1748 = vmatprep.subr.mxu0 0.0
          %1749 = vmatpush1.msra.mxu0 0.0
          %1750 = vmatprep.subr.mxu0 0.0
          %1751 = vmatpush1.msra.mxu0 0.0
          %1752 = vmatprep.subr.mxu0 0.0
          %1753 = vmatpush1.msra.mxu0 0.0
          %1754 = vmatprep.subr.mxu0 0.0
          %1755 = vmatpush1.msra.mxu0 0.0
          %1756 = vmatprep.subr.mxu0 0.0
          %1757 = vmatpush1.msra.mxu0 0.0
          %1758 = vmatprep.subr.mxu0 0.0
          %1759 = vmatpush1.msra.mxu0 0.0
          %1760 = vmatprep.subr.mxu0 0.0
          %1761 = vmatpush1.msra.mxu0 0.0
          %1762 = vmatprep.subr.mxu0 0.0
          %1763 = vmatpush1.msra.mxu0 0.0
          %1764 = vmatprep.subr.mxu0 0.0
          %1765 = vmatpush1.msra.mxu0 0.0
          %1766 = vmatprep.subr.mxu0 0.0
          %1767 = vmatpush1.msra.mxu0 0.0
          %1768 = vmatprep.subr.mxu0 0.0
          %1769 = vmatpush1.msra.mxu0 0.0
          %1770 = vmatprep.subr.mxu0 0.0
          %1771 = vmatpush1.msra.mxu0 0.0
          %1772 = vmatprep.mubr.f32.mxu0 0.0
          %1773 = vmatmul.mubr.f32.gmra.mrb[0].mxu0 %v1628
          %v1774 = vpop.f32.mrb[0].mxu0
          %v1775 = vadd.f32 %v1635, %v1774
          %v1776 = vpop.f32.mrb[0].mxu0
          %v1777 = vadd.f32 %v1636, %v1776
          %1778 = vdwg.mxu0
          %v1779 = vxor.u32 %v1704, 2147483648
          %v1780 = vxor.u32 %v1706, 2147483648
          %v1781 = vmul.f32 %v1779, 1.442695
          %v1782 = vpow.pop %v1781
          %v1783 = vmul.f32 %v1780, 1.442695
          %v1784 = vpow.pop %v1783
          %v1785 = vadd.f32 %v1782, 1.0
          %v1786 = vadd.f32 %v1784, 1.0
          %v1787 = vrcp.pop %v1785
          %v1788 = vmul.f32 1.0, %v1787
          %v1789 = vrcp.pop %v1786
          %v1790 = vmul.f32 1.0, %v1789
          %v1791 = vtanh.pop %v1775
          %v1792 = vxor.u32 %v1777, 2147483648
          %v1793 = vmul.f32 %v1792, 1.442695
          %v1794 = vpow.pop %v1793
          %v1795 = vadd.f32 %v1794, 1.0
          %v1796 = vrcp.pop %v1795
          %v1797 = vmul.f32 1.0, %v1796
          %v1798 = vmul.f32 %v1790, %v1629
          %v1799 = vmul.f32 %v1788, %v1791
          %v1800 = vadd.f32 %v1798, %v1799
          %v1801 = vtanh.pop %v1800
          %v1802 = vmul.f32 %v1797, %v1801
          %p1803 = scmp.gt.s32.totalorder %s656, 5
          %s1804 = scalar_select %p1803, 1, 0
          %v1805 = vstv %s1804
          %vm1806 = vcmp.eq.s32.totalorder %v1805, 1
          %v1807 = vsel %vm1806, %v1802, %v1628
          %v1808 = vsel %vm1806, %v1800, %v1629
          %s1809 = sadd.s32 24, %s735
          %s1810 = smul.addr %s1809, 8
          %s1811 = scalar_lea.vmem [#allocation4], %s1810
          %v1812 = vld [vmem:[%s1811] sm:$0xff]
          %v1813 = vld [vmem:[%s1811 + $0x8] sm:$0xff]
          %v1814 = vld [vmem:[%s1811 + $0x10] sm:$0xff]
          %v1815 = vld [vmem:[%s1811 + $0x18] sm:$0xff]
          %1816 = vmatprep.subr.mxu0 %v670
          %1817 = vmatpush1.msra.mxu0 %v669
          %1818 = vmatprep.subr.mxu0 %v674
          %1819 = vmatpush1.msra.mxu0 %v673
          %1820 = vmatprep.subr.mxu0 %v678
          %1821 = vmatpush1.msra.mxu0 %v677
          %1822 = vmatprep.subr.mxu0 %v682
          %1823 = vmatpush1.msra.mxu0 %v681
          %1824 = vmatprep.subr.mxu0 %v686
          %1825 = vmatpush1.msra.mxu0 %v685
          %1826 = vmatprep.subr.mxu0 %v690
          %1827 = vmatpush1.msra.mxu0 %v689
          %1828 = vmatprep.subr.mxu0 %v694
          %1829 = vmatpush1.msra.mxu0 %v693
          %1830 = vmatprep.subr.mxu0 %v698
          %1831 = vmatpush1.msra.mxu0 %v697
          %1832 = vmatprep.subr.mxu0 %v702
          %1833 = vmatpush1.msra.mxu0 %v701
          %1834 = vmatprep.subr.mxu0 %v706
          %1835 = vmatpush1.msra.mxu0 %v705
          %1836 = vmatprep.subr.mxu0 %v710
          %1837 = vmatpush1.msra.mxu0 %v709
          %1838 = vmatprep.subr.mxu0 %v714
          %1839 = vmatpush1.msra.mxu0 %v713
          %1840 = vmatprep.subr.mxu0 %v718
          %1841 = vmatpush1.msra.mxu0 %v717
          %1842 = vmatprep.subr.mxu0 %v722
          %1843 = vmatpush1.msra.mxu0 %v721
          %1844 = vmatprep.subr.mxu0 %v726
          %1845 = vmatpush1.msra.mxu0 %v725
          %1846 = vmatprep.subr.mxu0 %v730
          %1847 = vmatpush1.msra.mxu0 %v729
          %1848 = vmatprep.subr.mxu0 0.0
          %1849 = vmatpush1.msra.mxu0 0.0
          %1850 = vmatprep.subr.mxu0 0.0
          %1851 = vmatpush1.msra.mxu0 0.0
          %1852 = vmatprep.subr.mxu0 0.0
          %1853 = vmatpush1.msra.mxu0 0.0
          %1854 = vmatprep.subr.mxu0 0.0
          %1855 = vmatpush1.msra.mxu0 0.0
          %1856 = vmatprep.subr.mxu0 0.0
          %1857 = vmatpush1.msra.mxu0 0.0
          %1858 = vmatprep.subr.mxu0 0.0
          %1859 = vmatpush1.msra.mxu0 0.0
          %1860 = vmatprep.subr.mxu0 0.0
          %1861 = vmatpush1.msra.mxu0 0.0
          %1862 = vmatprep.subr.mxu0 0.0
          %1863 = vmatpush1.msra.mxu0 0.0
          %1864 = vmatprep.subr.mxu0 0.0
          %1865 = vmatpush1.msra.mxu0 0.0
          %1866 = vmatprep.subr.mxu0 0.0
          %1867 = vmatpush1.msra.mxu0 0.0
          %1868 = vmatprep.subr.mxu0 0.0
          %1869 = vmatpush1.msra.mxu0 0.0
          %1870 = vmatprep.subr.mxu0 0.0
          %1871 = vmatpush1.msra.mxu0 0.0
          %1872 = vmatprep.subr.mxu0 0.0
          %1873 = vmatpush1.msra.mxu0 0.0
          %1874 = vmatprep.subr.mxu0 0.0
          %1875 = vmatpush1.msra.mxu0 0.0
          %1876 = vmatprep.subr.mxu0 0.0
          %1877 = vmatpush1.msra.mxu0 0.0
          %1878 = vmatprep.subr.mxu0 0.0
          %1879 = vmatpush1.msra.mxu0 0.0
          %1880 = vmatprep.mubr.f32.mxu0 0.0
          %1881 = vmatmul.mubr.f32.gmra.mrb[0].mxu0 %v1807
          %v1882 = vpop.f32.mrb[0].mxu0
          %v1883 = vadd.f32 %v1812, %v1882
          %v1884 = vpop.f32.mrb[0].mxu0
          %v1885 = vadd.f32 %v1813, %v1884
          %1886 = vdwg.mxu0
          %1887 = vmatprep.subr.mxu0 %v672
          %1888 = vmatpush1.msra.mxu0 %v671
          %1889 = vmatprep.subr.mxu0 %v676
          %1890 = vmatpush1.msra.mxu0 %v675
          %1891 = vmatprep.subr.mxu0 %v680
          %1892 = vmatpush1.msra.mxu0 %v679
          %1893 = vmatprep.subr.mxu0 %v684
          %1894 = vmatpush1.msra.mxu0 %v683
          %1895 = vmatprep.subr.mxu0 %v688
          %1896 = vmatpush1.msra.mxu0 %v687
          %1897 = vmatprep.subr.mxu0 %v692
          %1898 = vmatpush1.msra.mxu0 %v691
          %1899 = vmatprep.subr.mxu0 %v696
          %1900 = vmatpush1.msra.mxu0 %v695
          %1901 = vmatprep.subr.mxu0 %v700
          %1902 = vmatpush1.msra.mxu0 %v699
          %1903 = vmatprep.subr.mxu0 %v704
          %1904 = vmatpush1.msra.mxu0 %v703
          %1905 = vmatprep.subr.mxu0 %v708
          %1906 = vmatpush1.msra.mxu0 %v707
          %1907 = vmatprep.subr.mxu0 %v712
          %1908 = vmatpush1.msra.mxu0 %v711
          %1909 = vmatprep.subr.mxu0 %v716
          %1910 = vmatpush1.msra.mxu0 %v715
          %1911 = vmatprep.subr.mxu0 %v720
          %1912 = vmatpush1.msra.mxu0 %v719
          %1913 = vmatprep.subr.mxu0 %v724
          %1914 = vmatpush1.msra.mxu0 %v723
          %1915 = vmatprep.subr.mxu0 %v728
          %1916 = vmatpush1.msra.mxu0 %v727
          %1917 = vmatprep.subr.mxu0 %v732
          %1918 = vmatpush1.msra.mxu0 %v731
          %1919 = vmatprep.subr.mxu0 0.0
          %1920 = vmatpush1.msra.mxu0 0.0
          %1921 = vmatprep.subr.mxu0 0.0
          %1922 = vmatpush1.msra.mxu0 0.0
          %1923 = vmatprep.subr.mxu0 0.0
          %1924 = vmatpush1.msra.mxu0 0.0
          %1925 = vmatprep.subr.mxu0 0.0
          %1926 = vmatpush1.msra.mxu0 0.0
          %1927 = vmatprep.subr.mxu0 0.0
          %1928 = vmatpush1.msra.mxu0 0.0
          %1929 = vmatprep.subr.mxu0 0.0
          %1930 = vmatpush1.msra.mxu0 0.0
          %1931 = vmatprep.subr.mxu0 0.0
          %1932 = vmatpush1.msra.mxu0 0.0
          %1933 = vmatprep.subr.mxu0 0.0
          %1934 = vmatpush1.msra.mxu0 0.0
          %1935 = vmatprep.subr.mxu0 0.0
          %1936 = vmatpush1.msra.mxu0 0.0
          %1937 = vmatprep.subr.mxu0 0.0
          %1938 = vmatpush1.msra.mxu0 0.0
          %1939 = vmatprep.subr.mxu0 0.0
          %1940 = vmatpush1.msra.mxu0 0.0
          %1941 = vmatprep.subr.mxu0 0.0
          %1942 = vmatpush1.msra.mxu0 0.0
          %1943 = vmatprep.subr.mxu0 0.0
          %1944 = vmatpush1.msra.mxu0 0.0
          %1945 = vmatprep.subr.mxu0 0.0
          %1946 = vmatpush1.msra.mxu0 0.0
          %1947 = vmatprep.subr.mxu0 0.0
          %1948 = vmatpush1.msra.mxu0 0.0
          %1949 = vmatprep.subr.mxu0 0.0
          %1950 = vmatpush1.msra.mxu0 0.0
          %1951 = vmatprep.mubr.f32.mxu0 0.0
          %1952 = vmatmul.mubr.f32.gmra.mrb[0].mxu0 %v1807
          %v1953 = vpop.f32.mrb[0].mxu0
          %v1954 = vadd.f32 %v1814, %v1953
          %v1955 = vpop.f32.mrb[0].mxu0
          %v1956 = vadd.f32 %v1815, %v1955
          %1957 = vdwg.mxu0
          %v1958 = vxor.u32 %v1883, 2147483648
          %v1959 = vxor.u32 %v1885, 2147483648
          %v1960 = vmul.f32 %v1958, 1.442695
          %v1961 = vpow.pop %v1960
          %v1962 = vmul.f32 %v1959, 1.442695
          %v1963 = vpow.pop %v1962
          %v1964 = vadd.f32 %v1961, 1.0
          %v1965 = vadd.f32 %v1963, 1.0
          %v1966 = vrcp.pop %v1964
          %v1967 = vmul.f32 1.0, %v1966
          %v1968 = vrcp.pop %v1965
          %v1969 = vmul.f32 1.0, %v1968
          %v1970 = vtanh.pop %v1954
          %v1971 = vxor.u32 %v1956, 2147483648
          %v1972 = vmul.f32 %v1971, 1.442695
          %v1973 = vpow.pop %v1972
          %v1974 = vadd.f32 %v1973, 1.0
          %v1975 = vrcp.pop %v1974
          %v1976 = vmul.f32 1.0, %v1975
          %v1977 = vmul.f32 %v1969, %v1808
          %v1978 = vmul.f32 %v1967, %v1970
          %v1979 = vadd.f32 %v1977, %v1978
          %v1980 = vtanh.pop %v1979
          %v1981 = vmul.f32 %v1976, %v1980
          %p1982 = scmp.gt.s32.totalorder %s656, 6
          %s1983 = scalar_select %p1982, 1, 0
          %v1984 = vstv %s1983
          %vm1985 = vcmp.eq.s32.totalorder %v1984, 1
          %v1986 = vsel %vm1985, %v1981, %v1807
          %v1987 = vsel %vm1985, %v1979, %v1808
          %s1988 = sadd.s32 28, %s735
          %s1989 = smul.addr %s1988, 8
          %s1990 = scalar_lea.vmem [#allocation4], %s1989
          %v1991 = vld [vmem:[%s1990] sm:$0xff]
          %v1992 = vld [vmem:[%s1990 + $0x8] sm:$0xff]
          %v1993 = vld [vmem:[%s1990 + $0x10] sm:$0xff]
          %v1994 = vld [vmem:[%s1990 + $0x18] sm:$0xff]
          %1995 = vmatprep.subr.mxu0 %v670
          %1996 = vmatpush1.msra.mxu0 %v669
          %1997 = vmatprep.subr.mxu0 %v674
          %1998 = vmatpush1.msra.mxu0 %v673
          %1999 = vmatprep.subr.mxu0 %v678
          %2000 = vmatpush1.msra.mxu0 %v677
          %2001 = vmatprep.subr.mxu0 %v682
          %2002 = vmatpush1.msra.mxu0 %v681
          %2003 = vmatprep.subr.mxu0 %v686
          %2004 = vmatpush1.msra.mxu0 %v685
          %2005 = vmatprep.subr.mxu0 %v690
          %2006 = vmatpush1.msra.mxu0 %v689
          %2007 = vmatprep.subr.mxu0 %v694
          %2008 = vmatpush1.msra.mxu0 %v693
          %2009 = vmatprep.subr.mxu0 %v698
          %2010 = vmatpush1.msra.mxu0 %v697
          %2011 = vmatprep.subr.mxu0 %v702
          %2012 = vmatpush1.msra.mxu0 %v701
          %2013 = vmatprep.subr.mxu0 %v706
          %2014 = vmatpush1.msra.mxu0 %v705
          %2015 = vmatprep.subr.mxu0 %v710
          %2016 = vmatpush1.msra.mxu0 %v709
          %2017 = vmatprep.subr.mxu0 %v714
          %2018 = vmatpush1.msra.mxu0 %v713
          %2019 = vmatprep.subr.mxu0 %v718
          %2020 = vmatpush1.msra.mxu0 %v717
          %2021 = vmatprep.subr.mxu0 %v722
          %2022 = vmatpush1.msra.mxu0 %v721
          %2023 = vmatprep.subr.mxu0 %v726
          %2024 = vmatpush1.msra.mxu0 %v725
          %2025 = vmatprep.subr.mxu0 %v730
          %2026 = vmatpush1.msra.mxu0 %v729
          %2027 = vmatprep.subr.mxu0 0.0
          %2028 = vmatpush1.msra.mxu0 0.0
          %2029 = vmatprep.subr.mxu0 0.0
          %2030 = vmatpush1.msra.mxu0 0.0
          %2031 = vmatprep.subr.mxu0 0.0
          %2032 = vmatpush1.msra.mxu0 0.0
          %2033 = vmatprep.subr.mxu0 0.0
          %2034 = vmatpush1.msra.mxu0 0.0
          %2035 = vmatprep.subr.mxu0 0.0
          %2036 = vmatpush1.msra.mxu0 0.0
          %2037 = vmatprep.subr.mxu0 0.0
          %2038 = vmatpush1.msra.mxu0 0.0
          %2039 = vmatprep.subr.mxu0 0.0
          %2040 = vmatpush1.msra.mxu0 0.0
          %2041 = vmatprep.subr.mxu0 0.0
          %2042 = vmatpush1.msra.mxu0 0.0
          %2043 = vmatprep.subr.mxu0 0.0
          %2044 = vmatpush1.msra.mxu0 0.0
          %2045 = vmatprep.subr.mxu0 0.0
          %2046 = vmatpush1.msra.mxu0 0.0
          %2047 = vmatprep.subr.mxu0 0.0
          %2048 = vmatpush1.msra.mxu0 0.0
          %2049 = vmatprep.subr.mxu0 0.0
          %2050 = vmatpush1.msra.mxu0 0.0
          %2051 = vmatprep.subr.mxu0 0.0
          %2052 = vmatpush1.msra.mxu0 0.0
          %2053 = vmatprep.subr.mxu0 0.0
          %2054 = vmatpush1.msra.mxu0 0.0
          %2055 = vmatprep.subr.mxu0 0.0
          %2056 = vmatpush1.msra.mxu0 0.0
          %2057 = vmatprep.subr.mxu0 0.0
          %2058 = vmatpush1.msra.mxu0 0.0
          %2059 = vmatprep.mubr.f32.mxu0 0.0
          %2060 = vmatmul.mubr.f32.gmra.mrb[0].mxu0 %v1986
          %v2061 = vpop.f32.mrb[0].mxu0
          %v2062 = vadd.f32 %v1991, %v2061
          %v2063 = vpop.f32.mrb[0].mxu0
          %v2064 = vadd.f32 %v1992, %v2063
          %2065 = vdwg.mxu0
          %2066 = vmatprep.subr.mxu0 %v672
          %2067 = vmatpush1.msra.mxu0 %v671
          %2068 = vmatprep.subr.mxu0 %v676
          %2069 = vmatpush1.msra.mxu0 %v675
          %2070 = vmatprep.subr.mxu0 %v680
          %2071 = vmatpush1.msra.mxu0 %v679
          %2072 = vmatprep.subr.mxu0 %v684
          %2073 = vmatpush1.msra.mxu0 %v683
          %2074 = vmatprep.subr.mxu0 %v688
          %2075 = vmatpush1.msra.mxu0 %v687
          %2076 = vmatprep.subr.mxu0 %v692
          %2077 = vmatpush1.msra.mxu0 %v691
          %2078 = vmatprep.subr.mxu0 %v696
          %2079 = vmatpush1.msra.mxu0 %v695
          %2080 = vmatprep.subr.mxu0 %v700
          %2081 = vmatpush1.msra.mxu0 %v699
          %2082 = vmatprep.subr.mxu0 %v704
          %2083 = vmatpush1.msra.mxu0 %v703
          %2084 = vmatprep.subr.mxu0 %v708
          %2085 = vmatpush1.msra.mxu0 %v707
          %2086 = vmatprep.subr.mxu0 %v712
          %2087 = vmatpush1.msra.mxu0 %v711
          %2088 = vmatprep.subr.mxu0 %v716
          %2089 = vmatpush1.msra.mxu0 %v715
          %2090 = vmatprep.subr.mxu0 %v720
          %2091 = vmatpush1.msra.mxu0 %v719
          %2092 = vmatprep.subr.mxu0 %v724
          %2093 = vmatpush1.msra.mxu0 %v723
          %2094 = vmatprep.subr.mxu0 %v728
          %2095 = vmatpush1.msra.mxu0 %v727
          %2096 = vmatprep.subr.mxu0 %v732
          %2097 = vmatpush1.msra.mxu0 %v731
          %2098 = vmatprep.subr.mxu0 0.0
          %2099 = vmatpush1.msra.mxu0 0.0
          %2100 = vmatprep.subr.mxu0 0.0
          %2101 = vmatpush1.msra.mxu0 0.0
          %2102 = vmatprep.subr.mxu0 0.0
          %2103 = vmatpush1.msra.mxu0 0.0
          %2104 = vmatprep.subr.mxu0 0.0
          %2105 = vmatpush1.msra.mxu0 0.0
          %2106 = vmatprep.subr.mxu0 0.0
          %2107 = vmatpush1.msra.mxu0 0.0
          %2108 = vmatprep.subr.mxu0 0.0
          %2109 = vmatpush1.msra.mxu0 0.0
          %2110 = vmatprep.subr.mxu0 0.0
          %2111 = vmatpush1.msra.mxu0 0.0
          %2112 = vmatprep.subr.mxu0 0.0
          %2113 = vmatpush1.msra.mxu0 0.0
          %2114 = vmatprep.subr.mxu0 0.0
          %2115 = vmatpush1.msra.mxu0 0.0
          %2116 = vmatprep.subr.mxu0 0.0
          %2117 = vmatpush1.msra.mxu0 0.0
          %2118 = vmatprep.subr.mxu0 0.0
          %2119 = vmatpush1.msra.mxu0 0.0
          %2120 = vmatprep.subr.mxu0 0.0
          %2121 = vmatpush1.msra.mxu0 0.0
          %2122 = vmatprep.subr.mxu0 0.0
          %2123 = vmatpush1.msra.mxu0 0.0
          %2124 = vmatprep.subr.mxu0 0.0
          %2125 = vmatpush1.msra.mxu0 0.0
          %2126 = vmatprep.subr.mxu0 0.0
          %2127 = vmatpush1.msra.mxu0 0.0
          %2128 = vmatprep.subr.mxu0 0.0
          %2129 = vmatpush1.msra.mxu0 0.0
          %2130 = vmatprep.mubr.f32.mxu0 0.0
          %2131 = vmatmul.mubr.f32.gmra.mrb[0].mxu0 %v1986
          %v2132 = vpop.f32.mrb[0].mxu0
          %v2133 = vadd.f32 %v1993, %v2132
          %v2134 = vpop.f32.mrb[0].mxu0
          %v2135 = vadd.f32 %v1994, %v2134
          %2136 = vdwg.mxu0
          %v2137 = vxor.u32 %v2062, 2147483648
          %v2138 = vxor.u32 %v2064, 2147483648
          %v2139 = vmul.f32 %v2137, 1.442695
          %v2140 = vpow.pop %v2139
          %v2141 = vmul.f32 %v2138, 1.442695
          %v2142 = vpow.pop %v2141
          %v2143 = vadd.f32 %v2140, 1.0
          %v2144 = vadd.f32 %v2142, 1.0
          %v2145 = vrcp.pop %v2143
          %v2146 = vmul.f32 1.0, %v2145
          %v2147 = vrcp.pop %v2144
          %v2148 = vmul.f32 1.0, %v2147
          %v2149 = vtanh.pop %v2133
          %v2150 = vxor.u32 %v2135, 2147483648
          %v2151 = vmul.f32 %v2150, 1.442695
          %v2152 = vpow.pop %v2151
          %v2153 = vadd.f32 %v2152, 1.0
          %v2154 = vrcp.pop %v2153
          %v2155 = vmul.f32 1.0, %v2154
          %v2156 = vmul.f32 %v2148, %v1987
          %v2157 = vmul.f32 %v2146, %v2149
          %v2158 = vadd.f32 %v2156, %v2157
          %v2159 = vtanh.pop %v2158
          %v2160 = vmul.f32 %v2155, %v2159
          %p2161 = scmp.gt.s32.totalorder %s656, 7
          %s2162 = scalar_select %p2161, 1, 0
          %v2163 = vstv %s2162
          %vm2164 = vcmp.eq.s32.totalorder %v2163, 1
          %v2165 = vsel %vm2164, %v2160, %v1986
          %v2166 = vsel %vm2164, %v2158, %v1987
          %2167 = vst [vmem:[#allocation2] sm:$0xff] %v2165
          %2168 = vst [vmem:[#allocation3] sm:$0xff] %v2166
        $region60: #{tpu_custom_call.1} parent=43 // pred_fallthru
          _
        %p2169 = scmp.eq.s32.totalorder %s25, 1
        // Predicated region
        $region61: #{tpu_custom_call.1} parent=43 // pred_check
          %p2170 = pneg %p2169
        $region62: #{tpu_custom_call.1} parent=43 // pred_check_branch
          %2172 = sbr.rel (%p2170) target = $region64
        $region63: #{tpu_custom_call.1} parent=43 // pred_region
          %v2173 = vld [vmem:[#allocation2] sm:$0xff]
          %v2174 = vld [vmem:[%s4] sm:$0x1]
          %v2176 = vlaneseq
          %v2177 = vshrl.u32 %v2176, 7
          %v2178 = vsub.s32 0, %v2177
          %v2179 = vrot.slane %v2174, %v2178
          %v2181 = vmul.f32 %v2173, %v2179
          %2182 = vadd.xlane.f32.xlu0 %v2181
          %v2183 = vpop.xlane.xlu0 %2182
          %v2184 = vld [vmem:[#allocation5] sm:$0x1]
          %v2186 = vlaneseq
          %v2187 = vshrl.u32 %v2186, 7
          %v2188 = vsub.s32 0, %v2187
          %v2189 = vrot.slane %v2184, %v2188
          %v2191 = vadd.f32 %v2183, %v2189
          %vm2192 = vcmask 7168
          %2193 = vst.msk [vmem:[%s301] sm:$0xff] %vm2192, %v2191
        $region64: #{tpu_custom_call.1} parent=43 // pred_fallthru
          _
        %p2194 = scmp.lt.s32.totalorder %s24, 0
        %s2195 = scalar_select %p2194, %s24, 0
        %s2196 = smul.addr %s2195, 8
        %s2197 = scalar_lea.vmem %s6, %s2196
        // Predicated region
        $region65: #{tpu_custom_call.1} parent=43 // pred_check
          %p2198 = pneg %p187
        $region66: #{tpu_custom_call.1} parent=43 // pred_check_branch
          %2200 = sbr.rel (%p2198) target = $region68
        $region67: #{tpu_custom_call.1} parent=43 // pred_region
          _
        $region68: #{tpu_custom_call.1} parent=43 // pred_fallthru
          _
        // Predicated region
        $region69: #{tpu_custom_call.1} parent=43 // pred_check
          %p2201 = pneg %p187
        $region70: #{tpu_custom_call.1} parent=43 // pred_check_branch
          %2203 = sbr.rel (%p2201) target = $region72
        $region71: #{tpu_custom_call.1} parent=43 // pred_region
          %p2204 = scmp.lt.s32.totalorder %s24, 0
          %s2205 = scalar_select %p2204, %s24, 0
          %s2206 = smul.addr %s2205, 8
          %s2207 = scalar_lea.vmem %s6, %s2206
        $region72: #{tpu_custom_call.1} parent=43 // pred_fallthru
          _
      $region44: #{tpu_custom_call.1} parent=5 // pred_fallthru
        _
      %p2208 = scmp.le.s32.totalorder 2, %s15
      // Predicated region
      $region73: #{tpu_custom_call.1} parent=5 // pred_check
        %p2209 = pneg %p2208
      $region74: #{tpu_custom_call.1} parent=5 // pred_check_branch
        %2211 = sbr.rel (%p2209) target = $region76
      $region75: #{tpu_custom_call.1} parent=5 // pred_region
        %s2212 = ssub.s32 %s15, 2
      $region76: #{tpu_custom_call.1} parent=5 // pred_fallthru
        _
    $region6: #{tpu_custom_call.1} parent=1 // loop_footer
      %s19 = sadd.s32 1, %s15
    $region7: #{tpu_custom_call.1} parent=1 // loop_footer_branch
      %14 = sbr.rel target = $region3
    $region8: #{tpu_custom_call.1} parent=1 // loop_exit
      _
    %2213 = vsyncpa [#allocation7], 1
    %s2214 = scalar_lea.sflag [#allocation7], 1
    %2215 = vsyncpa %s2214, 1

// kernel: tpu_custom_call.1
$region0: #{tpu_custom_call.1}
  #allocation0 [shape = 'u32[]', space=smem, size = 0x4, offset = 0x4, fixed_abs, tag = 'smem constant byte address 0x4 - core index']
  #allocation1 [shape = 'u32[144,128]{1,0:T(1,128)}', space=vmem, size = 0x12000, scoped, tag = 'internal scratch']
  #allocation2 [shape = 'f32[8,128]{1,0:T(8,128)}', space=vmem, size = 0x1000, scoped, tag = 'scratch operand']
  #allocation3 [shape = 'f32[8,128]{1,0:T(8,128)}', space=vmem, size = 0x1000, scoped, tag = 'scratch operand']
  #allocation4 [shape = 'f32[2,8,8,512]{3,2,1,0:T(8,128)}', space=vmem, size = 0x40000, scoped, tag = 'scratch operand']
  #allocation5 [shape = 'f32[1,1]{1,0:T(1,128)S(1)}', space=vmem, size = 0x200, scoped, tag = 'scoped memory for tpu_custom_call.1']
  %s0 = inlined_call_operand.vmem [shape: f32[64,16], index: 0, kind: input, shape index: {}]
  %s1 = inlined_call_operand.vmem [shape: f32[16,512], index: 1, kind: input, shape index: {}]
  %s2 = inlined_call_operand.hbm [shape: f32[128,512], index: 2, kind: input, shape index: {}]
  %s3 = inlined_call_operand.vmem [shape: f32[1,512], index: 3, kind: input, shape index: {}]
  %s4 = inlined_call_operand.vmem [shape: f32[1,128], index: 4, kind: input, shape index: {}]
  %s5 = inlined_call_operand.<no memory space> [shape: f32[1,1], index: 5, kind: input, shape index: {}]
  %s6 = inlined_call_operand.vmem [shape: f32[8,1], index: 6, kind: output, shape index: {}]
  %s7 = sld [smem:[#allocation0]]
  $region77: #{tpu_custom_call.1} parent=0
    _
  %s9 = ssub.s32 1, %s7
  %s10 = scalar_select 0, %s9, %s7
  %v11 = vstv %s5
  %12 = vst [vmem:[#allocation5] sm:$0x1] %v11
  $region1: #{tpu_custom_call.1} parent=0
    #allocation6 [shape = 'u8[262144]{0}', space=vmem, size = 0x40000, scoped, tag = 'input window, operand 2, single buffered']
    #allocation7 [shape = 's32[2]{0}', space=sflag, size = 0x8, scoped, tag = 'scoped memory for tpu_custom_call.1']
    %13 = vsyncpa [#allocation7], 0
    loop: start=0, step=1, limit=4
    $region2: #{tpu_custom_call.1} parent=1 // loop_pre_header
      _
    $region3: #{tpu_custom_call.1} parent=1 // loop_header
      %s15 = sphi 0, %s19
      %p16 = scmp.ge.s32.totalorder %s15, 4
      %s22 = sphi 0, %s34
      %s23 = sphi 0, %s30
      %s24 = sphi 0, %s22
      %s25 = sphi 0, %s23
      %s26 = sphi 0, %s24
      %s27 = sphi 0, %s25
      %s43 = sphi 0, %s45
      %s46 = sphi 0, %s43
      %s47 = sphi 0, %s46
      %s63 = sphi 0, %s47
      %s67 = sphi 0, %s67
      %s69 = sphi 0, %s67
      %s70 = sphi 0, %s69
      %s84 = sphi 0, %s70
      %s88 = sphi 0, %s88
      %s90 = sphi 0, %s88
      %s91 = sphi 0, %s90
      %s105 = sphi 0, %s91
      %s109 = sphi 0, %s109
      %s111 = sphi 0, %s109
      %s112 = sphi 0, %s111
      %s126 = sphi 0, %s112
      %s130 = sphi 0, %s130
      %s132 = sphi 0, %s130
      %s133 = sphi 0, %s132
      %s147 = sphi 0, %s133
      %s151 = sphi 0, %s151
      %s153 = sphi 0, %s151
      %s154 = sphi 0, %s153
      %s168 = sphi 0, %s154
      %s174 = sphi 0, %s176
      %s177 = sphi 0, %s174
      %s178 = sphi 0, %s177
      %s194 = sphi 0, %s178
    $region4: #{tpu_custom_call.1} parent=1 // loop_header_branch
      %18 = sbr.rel (%p16) target = $region8
    $region5: #{tpu_custom_call.1} parent=1 // loop_body
      %s20 = ssub.s32 %s15, 1
      %s21 = ssub.s32 %s15, 2
      %s28 = sadd.s32 1, %s23
      %p29 = scmp.ge.s32.totalorder %s28, 2
      %s30 = scalar_select %p29, 0, %s28
      %s31 = sadd.s32 1, %s22
      %s32 = scalar_select %p29, %s31, %s22
      %p33 = scmp.ge.s32.totalorder %s32, 1
      %s34 = scalar_select %p33, 0, %s32
      %p35 = scmp.lt.s32.totalorder %s23, 0
      %s36 = scalar_select %p35, %s23, 0
      %s37 = sadd.s32 %s22, %s36
      %p38 = scmp.lt.s32.totalorder %s30, 0
      %s39 = scalar_select %p38, %s30, 0
      %s40 = sadd.s32 %s34, %s39
      %s41 = ssub.s32 %s37, %s40
      %p42 = scmp.eq.s32.totalorder %s41, 0
      %s44 = sadd.s32 %s43, 1
      %s45 = scalar_select %p42, %s43, %s44
      %p48 = pneg %p42
      %p49 = scmp.eq.s32.totalorder %s15, 1
      %p50 = por %p48, %p49
      %p51 = scmp.ne.s32.totalorder %s43, %s46
      %p52 = scmp.eq.s32.totalorder %s15, 0
      %p53 = por %p51, %p52
      %p54 = scmp.ne.s32.totalorder %s43, %s46
      %p55 = scmp.eq.s32.totalorder %s20, 1
      %p56 = por %p54, %p55
      %p57 = scmp.ne.s32.totalorder %s46, %s47
      %p58 = scmp.eq.s32.totalorder %s20, 0
      %p59 = por %p57, %p58
      %p60 = scmp.ne.s32.totalorder %s46, %s47
      %p61 = scmp.eq.s32.totalorder %s21, 1
      %p62 = por %p60, %p61
      %p64 = scmp.ne.s32.totalorder %s47, %s63
      %p65 = scmp.eq.s32.totalorder %s21, 0
      %p66 = por %p64, %p65
      %s68 = sadd.s32 %s67, 1
      %p71 = scmp.eq.s32.totalorder %s15, 1
      %p72 = scmp.ne.s32.totalorder %s67, %s69
      %p73 = scmp.eq.s32.totalorder %s15, 0
      %p74 = por %p72, %p73
      %p75 = scmp.ne.s32.totalorder %s67, %s69
      %p76 = scmp.eq.s32.totalorder %s20, 1
      %p77 = por %p75, %p76
      %p78 = scmp.ne.s32.totalorder %s69, %s70
      %p79 = scmp.eq.s32.totalorder %s20, 0
      %p80 = por %p78, %p79
      %p81 = scmp.ne.s32.totalorder %s69, %s70
      %p82 = scmp.eq.s32.totalorder %s21, 1
      %p83 = por %p81, %p82
      %p85 = scmp.ne.s32.totalorder %s70, %s84
      %p86 = scmp.eq.s32.totalorder %s21, 0
      %p87 = por %p85, %p86
      %s89 = sadd.s32 %s88, 1
      %p92 = scmp.eq.s32.totalorder %s15, 1
      %p93 = scmp.ne.s32.totalorder %s88, %s90
      %p94 = scmp.eq.s32.totalorder %s15, 0
      %p95 = por %p93, %p94
      %p96 = scmp.ne.s32.totalorder %s88, %s90
      %p97 = scmp.eq.s32.totalorder %s20, 1
      %p98 = por %p96, %p97
      %p99 = scmp.ne.s32.totalorder %s90, %s91
      %p100 = scmp.eq.s32.totalorder %s20, 0
      %p101 = por %p99, %p100
      %p102 = scmp.ne.s32.totalorder %s90, %s91
      %p103 = scmp.eq.s32.totalorder %s21, 1
      %p104 = por %p102, %p103
      %p106 = scmp.ne.s32.totalorder %s91, %s105
      %p107 = scmp.eq.s32.totalorder %s21, 0
      %p108 = por %p106, %p107
      %s110 = sadd.s32 %s109, 1
      %p113 = scmp.eq.s32.totalorder %s15, 1
      %p114 = scmp.ne.s32.totalorder %s109, %s111
      %p115 = scmp.eq.s32.totalorder %s15, 0
      %p116 = por %p114, %p115
      %p117 = scmp.ne.s32.totalorder %s109, %s111
      %p118 = scmp.eq.s32.totalorder %s20, 1
      %p119 = por %p117, %p118
      %p120 = scmp.ne.s32.totalorder %s111, %s112
      %p121 = scmp.eq.s32.totalorder %s20, 0
      %p122 = por %p120, %p121
      %p123 = scmp.ne.s32.totalorder %s111, %s112
      %p124 = scmp.eq.s32.totalorder %s21, 1
      %p125 = por %p123, %p124
      %p127 = scmp.ne.s32.totalorder %s112, %s126
      %p128 = scmp.eq.s32.totalorder %s21, 0
      %p129 = por %p127, %p128
      %s131 = sadd.s32 %s130, 1
      %p134 = scmp.eq.s32.totalorder %s15, 1
      %p135 = scmp.ne.s32.totalorder %s130, %s132
      %p136 = scmp.eq.s32.totalorder %s15, 0
      %p137 = por %p135, %p136
      %p138 = scmp.ne.s32.totalorder %s130, %s132
      %p139 = scmp.eq.s32.totalorder %s20, 1
      %p140 = por %p138, %p139
      %p141 = scmp.ne.s32.totalorder %s132, %s133
      %p142 = scmp.eq.s32.totalorder %s20, 0
      %p143 = por %p141, %p142
      %p144 = scmp.ne.s32.totalorder %s132, %s133
      %p145 = scmp.eq.s32.totalorder %s21, 1
      %p146 = por %p144, %p145
      %p148 = scmp.ne.s32.totalorder %s133, %s147
      %p149 = scmp.eq.s32.totalorder %s21, 0
      %p150 = por %p148, %p149
      %s152 = sadd.s32 %s151, 1
      %p155 = scmp.eq.s32.totalorder %s15, 1
      %p156 = scmp.ne.s32.totalorder %s151, %s153
      %p157 = scmp.eq.s32.totalorder %s15, 0
      %p158 = por %p156, %p157
      %p159 = scmp.ne.s32.totalorder %s151, %s153
      %p160 = scmp.eq.s32.totalorder %s20, 1
      %p161 = por %p159, %p160
      %p162 = scmp.ne.s32.totalorder %s153, %s154
      %p163 = scmp.eq.s32.totalorder %s20, 0
      %p164 = por %p162, %p163
      %p165 = scmp.ne.s32.totalorder %s153, %s154
      %p166 = scmp.eq.s32.totalorder %s21, 1
      %p167 = por %p165, %p166
      %p169 = scmp.ne.s32.totalorder %s154, %s168
      %p170 = scmp.eq.s32.totalorder %s21, 0
      %p171 = por %p169, %p170
      %s172 = ssub.s32 %s22, %s34
      %p173 = scmp.eq.s32.totalorder %s172, 0
      %s175 = sadd.s32 %s174, 1
      %s176 = scalar_select %p173, %s174, %s175
      %p179 = pneg %p173
      %p180 = scmp.eq.s32.totalorder %s15, 1
      %p181 = por %p179, %p180
      %p182 = scmp.ne.s32.totalorder %s174, %s177
      %p183 = scmp.eq.s32.totalorder %s15, 0
      %p184 = por %p182, %p183
      %p185 = scmp.ne.s32.totalorder %s174, %s177
      %p186 = scmp.eq.s32.totalorder %s20, 1
      %p187 = por %p185, %p186
      %p188 = scmp.ne.s32.totalorder %s177, %s178
      %p189 = scmp.eq.s32.totalorder %s20, 0
      %p190 = por %p188, %p189
      %p191 = scmp.ne.s32.totalorder %s177, %s178
      %p192 = scmp.eq.s32.totalorder %s21, 1
      %p193 = por %p191, %p192
      %p195 = scmp.ne.s32.totalorder %s178, %s194
      %p196 = scmp.eq.s32.totalorder %s21, 0
      %p197 = por %p195, %p196
      %p198 = scmp.le.s32.totalorder 1, %s15
      %p199 = scmp.lt.s32.totalorder %s15, 3
      %p200 = pnand %p198, %p199
      %p201 = pneg %p200
      // Predicated region
      $region9: #{tpu_custom_call.1} parent=5 // pred_check
        _
      $region10: #{tpu_custom_call.1} parent=5 // pred_check_branch
        %203 = sbr.rel (%p200) target = $region12
      $region11: #{tpu_custom_call.1} parent=5 // pred_region
        %s204 = ssub.s32 %s15, 1
        // Predicated region
        $region13: #{tpu_custom_call.1} parent=11 // pred_check
          %p205 = pneg %p80
        $region14: #{tpu_custom_call.1} parent=11 // pred_check_branch
          %207 = sbr.rel (%p205) target = $region16
        $region15: #{tpu_custom_call.1} parent=11 // pred_region
          _
        $region16: #{tpu_custom_call.1} parent=11 // pred_fallthru
          _
        // Predicated region
        $region17: #{tpu_custom_call.1} parent=11 // pred_check
          %p208 = pneg %p101
        $region18: #{tpu_custom_call.1} parent=11 // pred_check_branch
          %210 = sbr.rel (%p208) target = $region20
        $region19: #{tpu_custom_call.1} parent=11 // pred_region
          %s212 = ssub.s32 8192, 8192
          %213 = vsyncadd [#allocation7], %s212
          %s214 = sshll.u32 [#allocation6], 4
          %s215 = int_to_ptr.vmem [resolvable:$true] %s214
          %220 = dma.hbm_to_vmem [thread:$0]  %s2, 8192, %s215, [#allocation7], 512, 512, 32
        $region20: #{tpu_custom_call.1} parent=11 // pred_fallthru
          _
        // Predicated region
        $region21: #{tpu_custom_call.1} parent=11 // pred_check
          %p221 = pneg %p122
        $region22: #{tpu_custom_call.1} parent=11 // pred_check_branch
          %223 = sbr.rel (%p221) target = $region24
        $region23: #{tpu_custom_call.1} parent=11 // pred_region
          _
        $region24: #{tpu_custom_call.1} parent=11 // pred_fallthru
          _
        // Predicated region
        $region25: #{tpu_custom_call.1} parent=11 // pred_check
          %p224 = pneg %p143
        $region26: #{tpu_custom_call.1} parent=11 // pred_check_branch
          %226 = sbr.rel (%p224) target = $region28
        $region27: #{tpu_custom_call.1} parent=11 // pred_region
          _
        $region28: #{tpu_custom_call.1} parent=11 // pred_fallthru
          _
        // Predicated region
        $region29: #{tpu_custom_call.1} parent=11 // pred_check
          %p227 = pneg %p164
        $region30: #{tpu_custom_call.1} parent=11 // pred_check_branch
          %229 = sbr.rel (%p227) target = $region32
        $region31: #{tpu_custom_call.1} parent=11 // pred_region
          _
        $region32: #{tpu_custom_call.1} parent=11 // pred_fallthru
          _
      $region12: #{tpu_custom_call.1} parent=5 // pred_fallthru
        _
      %p230 = scmp.lt.s32.totalorder %s15, 2
      // Predicated region
      $region33: #{tpu_custom_call.1} parent=5 // pred_check
        %p231 = pneg %p230
      $region34: #{tpu_custom_call.1} parent=5 // pred_check_branch
        %233 = sbr.rel (%p231) target = $region36
      $region35: #{tpu_custom_call.1} parent=5 // pred_region
        // Predicated region
        $region37: #{tpu_custom_call.1} parent=35 // pred_check
          %p234 = pneg %p53
        $region38: #{tpu_custom_call.1} parent=35 // pred_check_branch
          %236 = sbr.rel (%p234) target = $region40
        $region39: #{tpu_custom_call.1} parent=35 // pred_region
          %p237 = scmp.lt.s32.totalorder %s23, 0
          %s238 = scalar_select %p237, %s23, 0
          %s239 = sadd.s32 %s22, %s238
          %s240 = smul.u32 8, %s239
          %p241 = scmp.lt.s32.totalorder %s240, 7
          %s242 = scalar_select %p241, %s240, 7
          %s243 = smul.addr %s242, 8
          %s244 = scalar_lea.vmem %s0, %s243
          %p245 = scmp.lt.s32.totalorder %s23, 0
          %s246 = scalar_select %p245, %s23, 0
          %s247 = sadd.s32 %s22, %s246
          %s248 = smul.u32 8, %s247
        $region40: #{tpu_custom_call.1} parent=35 // pred_fallthru
          _
      $region36: #{tpu_custom_call.1} parent=5 // pred_fallthru
        _
      %p249 = scmp.le.s32.totalorder 1, %s15
      %p250 = scmp.lt.s32.totalorder %s15, 3
      %p251 = pnand %p249, %p250
      %p252 = pneg %p251
      // Predicated region
      $region41: #{tpu_custom_call.1} parent=5 // pred_check
        _
      $region42: #{tpu_custom_call.1} parent=5 // pred_check_branch
        %254 = sbr.rel (%p251) target = $region44
      $region43: #{tpu_custom_call.1} parent=5 // pred_region
        %s255 = ssub.s32 %s15, 1
        // Predicated region
        $region45: #{tpu_custom_call.1} parent=43 // pred_check
          %p256 = pneg %p101
        $region46: #{tpu_custom_call.1} parent=43 // pred_check_branch
          %258 = sbr.rel (%p256) target = $region48
        $region47: #{tpu_custom_call.1} parent=43 // pred_region
          %259 = dma.done [#allocation7], 8192
        $region48: #{tpu_custom_call.1} parent=43 // pred_fallthru
          _
        %p260 = scmp.lt.s32.totalorder %s25, 0
        %s261 = scalar_select %p260, %s25, 0
        %s262 = sadd.s32 %s24, %s261
        %s263 = smul.u32 8, %s262
        %p264 = scmp.lt.s32.totalorder %s263, 7
        %s265 = scalar_select %p264, %s263, 7
        %s266 = smul.addr %s265, 8
        %s267 = scalar_lea.vmem %s0, %s266
        %p268 = pneg %p59
        %p269 = pneg %p56
        %p270 = pneg %p80
        %p271 = pneg %p77
        %p272 = pneg %p101
        %p273 = pneg %p98
        %p274 = pneg %p122
        %p275 = pneg %p119
        %p276 = pneg %p143
        %p277 = pneg %p140
        %p278 = pneg %p164
        %p279 = pneg %p161
        %p280 = pneg %p190
        %p281 = pneg %p187
        %p282 = scmp.lt.s32.totalorder %s24, 0
        %s283 = scalar_select %p282, %s24, 0
        %s284 = smul.addr %s283, 8
        %s285 = scalar_lea.vmem %s6, %s284
        %p286 = scmp.lt.s32.totalorder %s25, 0
        %s287 = scalar_select %p286, %s25, 0
        %s288 = sadd.s32 %s24, %s287
        %s289 = smul.u32 8, %s288
        %p290 = scmp.lt.s32.totalorder %s289, 7
        %s291 = scalar_select %p290, %s289, 7
        %s292 = smul.addr %s291, 8
        %s293 = scalar_lea.vmem %s0, %s292
        %p294 = scmp.lt.s32.totalorder %s25, 0
        %s295 = scalar_select %p294, %s25, 0
        %s296 = sadd.s32 %s24, %s295
        %s297 = smul.u32 8, %s296
        %p298 = scmp.lt.s32.totalorder %s24, 0
        %s299 = scalar_select %p298, %s24, 0
        %s300 = smul.addr %s299, 8
        %s301 = scalar_lea.vmem %s6, %s300
        %p302 = scmp.eq.s32.totalorder %s25, 0
        // Predicated region
        $region49: #{tpu_custom_call.1} parent=43 // pred_check
          %p303 = pneg %p302
        $region50: #{tpu_custom_call.1} parent=43 // pred_check_branch
          %305 = sbr.rel (%p303) target = $region52
        $region51: #{tpu_custom_call.1} parent=43 // pred_region
          %306 = vst [vmem:[#allocation2] sm:$0xff] 0.0
          %307 = vst [vmem:[#allocation3] sm:$0xff] 0.0
        $region52: #{tpu_custom_call.1} parent=43 // pred_fallthru
          _
        %p308 = scmp.lt.s32.totalorder %s25, 1
        // Predicated region
        $region53: #{tpu_custom_call.1} parent=43 // pred_check
          %p309 = pneg %p308
        $region54: #{tpu_custom_call.1} parent=43 // pred_check_branch
          %311 = sbr.rel (%p309) target = $region56
        $region55: #{tpu_custom_call.1} parent=43 // pred_region
          %v312 = vld [vmem:[%s293] sm:$0xff]
          %v313 = vld [vmem:[%s293 + $0x8] sm:$0xff]
          %v314 = vld [vmem:[%s293 + $0x10] sm:$0xff]
          %v315 = vld [vmem:[%s293 + $0x18] sm:$0xff]
          %v316 = vld [vmem:[%s293 + $0x20] sm:$0xff]
          %v317 = vld [vmem:[%s293 + $0x28] sm:$0xff]
          %v318 = vld [vmem:[%s293 + $0x30] sm:$0xff]
          %v319 = vld [vmem:[%s293 + $0x38] sm:$0xff]
          %v320 = vld [vmem:[%s1] sm:$0xff]
          %v321 = vld [vmem:[%s1 + $0x8] sm:$0xff]
          %v322 = vld [vmem:[%s1 + $0x10] sm:$0xff]
          %v323 = vld [vmem:[%s1 + $0x18] sm:$0xff]
          %v324 = vld [vmem:[%s1 + $0x20] sm:$0xff]
          %v325 = vld [vmem:[%s1 + $0x28] sm:$0xff]
          %v326 = vld [vmem:[%s1 + $0x30] sm:$0xff]
          %v327 = vld [vmem:[%s1 + $0x38] sm:$0xff]
          %v328 = vld [vmem:[%s3] sm:$0xf]
          %v330 = vlaneseq
          %v331 = vshrl.u32 %v330, 7
          %v332 = vsub.s32 0, %v331
          %v333 = vrot.slane %v328, %v332
          %v334 = vlaneseq
          %v335 = vshrl.u32 %v334, 7
          %v336 = vsub.s32 1, %v335
          %v337 = vrot.slane %v328, %v336
          %v338 = vlaneseq
          %v339 = vshrl.u32 %v338, 7
          %v340 = vsub.s32 2, %v339
          %v341 = vrot.slane %v328, %v340
          %v342 = vlaneseq
          %v343 = vshrl.u32 %v342, 7
          %v344 = vsub.s32 3, %v343
          %v345 = vrot.slane %v328, %v344
          %vm350 = vcmask 130048
          %v352 = vsel %vm350, %v312, 0
          %v355 = vsel %vm350, %v313, 0
          %v358 = vsel %vm350, %v314, 0
          %v361 = vsel %vm350, %v315, 0
          %v364 = vsel %vm350, %v316, 0
          %v367 = vsel %vm350, %v317, 0
          %v370 = vsel %vm350, %v318, 0
          %v373 = vsel %vm350, %v319, 0
          %375 = vmatprep.subr.mxu0 %v321
          %376 = vmatpush1.msra.mxu0 %v320
          %377 = vmatprep.subr.mxu0 %v325
          %378 = vmatpush1.msra.mxu0 %v324
          %379 = vmatprep.subr.mxu0 0.0
          %380 = vmatpush1.msra.mxu0 0.0
          %381 = vmatprep.subr.mxu0 0.0
          %382 = vmatpush1.msra.mxu0 0.0
          %383 = vmatprep.subr.mxu0 0.0
          %384 = vmatpush1.msra.mxu0 0.0
          %385 = vmatprep.subr.mxu0 0.0
          %386 = vmatpush1.msra.mxu0 0.0
          %387 = vmatprep.subr.mxu0 0.0
          %388 = vmatpush1.msra.mxu0 0.0
          %389 = vmatprep.subr.mxu0 0.0
          %390 = vmatpush1.msra.mxu0 0.0
          %391 = vmatprep.subr.mxu0 0.0
          %392 = vmatpush1.msra.mxu0 0.0
          %393 = vmatprep.subr.mxu0 0.0
          %394 = vmatpush1.msra.mxu0 0.0
          %395 = vmatprep.subr.mxu0 0.0
          %396 = vmatpush1.msra.mxu0 0.0
          %397 = vmatprep.subr.mxu0 0.0
          %398 = vmatpush1.msra.mxu0 0.0
          %399 = vmatprep.subr.mxu0 0.0
          %400 = vmatpush1.msra.mxu0 0.0
          %401 = vmatprep.subr.mxu0 0.0
          %402 = vmatpush1.msra.mxu0 0.0
          %403 = vmatprep.subr.mxu0 0.0
          %404 = vmatpush1.msra.mxu0 0.0
          %405 = vmatprep.subr.mxu0 0.0
          %406 = vmatpush1.msra.mxu0 0.0
          %407 = vmatprep.subr.mxu0 0.0
          %408 = vmatpush1.msra.mxu0 0.0
          %409 = vmatprep.subr.mxu0 0.0
          %410 = vmatpush1.msra.mxu0 0.0
          %411 = vmatprep.subr.mxu0 0.0
          %412 = vmatpush1.msra.mxu0 0.0
          %413 = vmatprep.subr.mxu0 0.0
          %414 = vmatpush1.msra.mxu0 0.0
          %415 = vmatprep.subr.mxu0 0.0
          %416 = vmatpush1.msra.mxu0 0.0
          %417 = vmatprep.subr.mxu0 0.0
          %418 = vmatpush1.msra.mxu0 0.0
          %419 = vmatprep.subr.mxu0 0.0
          %420 = vmatpush1.msra.mxu0 0.0
          %421 = vmatprep.subr.mxu0 0.0
          %422 = vmatpush1.msra.mxu0 0.0
          %423 = vmatprep.subr.mxu0 0.0
          %424 = vmatpush1.msra.mxu0 0.0
          %425 = vmatprep.subr.mxu0 0.0
          %426 = vmatpush1.msra.mxu0 0.0
          %427 = vmatprep.subr.mxu0 0.0
          %428 = vmatpush1.msra.mxu0 0.0
          %429 = vmatprep.subr.mxu0 0.0
          %430 = vmatpush1.msra.mxu0 0.0
          %431 = vmatprep.subr.mxu0 0.0
          %432 = vmatpush1.msra.mxu0 0.0
          %433 = vmatprep.subr.mxu0 0.0
          %434 = vmatpush1.msra.mxu0 0.0
          %435 = vmatprep.subr.mxu0 0.0
          %436 = vmatpush1.msra.mxu0 0.0
          %437 = vmatprep.subr.mxu0 0.0
          %438 = vmatpush1.msra.mxu0 0.0
          %439 = vmatprep.mubr.f32.mxu0 0.0
          %440 = vmatmul.mubr.f32.gmra.mrb[0].mxu0 %v352
          %v441 = vpop.f32.mrb[0].mxu0
          %v442 = vadd.f32 %v333, %v441
          %v443 = vpop.f32.mrb[0].mxu0
          %v444 = vadd.f32 %v337, %v443
          %445 = vmatprep.mubr.f32.mxu0 0.0
          %446 = vmatmul.mubr.f32.gmra.mrb[0].mxu0 %v355
          %v447 = vpop.f32.mrb[0].mxu0
          %v448 = vadd.f32 %v333, %v447
          %v449 = vpop.f32.mrb[0].mxu0
          %v450 = vadd.f32 %v337, %v449
          %451 = vmatprep.mubr.f32.mxu0 0.0
          %452 = vmatmul.mubr.f32.gmra.mrb[0].mxu0 %v358
          %v453 = vpop.f32.mrb[0].mxu0
          %v454 = vadd.f32 %v333, %v453
          %v455 = vpop.f32.mrb[0].mxu0
          %v456 = vadd.f32 %v337, %v455
          %457 = vmatprep.mubr.f32.mxu0 0.0
          %458 = vmatmul.mubr.f32.gmra.mrb[0].mxu0 %v361
          %v459 = vpop.f32.mrb[0].mxu0
          %v460 = vadd.f32 %v333, %v459
          %v461 = vpop.f32.mrb[0].mxu0
          %v462 = vadd.f32 %v337, %v461
          %463 = vmatprep.mubr.f32.mxu0 0.0
          %464 = vmatmul.mubr.f32.gmra.mrb[0].mxu0 %v364
          %v465 = vpop.f32.mrb[0].mxu0
          %v466 = vadd.f32 %v333, %v465
          %v467 = vpop.f32.mrb[0].mxu0
          %v468 = vadd.f32 %v337, %v467
          %469 = vmatprep.mubr.f32.mxu0 0.0
          %470 = vmatmul.mubr.f32.gmra.mrb[0].mxu0 %v367
          %v471 = vpop.f32.mrb[0].mxu0
          %v472 = vadd.f32 %v333, %v471
          %v473 = vpop.f32.mrb[0].mxu0
          %v474 = vadd.f32 %v337, %v473
          %475 = vmatprep.mubr.f32.mxu0 0.0
          %476 = vmatmul.mubr.f32.gmra.mrb[0].mxu0 %v370
          %v477 = vpop.f32.mrb[0].mxu0
          %v478 = vadd.f32 %v333, %v477
          %v479 = vpop.f32.mrb[0].mxu0
          %v480 = vadd.f32 %v337, %v479
          %481 = vmatprep.mubr.f32.mxu0 0.0
          %482 = vmatmul.mubr.f32.gmra.mrb[0].mxu0 %v373
          %v483 = vpop.f32.mrb[0].mxu0
          %v484 = vadd.f32 %v333, %v483
          %v485 = vpop.f32.mrb[0].mxu0
          %v486 = vadd.f32 %v337, %v485
          %487 = vdwg.mxu0
          %488 = vmatprep.subr.mxu0 %v323
          %489 = vmatpush1.msra.mxu0 %v322
          %490 = vmatprep.subr.mxu0 %v327
          %491 = vmatpush1.msra.mxu0 %v326
          %492 = vmatprep.subr.mxu0 0.0
          %493 = vmatpush1.msra.mxu0 0.0
          %494 = vmatprep.subr.mxu0 0.0
          %495 = vmatpush1.msra.mxu0 0.0
          %496 = vmatprep.subr.mxu0 0.0
          %497 = vmatpush1.msra.mxu0 0.0
          %498 = vmatprep.subr.mxu0 0.0
          %499 = vmatpush1.msra.mxu0 0.0
          %500 = vmatprep.subr.mxu0 0.0
          %501 = vmatpush1.msra.mxu0 0.0
          %502 = vmatprep.subr.mxu0 0.0
          %503 = vmatpush1.msra.mxu0 0.0
          %504 = vmatprep.subr.mxu0 0.0
          %505 = vmatpush1.msra.mxu0 0.0
          %506 = vmatprep.subr.mxu0 0.0
          %507 = vmatpush1.msra.mxu0 0.0
          %508 = vmatprep.subr.mxu0 0.0
          %509 = vmatpush1.msra.mxu0 0.0
          %510 = vmatprep.subr.mxu0 0.0
          %511 = vmatpush1.msra.mxu0 0.0
          %512 = vmatprep.subr.mxu0 0.0
          %513 = vmatpush1.msra.mxu0 0.0
          %514 = vmatprep.subr.mxu0 0.0
          %515 = vmatpush1.msra.mxu0 0.0
          %516 = vmatprep.subr.mxu0 0.0
          %517 = vmatpush1.msra.mxu0 0.0
          %518 = vmatprep.subr.mxu0 0.0
          %519 = vmatpush1.msra.mxu0 0.0
          %520 = vmatprep.subr.mxu0 0.0
          %521 = vmatpush1.msra.mxu0 0.0
          %522 = vmatprep.subr.mxu0 0.0
          %523 = vmatpush1.msra.mxu0 0.0
          %524 = vmatprep.subr.mxu0 0.0
          %525 = vmatpush1.msra.mxu0 0.0
          %526 = vmatprep.subr.mxu0 0.0
          %527 = vmatpush1.msra.mxu0 0.0
          %528 = vmatprep.subr.mxu0 0.0
          %529 = vmatpush1.msra.mxu0 0.0
          %530 = vmatprep.subr.mxu0 0.0
          %531 = vmatpush1.msra.mxu0 0.0
          %532 = vmatprep.subr.mxu0 0.0
          %533 = vmatpush1.msra.mxu0 0.0
          %534 = vmatprep.subr.mxu0 0.0
          %535 = vmatpush1.msra.mxu0 0.0
          %536 = vmatprep.subr.mxu0 0.0
          %537 = vmatpush1.msra.mxu0 0.0
          %538 = vmatprep.subr.mxu0 0.0
          %539 = vmatpush1.msra.mxu0 0.0
          %540 = vmatprep.subr.mxu0 0.0
          %541 = vmatpush1.msra.mxu0 0.0
          %542 = vmatprep.subr.mxu0 0.0
          %543 = vmatpush1.msra.mxu0 0.0
          %544 = vmatprep.subr.mxu0 0.0
          %545 = vmatpush1.msra.mxu0 0.0
          %546 = vmatprep.subr.mxu0 0.0
          %547 = vmatpush1.msra.mxu0 0.0
          %548 = vmatprep.subr.mxu0 0.0
          %549 = vmatpush1.msra.mxu0 0.0
          %550 = vmatprep.subr.mxu0 0.0
          %551 = vmatpush1.msra.mxu0 0.0
          %552 = vmatprep.mubr.f32.mxu0 0.0
          %553 = vmatmul.mubr.f32.gmra.mrb[0].mxu0 %v352
          %v554 = vpop.f32.mrb[0].mxu0
          %v555 = vadd.f32 %v341, %v554
          %v556 = vpop.f32.mrb[0].mxu0
          %v557 = vadd.f32 %v345, %v556
          %558 = vmatprep.mubr.f32.mxu0 0.0
          %559 = vmatmul.mubr.f32.gmra.mrb[0].mxu0 %v355
          %v560 = vpop.f32.mrb[0].mxu0
          %v561 = vadd.f32 %v341, %v560
          %v562 = vpop.f32.mrb[0].mxu0
          %v563 = vadd.f32 %v345, %v562
          %564 = vmatprep.mubr.f32.mxu0 0.0
          %565 = vmatmul.mubr.f32.gmra.mrb[0].mxu0 %v358
          %v566 = vpop.f32.mrb[0].mxu0
          %v567 = vadd.f32 %v341, %v566
          %v568 = vpop.f32.mrb[0].mxu0
          %v569 = vadd.f32 %v345, %v568
          %570 = vmatprep.mubr.f32.mxu0 0.0
          %571 = vmatmul.mubr.f32.gmra.mrb[0].mxu0 %v361
          %v572 = vpop.f32.mrb[0].mxu0
          %v573 = vadd.f32 %v341, %v572
          %v574 = vpop.f32.mrb[0].mxu0
          %v575 = vadd.f32 %v345, %v574
          %576 = vmatprep.mubr.f32.mxu0 0.0
          %577 = vmatmul.mubr.f32.gmra.mrb[0].mxu0 %v364
          %v578 = vpop.f32.mrb[0].mxu0
          %v579 = vadd.f32 %v341, %v578
          %v580 = vpop.f32.mrb[0].mxu0
          %v581 = vadd.f32 %v345, %v580
          %582 = vmatprep.mubr.f32.mxu0 0.0
          %583 = vmatmul.mubr.f32.gmra.mrb[0].mxu0 %v367
          %v584 = vpop.f32.mrb[0].mxu0
          %v585 = vadd.f32 %v341, %v584
          %v586 = vpop.f32.mrb[0].mxu0
          %v587 = vadd.f32 %v345, %v586
          %588 = vmatprep.mubr.f32.mxu0 0.0
          %589 = vmatmul.mubr.f32.gmra.mrb[0].mxu0 %v370
          %v590 = vpop.f32.mrb[0].mxu0
          %v591 = vadd.f32 %v341, %v590
          %v592 = vpop.f32.mrb[0].mxu0
          %v593 = vadd.f32 %v345, %v592
          %594 = vmatprep.mubr.f32.mxu0 0.0
          %595 = vmatmul.mubr.f32.gmra.mrb[0].mxu0 %v373
          %v596 = vpop.f32.mrb[0].mxu0
          %v597 = vadd.f32 %v341, %v596
          %v598 = vpop.f32.mrb[0].mxu0
          %v599 = vadd.f32 %v345, %v598
          %600 = vdwg.mxu0
          %p601 = scmp.lt.s32.totalorder %s25, 0
          %s602 = ssub.s32 0, %s25
          %s603 = scalar_select %p601, %s602, %s25
          %s604 = sand.u32 %s603, 1
          %s605 = ssub.s32 0, %s604
          %s606 = scalar_select %p601, %s605, %s604
          %p607 = scmp.ne.s32.totalorder %s606, 0
          %p608 = scmp.lt.s32.totalorder %s606, 0
          %p609 = pnand %p608, %p607
          %p610 = pneg %p609
          %s611 = sadd.s32 %s606, 2
          %s612 = scalar_select %p610, %s611, %s606
          %s613 = smul.u32 %s612, 32
          %s614 = smul.addr %s613, 8
          %s615 = scalar_lea.vmem [#allocation4], %s614
          %616 = vst [vmem:[%s615] sm:$0xff] %v442
          %617 = vst [vmem:[%s615 + $0x8] sm:$0xff] %v444
          %618 = vst [vmem:[%s615 + $0x10] sm:$0xff] %v555
          %619 = vst [vmem:[%s615 + $0x18] sm:$0xff] %v557
          %620 = vst [vmem:[%s615 + $0x20] sm:$0xff] %v448
          %621 = vst [vmem:[%s615 + $0x28] sm:$0xff] %v450
          %622 = vst [vmem:[%s615 + $0x30] sm:$0xff] %v561
          %623 = vst [vmem:[%s615 + $0x38] sm:$0xff] %v563
          %624 = vst [vmem:[%s615 + $0x40] sm:$0xff] %v454
          %625 = vst [vmem:[%s615 + $0x48] sm:$0xff] %v456
          %626 = vst [vmem:[%s615 + $0x50] sm:$0xff] %v567
          %627 = vst [vmem:[%s615 + $0x58] sm:$0xff] %v569
          %628 = vst [vmem:[%s615 + $0x60] sm:$0xff] %v460
          %629 = vst [vmem:[%s615 + $0x68] sm:$0xff] %v462
          %630 = vst [vmem:[%s615 + $0x70] sm:$0xff] %v573
          %631 = vst [vmem:[%s615 + $0x78] sm:$0xff] %v575
          %632 = vst [vmem:[%s615 + $0x80] sm:$0xff] %v466
          %633 = vst [vmem:[%s615 + $0x88] sm:$0xff] %v468
          %634 = vst [vmem:[%s615 + $0x90] sm:$0xff] %v579
          %635 = vst [vmem:[%s615 + $0x98] sm:$0xff] %v581
          %636 = vst [vmem:[%s615 + $0xa0] sm:$0xff] %v472
          %637 = vst [vmem:[%s615 + $0xa8] sm:$0xff] %v474
          %638 = vst [vmem:[%s615 + $0xb0] sm:$0xff] %v585
          %639 = vst [vmem:[%s615 + $0xb8] sm:$0xff] %v587
          %640 = vst [vmem:[%s615 + $0xc0] sm:$0xff] %v478
          %641 = vst [vmem:[%s615 + $0xc8] sm:$0xff] %v480
          %642 = vst [vmem:[%s615 + $0xd0] sm:$0xff] %v591
          %643 = vst [vmem:[%s615 + $0xd8] sm:$0xff] %v593
          %644 = vst [vmem:[%s615 + $0xe0] sm:$0xff] %v484
          %645 = vst [vmem:[%s615 + $0xe8] sm:$0xff] %v486
          %646 = vst [vmem:[%s615 + $0xf0] sm:$0xff] %v597
          %647 = vst [vmem:[%s615 + $0xf8] sm:$0xff] %v599
        $region56: #{tpu_custom_call.1} parent=43 // pred_fallthru
          _
        %p648 = scmp.gt.s32.totalorder %s25, 0
        // Predicated region
        $region57: #{tpu_custom_call.1} parent=43 // pred_check
          %p649 = pneg %p648
        $region58: #{tpu_custom_call.1} parent=43 // pred_check_branch
          %651 = sbr.rel (%p649) target = $region60
        $region59: #{tpu_custom_call.1} parent=43 // pred_region
          %s652 = ssub.s32 %s25, 1
          %s653 = smul.u32 %s652, 8
          %s654 = ssub.s32 8, %s653
          %p655 = scmp.lt.s32.totalorder %s654, 8
          %s656 = scalar_select %p655, %s654, 8
          %p657 = scmp.lt.s32.totalorder %s652, 0
          %s658 = ssub.s32 0, %s652
          %s659 = scalar_select %p657, %s658, %s652
          %s660 = sand.u32 %s659, 1
          %s661 = ssub.s32 0, %s660
          %s662 = scalar_select %p657, %s661, %s660
          %p663 = scmp.ne.s32.totalorder %s662, 0
          %p664 = scmp.lt.s32.totalorder %s662, 0
          %p665 = pnand %p664, %p663
          %p666 = pneg %p665
          %s667 = sadd.s32 %s662, 2
          %s668 = scalar_select %p666, %s667, %s662
          %v669 = vld [vmem:[#allocation6] sm:$0xff]
          %v670 = vld [vmem:[#allocation6 + $0x8] sm:$0xff]
          %v671 = vld [vmem:[#allocation6 + $0x10] sm:$0xff]
          %v672 = vld [vmem:[#allocation6 + $0x18] sm:$0xff]
          %v673 = vld [vmem:[#allocation6 + $0x20] sm:$0xff]
          %v674 = vld [vmem:[#allocation6 + $0x28] sm:$0xff]
          %v675 = vld [vmem:[#allocation6 + $0x30] sm:$0xff]
          %v676 = vld [vmem:[#allocation6 + $0x38] sm:$0xff]
          %v677 = vld [vmem:[#allocation6 + $0x40] sm:$0xff]
          %v678 = vld [vmem:[#allocation6 + $0x48] sm:$0xff]
          %v679 = vld [vmem:[#allocation6 + $0x50] sm:$0xff]
          %v680 = vld [vmem:[#allocation6 + $0x58] sm:$0xff]
          %v681 = vld [vmem:[#allocation6 + $0x60] sm:$0xff]
          %v682 = vld [vmem:[#allocation6 + $0x68] sm:$0xff]
          %v683 = vld [vmem:[#allocation6 + $0x70] sm:$0xff]
          %v684 = vld [vmem:[#allocation6 + $0x78] sm:$0xff]
          %v685 = vld [vmem:[#allocation6 + $0x80] sm:$0xff]
          %v686 = vld [vmem:[#allocation6 + $0x88] sm:$0xff]
          %v687 = vld [vmem:[#allocation6 + $0x90] sm:$0xff]
          %v688 = vld [vmem:[#allocation6 + $0x98] sm:$0xff]
          %v689 = vld [vmem:[#allocation6 + $0xa0] sm:$0xff]
          %v690 = vld [vmem:[#allocation6 + $0xa8] sm:$0xff]
          %v691 = vld [vmem:[#allocation6 + $0xb0] sm:$0xff]
          %v692 = vld [vmem:[#allocation6 + $0xb8] sm:$0xff]
          %v693 = vld [vmem:[#allocation6 + $0xc0] sm:$0xff]
          %v694 = vld [vmem:[#allocation6 + $0xc8] sm:$0xff]
          %v695 = vld [vmem:[#allocation6 + $0xd0] sm:$0xff]
          %v696 = vld [vmem:[#allocation6 + $0xd8] sm:$0xff]
          %v697 = vld [vmem:[#allocation6 + $0xe0] sm:$0xff]
          %v698 = vld [vmem:[#allocation6 + $0xe8] sm:$0xff]
          %v699 = vld [vmem:[#allocation6 + $0xf0] sm:$0xff]
          %v700 = vld [vmem:[#allocation6 + $0xf8] sm:$0xff]
          %v701 = vld [vmem:[#allocation6 + $0x100] sm:$0xff]
          %v702 = vld [vmem:[#allocation6 + $0x108] sm:$0xff]
          %v703 = vld [vmem:[#allocation6 + $0x110] sm:$0xff]
          %v704 = vld [vmem:[#allocation6 + $0x118] sm:$0xff]
          %v705 = vld [vmem:[#allocation6 + $0x120] sm:$0xff]
          %v706 = vld [vmem:[#allocation6 + $0x128] sm:$0xff]
          %v707 = vld [vmem:[#allocation6 + $0x130] sm:$0xff]
          %v708 = vld [vmem:[#allocation6 + $0x138] sm:$0xff]
          %v709 = vld [vmem:[#allocation6 + $0x140] sm:$0xff]
          %v710 = vld [vmem:[#allocation6 + $0x148] sm:$0xff]
          %v711 = vld [vmem:[#allocation6 + $0x150] sm:$0xff]
          %v712 = vld [vmem:[#allocation6 + $0x158] sm:$0xff]
          %v713 = vld [vmem:[#allocation6 + $0x160] sm:$0xff]
          %v714 = vld [vmem:[#allocation6 + $0x168] sm:$0xff]
          %v715 = vld [vmem:[#allocation6 + $0x170] sm:$0xff]
          %v716 = vld [vmem:[#allocation6 + $0x178] sm:$0xff]
          %v717 = vld [vmem:[#allocation6 + $0x180] sm:$0xff]
          %v718 = vld [vmem:[#allocation6 + $0x188] sm:$0xff]
          %v719 = vld [vmem:[#allocation6 + $0x190] sm:$0xff]
          %v720 = vld [vmem:[#allocation6 + $0x198] sm:$0xff]
          %v721 = vld [vmem:[#allocation6 + $0x1a0] sm:$0xff]
          %v722 = vld [vmem:[#allocation6 + $0x1a8] sm:$0xff]
          %v723 = vld [vmem:[#allocation6 + $0x1b0] sm:$0xff]
          %v724 = vld [vmem:[#allocation6 + $0x1b8] sm:$0xff]
          %v725 = vld [vmem:[#allocation6 + $0x1c0] sm:$0xff]
          %v726 = vld [vmem:[#allocation6 + $0x1c8] sm:$0xff]
          %v727 = vld [vmem:[#allocation6 + $0x1d0] sm:$0xff]
          %v728 = vld [vmem:[#allocation6 + $0x1d8] sm:$0xff]
          %v729 = vld [vmem:[#allocation6 + $0x1e0] sm:$0xff]
          %v730 = vld [vmem:[#allocation6 + $0x1e8] sm:$0xff]
          %v731 = vld [vmem:[#allocation6 + $0x1f0] sm:$0xff]
          %v732 = vld [vmem:[#allocation6 + $0x1f8] sm:$0xff]
          %v733 = vld [vmem:[#allocation2] sm:$0xff]
          %v734 = vld [vmem:[#allocation3] sm:$0xff]
          %s735 = smul.u32 %s668, 32
          %s736 = smul.addr %s735, 8
          %s737 = scalar_lea.vmem [#allocation4], %s736
          %v738 = vld [vmem:[%s737] sm:$0xff]
          %v739 = vld [vmem:[%s737 + $0x8] sm:$0xff]
          %v740 = vld [vmem:[%s737 + $0x10] sm:$0xff]
          %v741 = vld [vmem:[%s737 + $0x18] sm:$0xff]
          %742 = vmatprep.subr.mxu0 %v670
          %743 = vmatpush1.msra.mxu0 %v669
          %744 = vmatprep.subr.mxu0 %v674
          %745 = vmatpush1.msra.mxu0 %v673
          %746 = vmatprep.subr.mxu0 %v678
          %747 = vmatpush1.msra.mxu0 %v677
          %748 = vmatprep.subr.mxu0 %v682
          %749 = vmatpush1.msra.mxu0 %v681
          %750 = vmatprep.subr.mxu0 %v686
          %751 = vmatpush1.msra.mxu0 %v685
          %752 = vmatprep.subr.mxu0 %v690
          %753 = vmatpush1.msra.mxu0 %v689
          %754 = vmatprep.subr.mxu0 %v694
          %755 = vmatpush1.msra.mxu0 %v693
          %756 = vmatprep.subr.mxu0 %v698
          %757 = vmatpush1.msra.mxu0 %v697
          %758 = vmatprep.subr.mxu0 %v702
          %759 = vmatpush1.msra.mxu0 %v701
          %760 = vmatprep.subr.mxu0 %v706
          %761 = vmatpush1.msra.mxu0 %v705
          %762 = vmatprep.subr.mxu0 %v710
          %763 = vmatpush1.msra.mxu0 %v709
          %764 = vmatprep.subr.mxu0 %v714
          %765 = vmatpush1.msra.mxu0 %v713
          %766 = vmatprep.subr.mxu0 %v718
          %767 = vmatpush1.msra.mxu0 %v717
          %768 = vmatprep.subr.mxu0 %v722
          %769 = vmatpush1.msra.mxu0 %v721
          %770 = vmatprep.subr.mxu0 %v726
          %771 = vmatpush1.msra.mxu0 %v725
          %772 = vmatprep.subr.mxu0 %v730
          %773 = vmatpush1.msra.mxu0 %v729
          %774 = vmatprep.subr.mxu0 0.0
          %775 = vmatpush1.msra.mxu0 0.0
          %776 = vmatprep.subr.mxu0 0.0
          %777 = vmatpush1.msra.mxu0 0.0
          %778 = vmatprep.subr.mxu0 0.0
          %779 = vmatpush1.msra.mxu0 0.0
          %780 = vmatprep.subr.mxu0 0.0
          %781 = vmatpush1.msra.mxu0 0.0
          %782 = vmatprep.subr.mxu0 0.0
          %783 = vmatpush1.msra.mxu0 0.0
          %784 = vmatprep.subr.mxu0 0.0
          %785 = vmatpush1.msra.mxu0 0.0
          %786 = vmatprep.subr.mxu0 0.0
          %787 = vmatpush1.msra.mxu0 0.0
          %788 = vmatprep.subr.mxu0 0.0
          %789 = vmatpush1.msra.mxu0 0.0
          %790 = vmatprep.subr.mxu0 0.0
          %791 = vmatpush1.msra.mxu0 0.0
          %792 = vmatprep.subr.mxu0 0.0
          %793 = vmatpush1.msra.mxu0 0.0
          %794 = vmatprep.subr.mxu0 0.0
          %795 = vmatpush1.msra.mxu0 0.0
          %796 = vmatprep.subr.mxu0 0.0
          %797 = vmatpush1.msra.mxu0 0.0
          %798 = vmatprep.subr.mxu0 0.0
          %799 = vmatpush1.msra.mxu0 0.0
          %800 = vmatprep.subr.mxu0 0.0
          %801 = vmatpush1.msra.mxu0 0.0
          %802 = vmatprep.subr.mxu0 0.0
          %803 = vmatpush1.msra.mxu0 0.0
          %804 = vmatprep.subr.mxu0 0.0
          %805 = vmatpush1.msra.mxu0 0.0
          %806 = vmatprep.mubr.f32.mxu0 0.0
          %807 = vmatmul.mubr.f32.gmra.mrb[0].mxu0 %v733
          %v808 = vpop.f32.mrb[0].mxu0
          %v809 = vadd.f32 %v738, %v808
          %v810 = vpop.f32.mrb[0].mxu0
          %v811 = vadd.f32 %v739, %v810
          %812 = vdwg.mxu0
          %813 = vmatprep.subr.mxu0 %v672
          %814 = vmatpush1.msra.mxu0 %v671
          %815 = vmatprep.subr.mxu0 %v676
          %816 = vmatpush1.msra.mxu0 %v675
          %817 = vmatprep.subr.mxu0 %v680
          %818 = vmatpush1.msra.mxu0 %v679
          %819 = vmatprep.subr.mxu0 %v684
          %820 = vmatpush1.msra.mxu0 %v683
          %821 = vmatprep.subr.mxu0 %v688
          %822 = vmatpush1.msra.mxu0 %v687
          %823 = vmatprep.subr.mxu0 %v692
          %824 = vmatpush1.msra.mxu0 %v691
          %825 = vmatprep.subr.mxu0 %v696
          %826 = vmatpush1.msra.mxu0 %v695
          %827 = vmatprep.subr.mxu0 %v700
          %828 = vmatpush1.msra.mxu0 %v699
          %829 = vmatprep.subr.mxu0 %v704
          %830 = vmatpush1.msra.mxu0 %v703
          %831 = vmatprep.subr.mxu0 %v708
          %832 = vmatpush1.msra.mxu0 %v707
          %833 = vmatprep.subr.mxu0 %v712
          %834 = vmatpush1.msra.mxu0 %v711
          %835 = vmatprep.subr.mxu0 %v716
          %836 = vmatpush1.msra.mxu0 %v715
          %837 = vmatprep.subr.mxu0 %v720
          %838 = vmatpush1.msra.mxu0 %v719
          %839 = vmatprep.subr.mxu0 %v724
          %840 = vmatpush1.msra.mxu0 %v723
          %841 = vmatprep.subr.mxu0 %v728
          %842 = vmatpush1.msra.mxu0 %v727
          %843 = vmatprep.subr.mxu0 %v732
          %844 = vmatpush1.msra.mxu0 %v731
          %845 = vmatprep.subr.mxu0 0.0
          %846 = vmatpush1.msra.mxu0 0.0
          %847 = vmatprep.subr.mxu0 0.0
          %848 = vmatpush1.msra.mxu0 0.0
          %849 = vmatprep.subr.mxu0 0.0
          %850 = vmatpush1.msra.mxu0 0.0
          %851 = vmatprep.subr.mxu0 0.0
          %852 = vmatpush1.msra.mxu0 0.0
          %853 = vmatprep.subr.mxu0 0.0
          %854 = vmatpush1.msra.mxu0 0.0
          %855 = vmatprep.subr.mxu0 0.0
          %856 = vmatpush1.msra.mxu0 0.0
          %857 = vmatprep.subr.mxu0 0.0
          %858 = vmatpush1.msra.mxu0 0.0
          %859 = vmatprep.subr.mxu0 0.0
          %860 = vmatpush1.msra.mxu0 0.0
          %861 = vmatprep.subr.mxu0 0.0
          %862 = vmatpush1.msra.mxu0 0.0
          %863 = vmatprep.subr.mxu0 0.0
          %864 = vmatpush1.msra.mxu0 0.0
          %865 = vmatprep.subr.mxu0 0.0
          %866 = vmatpush1.msra.mxu0 0.0
          %867 = vmatprep.subr.mxu0 0.0
          %868 = vmatpush1.msra.mxu0 0.0
          %869 = vmatprep.subr.mxu0 0.0
          %870 = vmatpush1.msra.mxu0 0.0
          %871 = vmatprep.subr.mxu0 0.0
          %872 = vmatpush1.msra.mxu0 0.0
          %873 = vmatprep.subr.mxu0 0.0
          %874 = vmatpush1.msra.mxu0 0.0
          %875 = vmatprep.subr.mxu0 0.0
          %876 = vmatpush1.msra.mxu0 0.0
          %877 = vmatprep.mubr.f32.mxu0 0.0
          %878 = vmatmul.mubr.f32.gmra.mrb[0].mxu0 %v733
          %v879 = vpop.f32.mrb[0].mxu0
          %v880 = vadd.f32 %v740, %v879
          %v881 = vpop.f32.mrb[0].mxu0
          %v882 = vadd.f32 %v741, %v881
          %883 = vdwg.mxu0
          %v884 = vxor.u32 %v809, 2147483648
          %v885 = vxor.u32 %v811, 2147483648
          %v886 = vmul.f32 %v884, 1.442695
          %v887 = vpow.pop %v886
          %v888 = vmul.f32 %v885, 1.442695
          %v889 = vpow.pop %v888
          %v890 = vadd.f32 %v887, 1.0
          %v891 = vadd.f32 %v889, 1.0
          %v892 = vrcp.pop %v890
          %v893 = vmul.f32 1.0, %v892
          %v894 = vrcp.pop %v891
          %v895 = vmul.f32 1.0, %v894
          %v896 = vtanh.pop %v880
          %v897 = vxor.u32 %v882, 2147483648
          %v898 = vmul.f32 %v897, 1.442695
          %v899 = vpow.pop %v898
          %v900 = vadd.f32 %v899, 1.0
          %v901 = vrcp.pop %v900
          %v902 = vmul.f32 1.0, %v901
          %v903 = vmul.f32 %v895, %v734
          %v904 = vmul.f32 %v893, %v896
          %v905 = vadd.f32 %v903, %v904
          %v906 = vtanh.pop %v905
          %v907 = vmul.f32 %v902, %v906
          %p908 = scmp.gt.s32.totalorder %s656, 0
          %s909 = scalar_select %p908, 1, 0
          %v910 = vstv %s909
          %vm911 = vcmp.eq.s32.totalorder %v910, 1
          %v912 = vsel %vm911, %v907, %v733
          %v913 = vsel %vm911, %v905, %v734
          %s914 = sadd.s32 4, %s735
          %s915 = smul.addr %s914, 8
          %s916 = scalar_lea.vmem [#allocation4], %s915
          %v917 = vld [vmem:[%s916] sm:$0xff]
          %v918 = vld [vmem:[%s916 + $0x8] sm:$0xff]
          %v919 = vld [vmem:[%s916 + $0x10] sm:$0xff]
          %v920 = vld [vmem:[%s916 + $0x18] sm:$0xff]
          %921 = vmatprep.subr.mxu0 %v670
          %922 = vmatpush1.msra.mxu0 %v669
          %923 = vmatprep.subr.mxu0 %v674
          %924 = vmatpush1.msra.mxu0 %v673
          %925 = vmatprep.subr.mxu0 %v678
          %926 = vmatpush1.msra.mxu0 %v677
          %927 = vmatprep.subr.mxu0 %v682
          %928 = vmatpush1.msra.mxu0 %v681
          %929 = vmatprep.subr.mxu0 %v686
          %930 = vmatpush1.msra.mxu0 %v685
          %931 = vmatprep.subr.mxu0 %v690
          %932 = vmatpush1.msra.mxu0 %v689
          %933 = vmatprep.subr.mxu0 %v694
          %934 = vmatpush1.msra.mxu0 %v693
          %935 = vmatprep.subr.mxu0 %v698
          %936 = vmatpush1.msra.mxu0 %v697
          %937 = vmatprep.subr.mxu0 %v702
          %938 = vmatpush1.msra.mxu0 %v701
          %939 = vmatprep.subr.mxu0 %v706
          %940 = vmatpush1.msra.mxu0 %v705
          %941 = vmatprep.subr.mxu0 %v710
          %942 = vmatpush1.msra.mxu0 %v709
          %943 = vmatprep.subr.mxu0 %v714
          %944 = vmatpush1.msra.mxu0 %v713
          %945 = vmatprep.subr.mxu0 %v718
          %946 = vmatpush1.msra.mxu0 %v717
          %947 = vmatprep.subr.mxu0 %v722
          %948 = vmatpush1.msra.mxu0 %v721
          %949 = vmatprep.subr.mxu0 %v726
          %950 = vmatpush1.msra.mxu0 %v725
          %951 = vmatprep.subr.mxu0 %v730
          %952 = vmatpush1.msra.mxu0 %v729
          %953 = vmatprep.subr.mxu0 0.0
          %954 = vmatpush1.msra.mxu0 0.0
          %955 = vmatprep.subr.mxu0 0.0
          %956 = vmatpush1.msra.mxu0 0.0
          %957 = vmatprep.subr.mxu0 0.0
          %958 = vmatpush1.msra.mxu0 0.0
          %959 = vmatprep.subr.mxu0 0.0
          %960 = vmatpush1.msra.mxu0 0.0
          %961 = vmatprep.subr.mxu0 0.0
          %962 = vmatpush1.msra.mxu0 0.0
          %963 = vmatprep.subr.mxu0 0.0
          %964 = vmatpush1.msra.mxu0 0.0
          %965 = vmatprep.subr.mxu0 0.0
          %966 = vmatpush1.msra.mxu0 0.0
          %967 = vmatprep.subr.mxu0 0.0
          %968 = vmatpush1.msra.mxu0 0.0
          %969 = vmatprep.subr.mxu0 0.0
          %970 = vmatpush1.msra.mxu0 0.0
          %971 = vmatprep.subr.mxu0 0.0
          %972 = vmatpush1.msra.mxu0 0.0
          %973 = vmatprep.subr.mxu0 0.0
          %974 = vmatpush1.msra.mxu0 0.0
          %975 = vmatprep.subr.mxu0 0.0
          %976 = vmatpush1.msra.mxu0 0.0
          %977 = vmatprep.subr.mxu0 0.0
          %978 = vmatpush1.msra.mxu0 0.0
          %979 = vmatprep.subr.mxu0 0.0
          %980 = vmatpush1.msra.mxu0 0.0
          %981 = vmatprep.subr.mxu0 0.0
          %982 = vmatpush1.msra.mxu0 0.0
          %983 = vmatprep.subr.mxu0 0.0
          %984 = vmatpush1.msra.mxu0 0.0
          %985 = vmatprep.mubr.f32.mxu0 0.0
          %986 = vmatmul.mubr.f32.gmra.mrb[0].mxu0 %v912
          %v987 = vpop.f32.mrb[0].mxu0
          %v988 = vadd.f32 %v917, %v987
          %v989 = vpop.f32.mrb[0].mxu0
          %v990 = vadd.f32 %v918, %v989
          %991 = vdwg.mxu0
          %992 = vmatprep.subr.mxu0 %v672
          %993 = vmatpush1.msra.mxu0 %v671
          %994 = vmatprep.subr.mxu0 %v676
          %995 = vmatpush1.msra.mxu0 %v675
          %996 = vmatprep.subr.mxu0 %v680
          %997 = vmatpush1.msra.mxu0 %v679
          %998 = vmatprep.subr.mxu0 %v684
          %999 = vmatpush1.msra.mxu0 %v683
          %1000 = vmatprep.subr.mxu0 %v688
          %1001 = vmatpush1.msra.mxu0 %v687
          %1002 = vmatprep.subr.mxu0 %v692
          %1003 = vmatpush1.msra.mxu0 %v691
          %1004 = vmatprep.subr.mxu0 %v696
          %1005 = vmatpush1.msra.mxu0 %v695
          %1006 = vmatprep.subr.mxu0 %v700
          %1007 = vmatpush1.msra.mxu0 %v699
          %1008 = vmatprep.subr.mxu0 %v704
          %1009 = vmatpush1.msra.mxu0 %v703
          %1010 = vmatprep.subr.mxu0 %v708
          %1011 = vmatpush1.msra.mxu0 %v707
          %1012 = vmatprep.subr.mxu0 %v712
          %1013 = vmatpush1.msra.mxu0 %v711
          %1014 = vmatprep.subr.mxu0 %v716
          %1015 = vmatpush1.msra.mxu0 %v715
          %1016 = vmatprep.subr.mxu0 %v720
          %1017 = vmatpush1.msra.mxu0 %v719
          %1018 = vmatprep.subr.mxu0 %v724
          %1019 = vmatpush1.msra.mxu0 %v723
          %1020 = vmatprep.subr.mxu0 %v728
          %1021 = vmatpush1.msra.mxu0 %v727
          %1022 = vmatprep.subr.mxu0 %v732
          %1023 = vmatpush1.msra.mxu0 %v731
          %1024 = vmatprep.subr.mxu0 0.0
          %1025 = vmatpush1.msra.mxu0 0.0
          %1026 = vmatprep.subr.mxu0 0.0
          %1027 = vmatpush1.msra.mxu0 0.0
          %1028 = vmatprep.subr.mxu0 0.0
          %1029 = vmatpush1.msra.mxu0 0.0
          %1030 = vmatprep.subr.mxu0 0.0
          %1031 = vmatpush1.msra.mxu0 0.0
          %1032 = vmatprep.subr.mxu0 0.0
          %1033 = vmatpush1.msra.mxu0 0.0
          %1034 = vmatprep.subr.mxu0 0.0
          %1035 = vmatpush1.msra.mxu0 0.0
          %1036 = vmatprep.subr.mxu0 0.0
          %1037 = vmatpush1.msra.mxu0 0.0
          %1038 = vmatprep.subr.mxu0 0.0
          %1039 = vmatpush1.msra.mxu0 0.0
          %1040 = vmatprep.subr.mxu0 0.0
          %1041 = vmatpush1.msra.mxu0 0.0
          %1042 = vmatprep.subr.mxu0 0.0
          %1043 = vmatpush1.msra.mxu0 0.0
          %1044 = vmatprep.subr.mxu0 0.0
          %1045 = vmatpush1.msra.mxu0 0.0
          %1046 = vmatprep.subr.mxu0 0.0
          %1047 = vmatpush1.msra.mxu0 0.0
          %1048 = vmatprep.subr.mxu0 0.0
          %1049 = vmatpush1.msra.mxu0 0.0
          %1050 = vmatprep.subr.mxu0 0.0
          %1051 = vmatpush1.msra.mxu0 0.0
          %1052 = vmatprep.subr.mxu0 0.0
          %1053 = vmatpush1.msra.mxu0 0.0
          %1054 = vmatprep.subr.mxu0 0.0
          %1055 = vmatpush1.msra.mxu0 0.0
          %1056 = vmatprep.mubr.f32.mxu0 0.0
          %1057 = vmatmul.mubr.f32.gmra.mrb[0].mxu0 %v912
          %v1058 = vpop.f32.mrb[0].mxu0
          %v1059 = vadd.f32 %v919, %v1058
          %v1060 = vpop.f32.mrb[0].mxu0
          %v1061 = vadd.f32 %v920, %v1060
          %1062 = vdwg.mxu0
          %v1063 = vxor.u32 %v988, 2147483648
          %v1064 = vxor.u32 %v990, 2147483648
          %v1065 = vmul.f32 %v1063, 1.442695
          %v1066 = vpow.pop %v1065
          %v1067 = vmul.f32 %v1064, 1.442695
          %v1068 = vpow.pop %v1067
          %v1069 = vadd.f32 %v1066, 1.0
          %v1070 = vadd.f32 %v1068, 1.0
          %v1071 = vrcp.pop %v1069
          %v1072 = vmul.f32 1.0, %v1071
          %v1073 = vrcp.pop %v1070
          %v1074 = vmul.f32 1.0, %v1073
          %v1075 = vtanh.pop %v1059
          %v1076 = vxor.u32 %v1061, 2147483648
          %v1077 = vmul.f32 %v1076, 1.442695
          %v1078 = vpow.pop %v1077
          %v1079 = vadd.f32 %v1078, 1.0
          %v1080 = vrcp.pop %v1079
          %v1081 = vmul.f32 1.0, %v1080
          %v1082 = vmul.f32 %v1074, %v913
          %v1083 = vmul.f32 %v1072, %v1075
          %v1084 = vadd.f32 %v1082, %v1083
          %v1085 = vtanh.pop %v1084
          %v1086 = vmul.f32 %v1081, %v1085
          %p1087 = scmp.gt.s32.totalorder %s656, 1
          %s1088 = scalar_select %p1087, 1, 0
          %v1089 = vstv %s1088
          %vm1090 = vcmp.eq.s32.totalorder %v1089, 1
          %v1091 = vsel %vm1090, %v1086, %v912
          %v1092 = vsel %vm1090, %v1084, %v913
          %s1093 = sadd.s32 8, %s735
          %s1094 = smul.addr %s1093, 8
          %s1095 = scalar_lea.vmem [#allocation4], %s1094
          %v1096 = vld [vmem:[%s1095] sm:$0xff]
          %v1097 = vld [vmem:[%s1095 + $0x8] sm:$0xff]
          %v1098 = vld [vmem:[%s1095 + $0x10] sm:$0xff]
          %v1099 = vld [vmem:[%s1095 + $0x18] sm:$0xff]
          %1100 = vmatprep.subr.mxu0 %v670
          %1101 = vmatpush1.msra.mxu0 %v669
          %1102 = vmatprep.subr.mxu0 %v674
          %1103 = vmatpush1.msra.mxu0 %v673
          %1104 = vmatprep.subr.mxu0 %v678
          %1105 = vmatpush1.msra.mxu0 %v677
          %1106 = vmatprep.subr.mxu0 %v682
          %1107 = vmatpush1.msra.mxu0 %v681
          %1108 = vmatprep.subr.mxu0 %v686
          %1109 = vmatpush1.msra.mxu0 %v685
          %1110 = vmatprep.subr.mxu0 %v690
          %1111 = vmatpush1.msra.mxu0 %v689
          %1112 = vmatprep.subr.mxu0 %v694
          %1113 = vmatpush1.msra.mxu0 %v693
          %1114 = vmatprep.subr.mxu0 %v698
          %1115 = vmatpush1.msra.mxu0 %v697
          %1116 = vmatprep.subr.mxu0 %v702
          %1117 = vmatpush1.msra.mxu0 %v701
          %1118 = vmatprep.subr.mxu0 %v706
          %1119 = vmatpush1.msra.mxu0 %v705
          %1120 = vmatprep.subr.mxu0 %v710
          %1121 = vmatpush1.msra.mxu0 %v709
          %1122 = vmatprep.subr.mxu0 %v714
          %1123 = vmatpush1.msra.mxu0 %v713
          %1124 = vmatprep.subr.mxu0 %v718
          %1125 = vmatpush1.msra.mxu0 %v717
          %1126 = vmatprep.subr.mxu0 %v722
          %1127 = vmatpush1.msra.mxu0 %v721
          %1128 = vmatprep.subr.mxu0 %v726
          %1129 = vmatpush1.msra.mxu0 %v725
          %1130 = vmatprep.subr.mxu0 %v730
          %1131 = vmatpush1.msra.mxu0 %v729
          %1132 = vmatprep.subr.mxu0 0.0
          %1133 = vmatpush1.msra.mxu0 0.0
          %1134 = vmatprep.subr.mxu0 0.0
          %1135 = vmatpush1.msra.mxu0 0.0
          %1136 = vmatprep.subr.mxu0 0.0
          %1137 = vmatpush1.msra.mxu0 0.0
          %1138 = vmatprep.subr.mxu0 0.0
          %1139 = vmatpush1.msra.mxu0 0.0
          %1140 = vmatprep.subr.mxu0 0.0
          %1141 = vmatpush1.msra.mxu0 0.0
          %1142 = vmatprep.subr.mxu0 0.0
          %1143 = vmatpush1.msra.mxu0 0.0
          %1144 = vmatprep.subr.mxu0 0.0
          %1145 = vmatpush1.msra.mxu0 0.0
          %1146 = vmatprep.subr.mxu0 0.0
          %1147 = vmatpush1.msra.mxu0 0.0
          %1148 = vmatprep.subr.mxu0 0.0
          %1149 = vmatpush1.msra.mxu0 0.0
          %1150 = vmatprep.subr.mxu0 0.0
          %1151 = vmatpush1.msra.mxu0 0.0
          %1152 = vmatprep.subr.mxu0 0.0
          %1153 = vmatpush1.msra.mxu0 0.0
          %1154 = vmatprep.subr.mxu0 0.0
          %1155 = vmatpush1.msra.mxu0 0.0
          %1156 = vmatprep.subr.mxu0 0.0
          %1157 = vmatpush1.msra.mxu0 0.0
          %1158 = vmatprep.subr.mxu0 0.0
          %1159 = vmatpush1.msra.mxu0 0.0
          %1160 = vmatprep.subr.mxu0 0.0
          %1161 = vmatpush1.msra.mxu0 0.0
          %1162 = vmatprep.subr.mxu0 0.0
          %1163 = vmatpush1.msra.mxu0 0.0
          %1164 = vmatprep.mubr.f32.mxu0 0.0
          %1165 = vmatmul.mubr.f32.gmra.mrb[0].mxu0 %v1091
          %v1166 = vpop.f32.mrb[0].mxu0
          %v1167 = vadd.f32 %v1096, %v1166
          %v1168 = vpop.f32.mrb[0].mxu0
          %v1169 = vadd.f32 %v1097, %v1168
          %1170 = vdwg.mxu0
          %1171 = vmatprep.subr.mxu0 %v672
          %1172 = vmatpush1.msra.mxu0 %v671
          %1173 = vmatprep.subr.mxu0 %v676
          %1174 = vmatpush1.msra.mxu0 %v675
          %1175 = vmatprep.subr.mxu0 %v680
          %1176 = vmatpush1.msra.mxu0 %v679
          %1177 = vmatprep.subr.mxu0 %v684
          %1178 = vmatpush1.msra.mxu0 %v683
          %1179 = vmatprep.subr.mxu0 %v688
          %1180 = vmatpush1.msra.mxu0 %v687
          %1181 = vmatprep.subr.mxu0 %v692
          %1182 = vmatpush1.msra.mxu0 %v691
          %1183 = vmatprep.subr.mxu0 %v696
          %1184 = vmatpush1.msra.mxu0 %v695
          %1185 = vmatprep.subr.mxu0 %v700
          %1186 = vmatpush1.msra.mxu0 %v699
          %1187 = vmatprep.subr.mxu0 %v704
          %1188 = vmatpush1.msra.mxu0 %v703
          %1189 = vmatprep.subr.mxu0 %v708
          %1190 = vmatpush1.msra.mxu0 %v707
          %1191 = vmatprep.subr.mxu0 %v712
          %1192 = vmatpush1.msra.mxu0 %v711
          %1193 = vmatprep.subr.mxu0 %v716
          %1194 = vmatpush1.msra.mxu0 %v715
          %1195 = vmatprep.subr.mxu0 %v720
          %1196 = vmatpush1.msra.mxu0 %v719
          %1197 = vmatprep.subr.mxu0 %v724
          %1198 = vmatpush1.msra.mxu0 %v723
          %1199 = vmatprep.subr.mxu0 %v728
          %1200 = vmatpush1.msra.mxu0 %v727
          %1201 = vmatprep.subr.mxu0 %v732
          %1202 = vmatpush1.msra.mxu0 %v731
          %1203 = vmatprep.subr.mxu0 0.0
          %1204 = vmatpush1.msra.mxu0 0.0
          %1205 = vmatprep.subr.mxu0 0.0
          %1206 = vmatpush1.msra.mxu0 0.0
          %1207 = vmatprep.subr.mxu0 0.0
          %1208 = vmatpush1.msra.mxu0 0.0
          %1209 = vmatprep.subr.mxu0 0.0
          %1210 = vmatpush1.msra.mxu0 0.0
          %1211 = vmatprep.subr.mxu0 0.0
          %1212 = vmatpush1.msra.mxu0 0.0
          %1213 = vmatprep.subr.mxu0 0.0
          %1214 = vmatpush1.msra.mxu0 0.0
          %1215 = vmatprep.subr.mxu0 0.0
          %1216 = vmatpush1.msra.mxu0 0.0
          %1217 = vmatprep.subr.mxu0 0.0
          %1218 = vmatpush1.msra.mxu0 0.0
          %1219 = vmatprep.subr.mxu0 0.0
          %1220 = vmatpush1.msra.mxu0 0.0
          %1221 = vmatprep.subr.mxu0 0.0
          %1222 = vmatpush1.msra.mxu0 0.0
          %1223 = vmatprep.subr.mxu0 0.0
          %1224 = vmatpush1.msra.mxu0 0.0
          %1225 = vmatprep.subr.mxu0 0.0
          %1226 = vmatpush1.msra.mxu0 0.0
          %1227 = vmatprep.subr.mxu0 0.0
          %1228 = vmatpush1.msra.mxu0 0.0
          %1229 = vmatprep.subr.mxu0 0.0
          %1230 = vmatpush1.msra.mxu0 0.0
          %1231 = vmatprep.subr.mxu0 0.0
          %1232 = vmatpush1.msra.mxu0 0.0
          %1233 = vmatprep.subr.mxu0 0.0
          %1234 = vmatpush1.msra.mxu0 0.0
          %1235 = vmatprep.mubr.f32.mxu0 0.0
          %1236 = vmatmul.mubr.f32.gmra.mrb[0].mxu0 %v1091
          %v1237 = vpop.f32.mrb[0].mxu0
          %v1238 = vadd.f32 %v1098, %v1237
          %v1239 = vpop.f32.mrb[0].mxu0
          %v1240 = vadd.f32 %v1099, %v1239
          %1241 = vdwg.mxu0
          %v1242 = vxor.u32 %v1167, 2147483648
          %v1243 = vxor.u32 %v1169, 2147483648
          %v1244 = vmul.f32 %v1242, 1.442695
          %v1245 = vpow.pop %v1244
          %v1246 = vmul.f32 %v1243, 1.442695
          %v1247 = vpow.pop %v1246
          %v1248 = vadd.f32 %v1245, 1.0
          %v1249 = vadd.f32 %v1247, 1.0
          %v1250 = vrcp.pop %v1248
          %v1251 = vmul.f32 1.0, %v1250
          %v1252 = vrcp.pop %v1249
          %v1253 = vmul.f32 1.0, %v1252
          %v1254 = vtanh.pop %v1238
          %v1255 = vxor.u32 %v1240, 2147483648
          %v1256 = vmul.f32 %v1255, 1.442695
          %v1257 = vpow.pop %v1256
          %v1258 = vadd.f32 %v1257, 1.0
          %v1259 = vrcp.pop %v1258
          %v1260 = vmul.f32 1.0, %v1259
          %v1261 = vmul.f32 %v1253, %v1092
          %v1262 = vmul.f32 %v1251, %v1254
          %v1263 = vadd.f32 %v1261, %v1262
          %v1264 = vtanh.pop %v1263
          %v1265 = vmul.f32 %v1260, %v1264
          %p1266 = scmp.gt.s32.totalorder %s656, 2
          %s1267 = scalar_select %p1266, 1, 0
          %v1268 = vstv %s1267
          %vm1269 = vcmp.eq.s32.totalorder %v1268, 1
          %v1270 = vsel %vm1269, %v1265, %v1091
          %v1271 = vsel %vm1269, %v1263, %v1092
          %s1272 = sadd.s32 12, %s735
          %s1273 = smul.addr %s1272, 8
          %s1274 = scalar_lea.vmem [#allocation4], %s1273
          %v1275 = vld [vmem:[%s1274] sm:$0xff]
          %v1276 = vld [vmem:[%s1274 + $0x8] sm:$0xff]
          %v1277 = vld [vmem:[%s1274 + $0x10] sm:$0xff]
          %v1278 = vld [vmem:[%s1274 + $0x18] sm:$0xff]
          %1279 = vmatprep.subr.mxu0 %v670
          %1280 = vmatpush1.msra.mxu0 %v669
          %1281 = vmatprep.subr.mxu0 %v674
          %1282 = vmatpush1.msra.mxu0 %v673
          %1283 = vmatprep.subr.mxu0 %v678
          %1284 = vmatpush1.msra.mxu0 %v677
          %1285 = vmatprep.subr.mxu0 %v682
          %1286 = vmatpush1.msra.mxu0 %v681
          %1287 = vmatprep.subr.mxu0 %v686
          %1288 = vmatpush1.msra.mxu0 %v685
          %1289 = vmatprep.subr.mxu0 %v690
          %1290 = vmatpush1.msra.mxu0 %v689
          %1291 = vmatprep.subr.mxu0 %v694
          %1292 = vmatpush1.msra.mxu0 %v693
          %1293 = vmatprep.subr.mxu0 %v698
          %1294 = vmatpush1.msra.mxu0 %v697
          %1295 = vmatprep.subr.mxu0 %v702
          %1296 = vmatpush1.msra.mxu0 %v701
          %1297 = vmatprep.subr.mxu0 %v706
          %1298 = vmatpush1.msra.mxu0 %v705
          %1299 = vmatprep.subr.mxu0 %v710
          %1300 = vmatpush1.msra.mxu0 %v709
          %1301 = vmatprep.subr.mxu0 %v714
          %1302 = vmatpush1.msra.mxu0 %v713
          %1303 = vmatprep.subr.mxu0 %v718
          %1304 = vmatpush1.msra.mxu0 %v717
          %1305 = vmatprep.subr.mxu0 %v722
          %1306 = vmatpush1.msra.mxu0 %v721
          %1307 = vmatprep.subr.mxu0 %v726
          %1308 = vmatpush1.msra.mxu0 %v725
          %1309 = vmatprep.subr.mxu0 %v730
          %1310 = vmatpush1.msra.mxu0 %v729
          %1311 = vmatprep.subr.mxu0 0.0
          %1312 = vmatpush1.msra.mxu0 0.0
          %1313 = vmatprep.subr.mxu0 0.0
          %1314 = vmatpush1.msra.mxu0 0.0
          %1315 = vmatprep.subr.mxu0 0.0
          %1316 = vmatpush1.msra.mxu0 0.0
          %1317 = vmatprep.subr.mxu0 0.0
          %1318 = vmatpush1.msra.mxu0 0.0
          %1319 = vmatprep.subr.mxu0 0.0
          %1320 = vmatpush1.msra.mxu0 0.0
          %1321 = vmatprep.subr.mxu0 0.0
          %1322 = vmatpush1.msra.mxu0 0.0
          %1323 = vmatprep.subr.mxu0 0.0
          %1324 = vmatpush1.msra.mxu0 0.0
          %1325 = vmatprep.subr.mxu0 0.0
          %1326 = vmatpush1.msra.mxu0 0.0
          %1327 = vmatprep.subr.mxu0 0.0
          %1328 = vmatpush1.msra.mxu0 0.0
          %1329 = vmatprep.subr.mxu0 0.0
          %1330 = vmatpush1.msra.mxu0 0.0
          %1331 = vmatprep.subr.mxu0 0.0
          %1332 = vmatpush1.msra.mxu0 0.0
          %1333 = vmatprep.subr.mxu0 0.0
          %1334 = vmatpush1.msra.mxu0 0.0
          %1335 = vmatprep.subr.mxu0 0.0
          %1336 = vmatpush1.msra.mxu0 0.0
          %1337 = vmatprep.subr.mxu0 0.0
          %1338 = vmatpush1.msra.mxu0 0.0
          %1339 = vmatprep.subr.mxu0 0.0
          %1340 = vmatpush1.msra.mxu0 0.0
          %1341 = vmatprep.subr.mxu0 0.0
          %1342 = vmatpush1.msra.mxu0 0.0
          %1343 = vmatprep.mubr.f32.mxu0 0.0
          %1344 = vmatmul.mubr.f32.gmra.mrb[0].mxu0 %v1270
          %v1345 = vpop.f32.mrb[0].mxu0
          %v1346 = vadd.f32 %v1275, %v1345
          %v1347 = vpop.f32.mrb[0].mxu0
          %v1348 = vadd.f32 %v1276, %v1347
          %1349 = vdwg.mxu0
          %1350 = vmatprep.subr.mxu0 %v672
          %1351 = vmatpush1.msra.mxu0 %v671
          %1352 = vmatprep.subr.mxu0 %v676
          %1353 = vmatpush1.msra.mxu0 %v675
          %1354 = vmatprep.subr.mxu0 %v680
          %1355 = vmatpush1.msra.mxu0 %v679
          %1356 = vmatprep.subr.mxu0 %v684
          %1357 = vmatpush1.msra.mxu0 %v683
          %1358 = vmatprep.subr.mxu0 %v688
          %1359 = vmatpush1.msra.mxu0 %v687
          %1360 = vmatprep.subr.mxu0 %v692
          %1361 = vmatpush1.msra.mxu0 %v691
          %1362 = vmatprep.subr.mxu0 %v696
          %1363 = vmatpush1.msra.mxu0 %v695
          %1364 = vmatprep.subr.mxu0 %v700
          %1365 = vmatpush1.msra.mxu0 %v699
          %1366 = vmatprep.subr.mxu0 %v704
          %1367 = vmatpush1.msra.mxu0 %v703
          %1368 = vmatprep.subr.mxu0 %v708
          %1369 = vmatpush1.msra.mxu0 %v707
          %1370 = vmatprep.subr.mxu0 %v712
          %1371 = vmatpush1.msra.mxu0 %v711
          %1372 = vmatprep.subr.mxu0 %v716
          %1373 = vmatpush1.msra.mxu0 %v715
          %1374 = vmatprep.subr.mxu0 %v720
          %1375 = vmatpush1.msra.mxu0 %v719
          %1376 = vmatprep.subr.mxu0 %v724
          %1377 = vmatpush1.msra.mxu0 %v723
          %1378 = vmatprep.subr.mxu0 %v728
          %1379 = vmatpush1.msra.mxu0 %v727
          %1380 = vmatprep.subr.mxu0 %v732
          %1381 = vmatpush1.msra.mxu0 %v731
          %1382 = vmatprep.subr.mxu0 0.0
          %1383 = vmatpush1.msra.mxu0 0.0
          %1384 = vmatprep.subr.mxu0 0.0
          %1385 = vmatpush1.msra.mxu0 0.0
          %1386 = vmatprep.subr.mxu0 0.0
          %1387 = vmatpush1.msra.mxu0 0.0
          %1388 = vmatprep.subr.mxu0 0.0
          %1389 = vmatpush1.msra.mxu0 0.0
          %1390 = vmatprep.subr.mxu0 0.0
          %1391 = vmatpush1.msra.mxu0 0.0
          %1392 = vmatprep.subr.mxu0 0.0
          %1393 = vmatpush1.msra.mxu0 0.0
          %1394 = vmatprep.subr.mxu0 0.0
          %1395 = vmatpush1.msra.mxu0 0.0
          %1396 = vmatprep.subr.mxu0 0.0
          %1397 = vmatpush1.msra.mxu0 0.0
          %1398 = vmatprep.subr.mxu0 0.0
          %1399 = vmatpush1.msra.mxu0 0.0
          %1400 = vmatprep.subr.mxu0 0.0
          %1401 = vmatpush1.msra.mxu0 0.0
          %1402 = vmatprep.subr.mxu0 0.0
          %1403 = vmatpush1.msra.mxu0 0.0
          %1404 = vmatprep.subr.mxu0 0.0
          %1405 = vmatpush1.msra.mxu0 0.0
          %1406 = vmatprep.subr.mxu0 0.0
          %1407 = vmatpush1.msra.mxu0 0.0
          %1408 = vmatprep.subr.mxu0 0.0
          %1409 = vmatpush1.msra.mxu0 0.0
          %1410 = vmatprep.subr.mxu0 0.0
          %1411 = vmatpush1.msra.mxu0 0.0
          %1412 = vmatprep.subr.mxu0 0.0
          %1413 = vmatpush1.msra.mxu0 0.0
          %1414 = vmatprep.mubr.f32.mxu0 0.0
          %1415 = vmatmul.mubr.f32.gmra.mrb[0].mxu0 %v1270
          %v1416 = vpop.f32.mrb[0].mxu0
          %v1417 = vadd.f32 %v1277, %v1416
          %v1418 = vpop.f32.mrb[0].mxu0
          %v1419 = vadd.f32 %v1278, %v1418
          %1420 = vdwg.mxu0
          %v1421 = vxor.u32 %v1346, 2147483648
          %v1422 = vxor.u32 %v1348, 2147483648
          %v1423 = vmul.f32 %v1421, 1.442695
          %v1424 = vpow.pop %v1423
          %v1425 = vmul.f32 %v1422, 1.442695
          %v1426 = vpow.pop %v1425
          %v1427 = vadd.f32 %v1424, 1.0
          %v1428 = vadd.f32 %v1426, 1.0
          %v1429 = vrcp.pop %v1427
          %v1430 = vmul.f32 1.0, %v1429
          %v1431 = vrcp.pop %v1428
          %v1432 = vmul.f32 1.0, %v1431
          %v1433 = vtanh.pop %v1417
          %v1434 = vxor.u32 %v1419, 2147483648
          %v1435 = vmul.f32 %v1434, 1.442695
          %v1436 = vpow.pop %v1435
          %v1437 = vadd.f32 %v1436, 1.0
          %v1438 = vrcp.pop %v1437
          %v1439 = vmul.f32 1.0, %v1438
          %v1440 = vmul.f32 %v1432, %v1271
          %v1441 = vmul.f32 %v1430, %v1433
          %v1442 = vadd.f32 %v1440, %v1441
          %v1443 = vtanh.pop %v1442
          %v1444 = vmul.f32 %v1439, %v1443
          %p1445 = scmp.gt.s32.totalorder %s656, 3
          %s1446 = scalar_select %p1445, 1, 0
          %v1447 = vstv %s1446
          %vm1448 = vcmp.eq.s32.totalorder %v1447, 1
          %v1449 = vsel %vm1448, %v1444, %v1270
          %v1450 = vsel %vm1448, %v1442, %v1271
          %s1451 = sadd.s32 16, %s735
          %s1452 = smul.addr %s1451, 8
          %s1453 = scalar_lea.vmem [#allocation4], %s1452
          %v1454 = vld [vmem:[%s1453] sm:$0xff]
          %v1455 = vld [vmem:[%s1453 + $0x8] sm:$0xff]
          %v1456 = vld [vmem:[%s1453 + $0x10] sm:$0xff]
          %v1457 = vld [vmem:[%s1453 + $0x18] sm:$0xff]
          %1458 = vmatprep.subr.mxu0 %v670
          %1459 = vmatpush1.msra.mxu0 %v669
          %1460 = vmatprep.subr.mxu0 %v674
          %1461 = vmatpush1.msra.mxu0 %v673
          %1462 = vmatprep.subr.mxu0 %v678
          %1463 = vmatpush1.msra.mxu0 %v677
          %1464 = vmatprep.subr.mxu0 %v682
          %1465 = vmatpush1.msra.mxu0 %v681
          %1466 = vmatprep.subr.mxu0 %v686
          %1467 = vmatpush1.msra.mxu0 %v685
          %1468 = vmatprep.subr.mxu0 %v690
          %1469 = vmatpush1.msra.mxu0 %v689
          %1470 = vmatprep.subr.mxu0 %v694
          %1471 = vmatpush1.msra.mxu0 %v693
          %1472 = vmatprep.subr.mxu0 %v698
          %1473 = vmatpush1.msra.mxu0 %v697
          %1474 = vmatprep.subr.mxu0 %v702
          %1475 = vmatpush1.msra.mxu0 %v701
          %1476 = vmatprep.subr.mxu0 %v706
          %1477 = vmatpush1.msra.mxu0 %v705
          %1478 = vmatprep.subr.mxu0 %v710
          %1479 = vmatpush1.msra.mxu0 %v709
          %1480 = vmatprep.subr.mxu0 %v714
          %1481 = vmatpush1.msra.mxu0 %v713
          %1482 = vmatprep.subr.mxu0 %v718
          %1483 = vmatpush1.msra.mxu0 %v717
          %1484 = vmatprep.subr.mxu0 %v722
          %1485 = vmatpush1.msra.mxu0 %v721
          %1486 = vmatprep.subr.mxu0 %v726
          %1487 = vmatpush1.msra.mxu0 %v725
          %1488 = vmatprep.subr.mxu0 %v730
          %1489 = vmatpush1.msra.mxu0 %v729
          %1490 = vmatprep.subr.mxu0 0.0
          %1491 = vmatpush1.msra.mxu0 0.0
          %1492 = vmatprep.subr.mxu0 0.0
          %1493 = vmatpush1.msra.mxu0 0.0
          %1494 = vmatprep.subr.mxu0 0.0
          %1495 = vmatpush1.msra.mxu0 0.0
          %1496 = vmatprep.subr.mxu0 0.0
          %1497 = vmatpush1.msra.mxu0 0.0
          %1498 = vmatprep.subr.mxu0 0.0
          %1499 = vmatpush1.msra.mxu0 0.0
          %1500 = vmatprep.subr.mxu0 0.0
          %1501 = vmatpush1.msra.mxu0 0.0
          %1502 = vmatprep.subr.mxu0 0.0
          %1503 = vmatpush1.msra.mxu0 0.0
          %1504 = vmatprep.subr.mxu0 0.0
          %1505 = vmatpush1.msra.mxu0 0.0
          %1506 = vmatprep.subr.mxu0 0.0
          %1507 = vmatpush1.msra.mxu0 0.0
          %1508 = vmatprep.subr.mxu0 0.0
          %1509 = vmatpush1.msra.mxu0 0.0
          %1510 = vmatprep.subr.mxu0 0.0
          %1511 = vmatpush1.msra.mxu0 0.0
          %1512 = vmatprep.subr.mxu0 0.0
          %1513 = vmatpush1.msra.mxu0 0.0
          %1514 = vmatprep.subr.mxu0 0.0
          %1515 = vmatpush1.msra.mxu0 0.0
          %1516 = vmatprep.subr.mxu0 0.0
          %1517 = vmatpush1.msra.mxu0 0.0
          %1518 = vmatprep.subr.mxu0 0.0
          %1519 = vmatpush1.msra.mxu0 0.0
          %1520 = vmatprep.subr.mxu0 0.0
          %1521 = vmatpush1.msra.mxu0 0.0
          %1522 = vmatprep.mubr.f32.mxu0 0.0
          %1523 = vmatmul.mubr.f32.gmra.mrb[0].mxu0 %v1449
          %v1524 = vpop.f32.mrb[0].mxu0
          %v1525 = vadd.f32 %v1454, %v1524
          %v1526 = vpop.f32.mrb[0].mxu0
          %v1527 = vadd.f32 %v1455, %v1526
          %1528 = vdwg.mxu0
          %1529 = vmatprep.subr.mxu0 %v672
          %1530 = vmatpush1.msra.mxu0 %v671
          %1531 = vmatprep.subr.mxu0 %v676
          %1532 = vmatpush1.msra.mxu0 %v675
          %1533 = vmatprep.subr.mxu0 %v680
          %1534 = vmatpush1.msra.mxu0 %v679
          %1535 = vmatprep.subr.mxu0 %v684
          %1536 = vmatpush1.msra.mxu0 %v683
          %1537 = vmatprep.subr.mxu0 %v688
          %1538 = vmatpush1.msra.mxu0 %v687
          %1539 = vmatprep.subr.mxu0 %v692
          %1540 = vmatpush1.msra.mxu0 %v691
          %1541 = vmatprep.subr.mxu0 %v696
          %1542 = vmatpush1.msra.mxu0 %v695
          %1543 = vmatprep.subr.mxu0 %v700
          %1544 = vmatpush1.msra.mxu0 %v699
          %1545 = vmatprep.subr.mxu0 %v704
          %1546 = vmatpush1.msra.mxu0 %v703
          %1547 = vmatprep.subr.mxu0 %v708
          %1548 = vmatpush1.msra.mxu0 %v707
          %1549 = vmatprep.subr.mxu0 %v712
          %1550 = vmatpush1.msra.mxu0 %v711
          %1551 = vmatprep.subr.mxu0 %v716
          %1552 = vmatpush1.msra.mxu0 %v715
          %1553 = vmatprep.subr.mxu0 %v720
          %1554 = vmatpush1.msra.mxu0 %v719
          %1555 = vmatprep.subr.mxu0 %v724
          %1556 = vmatpush1.msra.mxu0 %v723
          %1557 = vmatprep.subr.mxu0 %v728
          %1558 = vmatpush1.msra.mxu0 %v727
          %1559 = vmatprep.subr.mxu0 %v732
          %1560 = vmatpush1.msra.mxu0 %v731
          %1561 = vmatprep.subr.mxu0 0.0
          %1562 = vmatpush1.msra.mxu0 0.0
          %1563 = vmatprep.subr.mxu0 0.0
          %1564 = vmatpush1.msra.mxu0 0.0
          %1565 = vmatprep.subr.mxu0 0.0
          %1566 = vmatpush1.msra.mxu0 0.0
          %1567 = vmatprep.subr.mxu0 0.0
          %1568 = vmatpush1.msra.mxu0 0.0
          %1569 = vmatprep.subr.mxu0 0.0
          %1570 = vmatpush1.msra.mxu0 0.0
          %1571 = vmatprep.subr.mxu0 0.0
          %1572 = vmatpush1.msra.mxu0 0.0
          %1573 = vmatprep.subr.mxu0 0.0
          %1574 = vmatpush1.msra.mxu0 0.0
          %1575 = vmatprep.subr.mxu0 0.0
          %1576 = vmatpush1.msra.mxu0 0.0
          %1577 = vmatprep.subr.mxu0 0.0
          %1578 = vmatpush1.msra.mxu0 0.0
          %1579 = vmatprep.subr.mxu0 0.0
          %1580 = vmatpush1.msra.mxu0 0.0
          %1581 = vmatprep.subr.mxu0 0.0
          %1582 = vmatpush1.msra.mxu0 0.0
          %1583 = vmatprep.subr.mxu0 0.0
          %1584 = vmatpush1.msra.mxu0 0.0
          %1585 = vmatprep.subr.mxu0 0.0
          %1586 = vmatpush1.msra.mxu0 0.0
          %1587 = vmatprep.subr.mxu0 0.0
          %1588 = vmatpush1.msra.mxu0 0.0
          %1589 = vmatprep.subr.mxu0 0.0
          %1590 = vmatpush1.msra.mxu0 0.0
          %1591 = vmatprep.subr.mxu0 0.0
          %1592 = vmatpush1.msra.mxu0 0.0
          %1593 = vmatprep.mubr.f32.mxu0 0.0
          %1594 = vmatmul.mubr.f32.gmra.mrb[0].mxu0 %v1449
          %v1595 = vpop.f32.mrb[0].mxu0
          %v1596 = vadd.f32 %v1456, %v1595
          %v1597 = vpop.f32.mrb[0].mxu0
          %v1598 = vadd.f32 %v1457, %v1597
          %1599 = vdwg.mxu0
          %v1600 = vxor.u32 %v1525, 2147483648
          %v1601 = vxor.u32 %v1527, 2147483648
          %v1602 = vmul.f32 %v1600, 1.442695
          %v1603 = vpow.pop %v1602
          %v1604 = vmul.f32 %v1601, 1.442695
          %v1605 = vpow.pop %v1604
          %v1606 = vadd.f32 %v1603, 1.0
          %v1607 = vadd.f32 %v1605, 1.0
          %v1608 = vrcp.pop %v1606
          %v1609 = vmul.f32 1.0, %v1608
          %v1610 = vrcp.pop %v1607
          %v1611 = vmul.f32 1.0, %v1610
          %v1612 = vtanh.pop %v1596
          %v1613 = vxor.u32 %v1598, 2147483648
          %v1614 = vmul.f32 %v1613, 1.442695
          %v1615 = vpow.pop %v1614
          %v1616 = vadd.f32 %v1615, 1.0
          %v1617 = vrcp.pop %v1616
          %v1618 = vmul.f32 1.0, %v1617
          %v1619 = vmul.f32 %v1611, %v1450
          %v1620 = vmul.f32 %v1609, %v1612
          %v1621 = vadd.f32 %v1619, %v1620
          %v1622 = vtanh.pop %v1621
          %v1623 = vmul.f32 %v1618, %v1622
          %p1624 = scmp.gt.s32.totalorder %s656, 4
          %s1625 = scalar_select %p1624, 1, 0
          %v1626 = vstv %s1625
          %vm1627 = vcmp.eq.s32.totalorder %v1626, 1
          %v1628 = vsel %vm1627, %v1623, %v1449
          %v1629 = vsel %vm1627, %v1621, %v1450
          %s1630 = sadd.s32 20, %s735
          %s1631 = smul.addr %s1630, 8
          %s1632 = scalar_lea.vmem [#allocation4], %s1631
          %v1633 = vld [vmem:[%s1632] sm:$0xff]
          %v1634 = vld [vmem:[%s1632 + $0x8] sm:$0xff]
          %v1635 = vld [vmem:[%s1632 + $0x10] sm:$0xff]
          %v1636 = vld [vmem:[%s1632 + $0x18] sm:$0xff]
          %1637 = vmatprep.subr.mxu0 %v670
          %1638 = vmatpush1.msra.mxu0 %v669
          %1639 = vmatprep.subr.mxu0 %v674
          %1640 = vmatpush1.msra.mxu0 %v673
          %1641 = vmatprep.subr.mxu0 %v678
          %1642 = vmatpush1.msra.mxu0 %v677
          %1643 = vmatprep.subr.mxu0 %v682
          %1644 = vmatpush1.msra.mxu0 %v681
          %1645 = vmatprep.subr.mxu0 %v686
          %1646 = vmatpush1.msra.mxu0 %v685
          %1647 = vmatprep.subr.mxu0 %v690
          %1648 = vmatpush1.msra.mxu0 %v689
          %1649 = vmatprep.subr.mxu0 %v694
          %1650 = vmatpush1.msra.mxu0 %v693
          %1651 = vmatprep.subr.mxu0 %v698
          %1652 = vmatpush1.msra.mxu0 %v697
          %1653 = vmatprep.subr.mxu0 %v702
          %1654 = vmatpush1.msra.mxu0 %v701
          %1655 = vmatprep.subr.mxu0 %v706
          %1656 = vmatpush1.msra.mxu0 %v705
          %1657 = vmatprep.subr.mxu0 %v710
          %1658 = vmatpush1.msra.mxu0 %v709
          %1659 = vmatprep.subr.mxu0 %v714
          %1660 = vmatpush1.msra.mxu0 %v713
          %1661 = vmatprep.subr.mxu0 %v718
          %1662 = vmatpush1.msra.mxu0 %v717
          %1663 = vmatprep.subr.mxu0 %v722
          %1664 = vmatpush1.msra.mxu0 %v721
          %1665 = vmatprep.subr.mxu0 %v726
          %1666 = vmatpush1.msra.mxu0 %v725
          %1667 = vmatprep.subr.mxu0 %v730
          %1668 = vmatpush1.msra.mxu0 %v729
          %1669 = vmatprep.subr.mxu0 0.0
          %1670 = vmatpush1.msra.mxu0 0.0
          %1671 = vmatprep.subr.mxu0 0.0
          %1672 = vmatpush1.msra.mxu0 0.0
          %1673 = vmatprep.subr.mxu0 0.0
          %1674 = vmatpush1.msra.mxu0 0.0
          %1675 = vmatprep.subr.mxu0 0.0
          %1676 = vmatpush1.msra.mxu0 0.0
          %1677 = vmatprep.subr.mxu0 0.0
          %1678 = vmatpush1.msra.mxu0 0.0
          %1679 = vmatprep.subr.mxu0 0.0
          %1680 = vmatpush1.msra.mxu0 0.0
          %1681 = vmatprep.subr.mxu0 0.0
          %1682 = vmatpush1.msra.mxu0 0.0
          %1683 = vmatprep.subr.mxu0 0.0
          %1684 = vmatpush1.msra.mxu0 0.0
          %1685 = vmatprep.subr.mxu0 0.0
          %1686 = vmatpush1.msra.mxu0 0.0
          %1687 = vmatprep.subr.mxu0 0.0
          %1688 = vmatpush1.msra.mxu0 0.0
          %1689 = vmatprep.subr.mxu0 0.0
          %1690 = vmatpush1.msra.mxu0 0.0
          %1691 = vmatprep.subr.mxu0 0.0
          %1692 = vmatpush1.msra.mxu0 0.0
          %1693 = vmatprep.subr.mxu0 0.0
          %1694 = vmatpush1.msra.mxu0 0.0
          %1695 = vmatprep.subr.mxu0 0.0
          %1696 = vmatpush1.msra.mxu0 0.0
          %1697 = vmatprep.subr.mxu0 0.0
          %1698 = vmatpush1.msra.mxu0 0.0
          %1699 = vmatprep.subr.mxu0 0.0
          %1700 = vmatpush1.msra.mxu0 0.0
          %1701 = vmatprep.mubr.f32.mxu0 0.0
          %1702 = vmatmul.mubr.f32.gmra.mrb[0].mxu0 %v1628
          %v1703 = vpop.f32.mrb[0].mxu0
          %v1704 = vadd.f32 %v1633, %v1703
          %v1705 = vpop.f32.mrb[0].mxu0
          %v1706 = vadd.f32 %v1634, %v1705
          %1707 = vdwg.mxu0
          %1708 = vmatprep.subr.mxu0 %v672
          %1709 = vmatpush1.msra.mxu0 %v671
          %1710 = vmatprep.subr.mxu0 %v676
          %1711 = vmatpush1.msra.mxu0 %v675
          %1712 = vmatprep.subr.mxu0 %v680
          %1713 = vmatpush1.msra.mxu0 %v679
          %1714 = vmatprep.subr.mxu0 %v684
          %1715 = vmatpush1.msra.mxu0 %v683
          %1716 = vmatprep.subr.mxu0 %v688
          %1717 = vmatpush1.msra.mxu0 %v687
          %1718 = vmatprep.subr.mxu0 %v692
          %1719 = vmatpush1.msra.mxu0 %v691
          %1720 = vmatprep.subr.mxu0 %v696
          %1721 = vmatpush1.msra.mxu0 %v695
          %1722 = vmatprep.subr.mxu0 %v700
          %1723 = vmatpush1.msra.mxu0 %v699
          %1724 = vmatprep.subr.mxu0 %v704
          %1725 = vmatpush1.msra.mxu0 %v703
          %1726 = vmatprep.subr.mxu0 %v708
          %1727 = vmatpush1.msra.mxu0 %v707
          %1728 = vmatprep.subr.mxu0 %v712
          %1729 = vmatpush1.msra.mxu0 %v711
          %1730 = vmatprep.subr.mxu0 %v716
          %1731 = vmatpush1.msra.mxu0 %v715
          %1732 = vmatprep.subr.mxu0 %v720
          %1733 = vmatpush1.msra.mxu0 %v719
          %1734 = vmatprep.subr.mxu0 %v724
          %1735 = vmatpush1.msra.mxu0 %v723
          %1736 = vmatprep.subr.mxu0 %v728
          %1737 = vmatpush1.msra.mxu0 %v727
          %1738 = vmatprep.subr.mxu0 %v732
          %1739 = vmatpush1.msra.mxu0 %v731
          %1740 = vmatprep.subr.mxu0 0.0
          %1741 = vmatpush1.msra.mxu0 0.0
          %1742 = vmatprep.subr.mxu0 0.0
          %1743 = vmatpush1.msra.mxu0 0.0
          %1744 = vmatprep.subr.mxu0 0.0
          %1745 = vmatpush1.msra.mxu0 0.0
          %1746 = vmatprep.subr.mxu0 0.0
          %1747 = vmatpush1.msra.mxu0 0.0
          %1748 = vmatprep.subr.mxu0 0.0
          %1749 = vmatpush1.msra.mxu0 0.0
          %1750 = vmatprep.subr.mxu0 0.0
          %1751 = vmatpush1.msra.mxu0 0.0
          %1752 = vmatprep.subr.mxu0 0.0
          %1753 = vmatpush1.msra.mxu0 0.0
          %1754 = vmatprep.subr.mxu0 0.0
          %1755 = vmatpush1.msra.mxu0 0.0
          %1756 = vmatprep.subr.mxu0 0.0
          %1757 = vmatpush1.msra.mxu0 0.0
          %1758 = vmatprep.subr.mxu0 0.0
          %1759 = vmatpush1.msra.mxu0 0.0
          %1760 = vmatprep.subr.mxu0 0.0
          %1761 = vmatpush1.msra.mxu0 0.0
          %1762 = vmatprep.subr.mxu0 0.0
          %1763 = vmatpush1.msra.mxu0 0.0
          %1764 = vmatprep.subr.mxu0 0.0
          %1765 = vmatpush1.msra.mxu0 0.0
          %1766 = vmatprep.subr.mxu0 0.0
          %1767 = vmatpush1.msra.mxu0 0.0
          %1768 = vmatprep.subr.mxu0 0.0
          %1769 = vmatpush1.msra.mxu0 0.0
          %1770 = vmatprep.subr.mxu0 0.0
          %1771 = vmatpush1.msra.mxu0 0.0
          %1772 = vmatprep.mubr.f32.mxu0 0.0
          %1773 = vmatmul.mubr.f32.gmra.mrb[0].mxu0 %v1628
          %v1774 = vpop.f32.mrb[0].mxu0
          %v1775 = vadd.f32 %v1635, %v1774
          %v1776 = vpop.f32.mrb[0].mxu0
          %v1777 = vadd.f32 %v1636, %v1776
          %1778 = vdwg.mxu0
          %v1779 = vxor.u32 %v1704, 2147483648
          %v1780 = vxor.u32 %v1706, 2147483648
          %v1781 = vmul.f32 %v1779, 1.442695
          %v1782 = vpow.pop %v1781
          %v1783 = vmul.f32 %v1780, 1.442695
          %v1784 = vpow.pop %v1783
          %v1785 = vadd.f32 %v1782, 1.0
          %v1786 = vadd.f32 %v1784, 1.0
          %v1787 = vrcp.pop %v1785
          %v1788 = vmul.f32 1.0, %v1787
          %v1789 = vrcp.pop %v1786
          %v1790 = vmul.f32 1.0, %v1789
          %v1791 = vtanh.pop %v1775
          %v1792 = vxor.u32 %v1777, 2147483648
          %v1793 = vmul.f32 %v1792, 1.442695
          %v1794 = vpow.pop %v1793
          %v1795 = vadd.f32 %v1794, 1.0
          %v1796 = vrcp.pop %v1795
          %v1797 = vmul.f32 1.0, %v1796
          %v1798 = vmul.f32 %v1790, %v1629
          %v1799 = vmul.f32 %v1788, %v1791
          %v1800 = vadd.f32 %v1798, %v1799
          %v1801 = vtanh.pop %v1800
          %v1802 = vmul.f32 %v1797, %v1801
          %p1803 = scmp.gt.s32.totalorder %s656, 5
          %s1804 = scalar_select %p1803, 1, 0
          %v1805 = vstv %s1804
          %vm1806 = vcmp.eq.s32.totalorder %v1805, 1
          %v1807 = vsel %vm1806, %v1802, %v1628
          %v1808 = vsel %vm1806, %v1800, %v1629
          %s1809 = sadd.s32 24, %s735
          %s1810 = smul.addr %s1809, 8
          %s1811 = scalar_lea.vmem [#allocation4], %s1810
          %v1812 = vld [vmem:[%s1811] sm:$0xff]
          %v1813 = vld [vmem:[%s1811 + $0x8] sm:$0xff]
          %v1814 = vld [vmem:[%s1811 + $0x10] sm:$0xff]
          %v1815 = vld [vmem:[%s1811 + $0x18] sm:$0xff]
          %1816 = vmatprep.subr.mxu0 %v670
          %1817 = vmatpush1.msra.mxu0 %v669
          %1818 = vmatprep.subr.mxu0 %v674
          %1819 = vmatpush1.msra.mxu0 %v673
          %1820 = vmatprep.subr.mxu0 %v678
          %1821 = vmatpush1.msra.mxu0 %v677
          %1822 = vmatprep.subr.mxu0 %v682
          %1823 = vmatpush1.msra.mxu0 %v681
          %1824 = vmatprep.subr.mxu0 %v686
          %1825 = vmatpush1.msra.mxu0 %v685
          %1826 = vmatprep.subr.mxu0 %v690
          %1827 = vmatpush1.msra.mxu0 %v689
          %1828 = vmatprep.subr.mxu0 %v694
          %1829 = vmatpush1.msra.mxu0 %v693
          %1830 = vmatprep.subr.mxu0 %v698
          %1831 = vmatpush1.msra.mxu0 %v697
          %1832 = vmatprep.subr.mxu0 %v702
          %1833 = vmatpush1.msra.mxu0 %v701
          %1834 = vmatprep.subr.mxu0 %v706
          %1835 = vmatpush1.msra.mxu0 %v705
          %1836 = vmatprep.subr.mxu0 %v710
          %1837 = vmatpush1.msra.mxu0 %v709
          %1838 = vmatprep.subr.mxu0 %v714
          %1839 = vmatpush1.msra.mxu0 %v713
          %1840 = vmatprep.subr.mxu0 %v718
          %1841 = vmatpush1.msra.mxu0 %v717
          %1842 = vmatprep.subr.mxu0 %v722
          %1843 = vmatpush1.msra.mxu0 %v721
          %1844 = vmatprep.subr.mxu0 %v726
          %1845 = vmatpush1.msra.mxu0 %v725
          %1846 = vmatprep.subr.mxu0 %v730
          %1847 = vmatpush1.msra.mxu0 %v729
          %1848 = vmatprep.subr.mxu0 0.0
          %1849 = vmatpush1.msra.mxu0 0.0
          %1850 = vmatprep.subr.mxu0 0.0
          %1851 = vmatpush1.msra.mxu0 0.0
          %1852 = vmatprep.subr.mxu0 0.0
          %1853 = vmatpush1.msra.mxu0 0.0
          %1854 = vmatprep.subr.mxu0 0.0
          %1855 = vmatpush1.msra.mxu0 0.0
          %1856 = vmatprep.subr.mxu0 0.0
          %1857 = vmatpush1.msra.mxu0 0.0
          %1858 = vmatprep.subr.mxu0 0.0
          %1859 = vmatpush1.msra.mxu0 0.0
          %1860 = vmatprep.subr.mxu0 0.0
          %1861 = vmatpush1.msra.mxu0 0.0
          %1862 = vmatprep.subr.mxu0 0.0
          %1863 = vmatpush1.msra.mxu0 0.0
          %1864 = vmatprep.subr.mxu0 0.0
          %1865 = vmatpush1.msra.mxu0 0.0
          %1866 = vmatprep.subr.mxu0 0.0
          %1867 = vmatpush1.msra.mxu0 0.0
          %1868 = vmatprep.subr.mxu0 0.0
          %1869 = vmatpush1.msra.mxu0 0.0
          %1870 = vmatprep.subr.mxu0 0.0
          %1871 = vmatpush1.msra.mxu0 0.0
          %1872 = vmatprep.subr.mxu0 0.0
          %1873 = vmatpush1.msra.mxu0 0.0
          %1874 = vmatprep.subr.mxu0 0.0
          %1875 = vmatpush1.msra.mxu0 0.0
          %1876 = vmatprep.subr.mxu0 0.0
          %1877 = vmatpush1.msra.mxu0 0.0
          %1878 = vmatprep.subr.mxu0 0.0
          %1879 = vmatpush1.msra.mxu0 0.0
          %1880 = vmatprep.mubr.f32.mxu0 0.0
          %1881 = vmatmul.mubr.f32.gmra.mrb[0].mxu0 %v1807
          %v1882 = vpop.f32.mrb[0].mxu0
          %v1883 = vadd.f32 %v1812, %v1882
          %v1884 = vpop.f32.mrb[0].mxu0
          %v1885 = vadd.f32 %v1813, %v1884
          %1886 = vdwg.mxu0
          %1887 = vmatprep.subr.mxu0 %v672
          %1888 = vmatpush1.msra.mxu0 %v671
          %1889 = vmatprep.subr.mxu0 %v676
          %1890 = vmatpush1.msra.mxu0 %v675
          %1891 = vmatprep.subr.mxu0 %v680
          %1892 = vmatpush1.msra.mxu0 %v679
          %1893 = vmatprep.subr.mxu0 %v684
          %1894 = vmatpush1.msra.mxu0 %v683
          %1895 = vmatprep.subr.mxu0 %v688
          %1896 = vmatpush1.msra.mxu0 %v687
          %1897 = vmatprep.subr.mxu0 %v692
          %1898 = vmatpush1.msra.mxu0 %v691
          %1899 = vmatprep.subr.mxu0 %v696
          %1900 = vmatpush1.msra.mxu0 %v695
          %1901 = vmatprep.subr.mxu0 %v700
          %1902 = vmatpush1.msra.mxu0 %v699
          %1903 = vmatprep.subr.mxu0 %v704
          %1904 = vmatpush1.msra.mxu0 %v703
          %1905 = vmatprep.subr.mxu0 %v708
          %1906 = vmatpush1.msra.mxu0 %v707
          %1907 = vmatprep.subr.mxu0 %v712
          %1908 = vmatpush1.msra.mxu0 %v711
          %1909 = vmatprep.subr.mxu0 %v716
          %1910 = vmatpush1.msra.mxu0 %v715
          %1911 = vmatprep.subr.mxu0 %v720
          %1912 = vmatpush1.msra.mxu0 %v719
          %1913 = vmatprep.subr.mxu0 %v724
          %1914 = vmatpush1.msra.mxu0 %v723
          %1915 = vmatprep.subr.mxu0 %v728
          %1916 = vmatpush1.msra.mxu0 %v727
          %1917 = vmatprep.subr.mxu0 %v732
          %1918 = vmatpush1.msra.mxu0 %v731
          %1919 = vmatprep.subr.mxu0 0.0
          %1920 = vmatpush1.msra.mxu0 0.0
          %1921 = vmatprep.subr.mxu0 0.0
          %1922 = vmatpush1.msra.mxu0 0.0
          %1923 = vmatprep.subr.mxu0 0.0
          %1924 = vmatpush1.msra.mxu0 0.0
          %1925 = vmatprep.subr.mxu0 0.0
          %1926 = vmatpush1.msra.mxu0 0.0
          %1927 = vmatprep.subr.mxu0 0.0
          %1928 = vmatpush1.msra.mxu0 0.0
          %1929 = vmatprep.subr.mxu0 0.0
          %1930 = vmatpush1.msra.mxu0 0.0
          %1931 = vmatprep.subr.mxu0 0.0
          %1932 = vmatpush1.msra.mxu0 0.0
          %1933 = vmatprep.subr.mxu0 0.0
          %1934 = vmatpush1.msra.mxu0 0.0
          %1935 = vmatprep.subr.mxu0 0.0
          %1936 = vmatpush1.msra.mxu0 0.0
          %1937 = vmatprep.subr.mxu0 0.0
          %1938 = vmatpush1.msra.mxu0 0.0
          %1939 = vmatprep.subr.mxu0 0.0
          %1940 = vmatpush1.msra.mxu0 0.0
          %1941 = vmatprep.subr.mxu0 0.0
          %1942 = vmatpush1.msra.mxu0 0.0
          %1943 = vmatprep.subr.mxu0 0.0
          %1944 = vmatpush1.msra.mxu0 0.0
          %1945 = vmatprep.subr.mxu0 0.0
          %1946 = vmatpush1.msra.mxu0 0.0
          %1947 = vmatprep.subr.mxu0 0.0
          %1948 = vmatpush1.msra.mxu0 0.0
          %1949 = vmatprep.subr.mxu0 0.0
          %1950 = vmatpush1.msra.mxu0 0.0
          %1951 = vmatprep.mubr.f32.mxu0 0.0
          %1952 = vmatmul.mubr.f32.gmra.mrb[0].mxu0 %v1807
          %v1953 = vpop.f32.mrb[0].mxu0
          %v1954 = vadd.f32 %v1814, %v1953
          %v1955 = vpop.f32.mrb[0].mxu0
          %v1956 = vadd.f32 %v1815, %v1955
          %1957 = vdwg.mxu0
          %v1958 = vxor.u32 %v1883, 2147483648
          %v1959 = vxor.u32 %v1885, 2147483648
          %v1960 = vmul.f32 %v1958, 1.442695
          %v1961 = vpow.pop %v1960
          %v1962 = vmul.f32 %v1959, 1.442695
          %v1963 = vpow.pop %v1962
          %v1964 = vadd.f32 %v1961, 1.0
          %v1965 = vadd.f32 %v1963, 1.0
          %v1966 = vrcp.pop %v1964
          %v1967 = vmul.f32 1.0, %v1966
          %v1968 = vrcp.pop %v1965
          %v1969 = vmul.f32 1.0, %v1968
          %v1970 = vtanh.pop %v1954
          %v1971 = vxor.u32 %v1956, 2147483648
          %v1972 = vmul.f32 %v1971, 1.442695
          %v1973 = vpow.pop %v1972
          %v1974 = vadd.f32 %v1973, 1.0
          %v1975 = vrcp.pop %v1974
          %v1976 = vmul.f32 1.0, %v1975
          %v1977 = vmul.f32 %v1969, %v1808
          %v1978 = vmul.f32 %v1967, %v1970
          %v1979 = vadd.f32 %v1977, %v1978
          %v1980 = vtanh.pop %v1979
          %v1981 = vmul.f32 %v1976, %v1980
          %p1982 = scmp.gt.s32.totalorder %s656, 6
          %s1983 = scalar_select %p1982, 1, 0
          %v1984 = vstv %s1983
          %vm1985 = vcmp.eq.s32.totalorder %v1984, 1
          %v1986 = vsel %vm1985, %v1981, %v1807
          %v1987 = vsel %vm1985, %v1979, %v1808
          %s1988 = sadd.s32 28, %s735
          %s1989 = smul.addr %s1988, 8
          %s1990 = scalar_lea.vmem [#allocation4], %s1989
          %v1991 = vld [vmem:[%s1990] sm:$0xff]
          %v1992 = vld [vmem:[%s1990 + $0x8] sm:$0xff]
          %v1993 = vld [vmem:[%s1990 + $0x10] sm:$0xff]
          %v1994 = vld [vmem:[%s1990 + $0x18] sm:$0xff]
          %1995 = vmatprep.subr.mxu0 %v670
          %1996 = vmatpush1.msra.mxu0 %v669
          %1997 = vmatprep.subr.mxu0 %v674
          %1998 = vmatpush1.msra.mxu0 %v673
          %1999 = vmatprep.subr.mxu0 %v678
          %2000 = vmatpush1.msra.mxu0 %v677
          %2001 = vmatprep.subr.mxu0 %v682
          %2002 = vmatpush1.msra.mxu0 %v681
          %2003 = vmatprep.subr.mxu0 %v686
          %2004 = vmatpush1.msra.mxu0 %v685
          %2005 = vmatprep.subr.mxu0 %v690
          %2006 = vmatpush1.msra.mxu0 %v689
          %2007 = vmatprep.subr.mxu0 %v694
          %2008 = vmatpush1.msra.mxu0 %v693
          %2009 = vmatprep.subr.mxu0 %v698
          %2010 = vmatpush1.msra.mxu0 %v697
          %2011 = vmatprep.subr.mxu0 %v702
          %2012 = vmatpush1.msra.mxu0 %v701
          %2013 = vmatprep.subr.mxu0 %v706
          %2014 = vmatpush1.msra.mxu0 %v705
          %2015 = vmatprep.subr.mxu0 %v710
          %2016 = vmatpush1.msra.mxu0 %v709
          %2017 = vmatprep.subr.mxu0 %v714
          %2018 = vmatpush1.msra.mxu0 %v713
          %2019 = vmatprep.subr.mxu0 %v718
          %2020 = vmatpush1.msra.mxu0 %v717
          %2021 = vmatprep.subr.mxu0 %v722
          %2022 = vmatpush1.msra.mxu0 %v721
          %2023 = vmatprep.subr.mxu0 %v726
          %2024 = vmatpush1.msra.mxu0 %v725
          %2025 = vmatprep.subr.mxu0 %v730
          %2026 = vmatpush1.msra.mxu0 %v729
          %2027 = vmatprep.subr.mxu0 0.0
          %2028 = vmatpush1.msra.mxu0 0.0
          %2029 = vmatprep.subr.mxu0 0.0
          %2030 = vmatpush1.msra.mxu0 0.0
          %2031 = vmatprep.subr.mxu0 0.0
          %2032 = vmatpush1.msra.mxu0 0.0
          %2033 = vmatprep.subr.mxu0 0.0
          %2034 = vmatpush1.msra.mxu0 0.0
          %2035 = vmatprep.subr.mxu0 0.0
          %2036 = vmatpush1.msra.mxu0 0.0
          %2037 = vmatprep.subr.mxu0 0.0
          %2038 = vmatpush1.msra.mxu0 0.0
          %2039 = vmatprep.subr.mxu0 0.0
          %2040 = vmatpush1.msra.mxu0 0.0
          %2041 = vmatprep.subr.mxu0 0.0
          %2042 = vmatpush1.msra.mxu0 0.0
          %2043 = vmatprep.subr.mxu0 0.0
          %2044 = vmatpush1.msra.mxu0 0.0
          %2045 = vmatprep.subr.mxu0 0.0
          %2046 = vmatpush1.msra.mxu0 0.0
          %2047 = vmatprep.subr.mxu0 0.0
          %2048 = vmatpush1.msra.mxu0 0.0
          %2049 = vmatprep.subr.mxu0 0.0
          %2050 = vmatpush1.msra.mxu0 0.0
          %2051 = vmatprep.subr.mxu0 0.0
          %2052 = vmatpush1.msra.mxu0 0.0
          %2053 = vmatprep.subr.mxu0 0.0
          %2054 = vmatpush1.msra.mxu0 0.0
          %2055 = vmatprep.subr.mxu0 0.0
          %2056 = vmatpush1.msra.mxu0 0.0
          %2057 = vmatprep.subr.mxu0 0.0
          %2058 = vmatpush1.msra.mxu0 0.0
          %2059 = vmatprep.mubr.f32.mxu0 0.0
          %2060 = vmatmul.mubr.f32.gmra.mrb[0].mxu0 %v1986
          %v2061 = vpop.f32.mrb[0].mxu0
          %v2062 = vadd.f32 %v1991, %v2061
          %v2063 = vpop.f32.mrb[0].mxu0
          %v2064 = vadd.f32 %v1992, %v2063
          %2065 = vdwg.mxu0
          %2066 = vmatprep.subr.mxu0 %v672
          %2067 = vmatpush1.msra.mxu0 %v671
          %2068 = vmatprep.subr.mxu0 %v676
          %2069 = vmatpush1.msra.mxu0 %v675
          %2070 = vmatprep.subr.mxu0 %v680
          %2071 = vmatpush1.msra.mxu0 %v679
          %2072 = vmatprep.subr.mxu0 %v684
          %2073 = vmatpush1.msra.mxu0 %v683
          %2074 = vmatprep.subr.mxu0 %v688
          %2075 = vmatpush1.msra.mxu0 %v687
          %2076 = vmatprep.subr.mxu0 %v692
          %2077 = vmatpush1.msra.mxu0 %v691
          %2078 = vmatprep.subr.mxu0 %v696
          %2079 = vmatpush1.msra.mxu0 %v695
          %2080 = vmatprep.subr.mxu0 %v700
          %2081 = vmatpush1.msra.mxu0 %v699
          %2082 = vmatprep.subr.mxu0 %v704
          %2083 = vmatpush1.msra.mxu0 %v703
          %2084 = vmatprep.subr.mxu0 %v708
          %2085 = vmatpush1.msra.mxu0 %v707
          %2086 = vmatprep.subr.mxu0 %v712
          %2087 = vmatpush1.msra.mxu0 %v711
          %2088 = vmatprep.subr.mxu0 %v716
          %2089 = vmatpush1.msra.mxu0 %v715
          %2090 = vmatprep.subr.mxu0 %v720
          %2091 = vmatpush1.msra.mxu0 %v719
          %2092 = vmatprep.subr.mxu0 %v724
          %2093 = vmatpush1.msra.mxu0 %v723
          %2094 = vmatprep.subr.mxu0 %v728
          %2095 = vmatpush1.msra.mxu0 %v727
          %2096 = vmatprep.subr.mxu0 %v732
          %2097 = vmatpush1.msra.mxu0 %v731
          %2098 = vmatprep.subr.mxu0 0.0
          %2099 = vmatpush1.msra.mxu0 0.0
          %2100 = vmatprep.subr.mxu0 0.0
          %2101 = vmatpush1.msra.mxu0 0.0
          %2102 = vmatprep.subr.mxu0 0.0
          %2103 = vmatpush1.msra.mxu0 0.0
          %2104 = vmatprep.subr.mxu0 0.0
          %2105 = vmatpush1.msra.mxu0 0.0
          %2106 = vmatprep.subr.mxu0 0.0
          %2107 = vmatpush1.msra.mxu0 0.0
          %2108 = vmatprep.subr.mxu0 0.0
          %2109 = vmatpush1.msra.mxu0 0.0
          %2110 = vmatprep.subr.mxu0 0.0
          %2111 = vmatpush1.msra.mxu0 0.0
          %2112 = vmatprep.subr.mxu0 0.0
          %2113 = vmatpush1.msra.mxu0 0.0
          %2114 = vmatprep.subr.mxu0 0.0
          %2115 = vmatpush1.msra.mxu0 0.0
          %2116 = vmatprep.subr.mxu0 0.0
          %2117 = vmatpush1.msra.mxu0 0.0
          %2118 = vmatprep.subr.mxu0 0.0
          %2119 = vmatpush1.msra.mxu0 0.0
          %2120 = vmatprep.subr.mxu0 0.0
          %2121 = vmatpush1.msra.mxu0 0.0
          %2122 = vmatprep.subr.mxu0 0.0
          %2123 = vmatpush1.msra.mxu0 0.0
          %2124 = vmatprep.subr.mxu0 0.0
          %2125 = vmatpush1.msra.mxu0 0.0
          %2126 = vmatprep.subr.mxu0 0.0
          %2127 = vmatpush1.msra.mxu0 0.0
          %2128 = vmatprep.subr.mxu0 0.0
          %2129 = vmatpush1.msra.mxu0 0.0
          %2130 = vmatprep.mubr.f32.mxu0 0.0
          %2131 = vmatmul.mubr.f32.gmra.mrb[0].mxu0 %v1986
          %v2132 = vpop.f32.mrb[0].mxu0
          %v2133 = vadd.f32 %v1993, %v2132
          %v2134 = vpop.f32.mrb[0].mxu0
          %v2135 = vadd.f32 %v1994, %v2134
          %2136 = vdwg.mxu0
          %v2137 = vxor.u32 %v2062, 2147483648
          %v2138 = vxor.u32 %v2064, 2147483648
          %v2139 = vmul.f32 %v2137, 1.442695
          %v2140 = vpow.pop %v2139
          %v2141 = vmul.f32 %v2138, 1.442695
          %v2142 = vpow.pop %v2141
          %v2143 = vadd.f32 %v2140, 1.0
          %v2144 = vadd.f32 %v2142, 1.0
          %v2145 = vrcp.pop %v2143
          %v2146 = vmul.f32 1.0, %v2145
          %v2147 = vrcp.pop %v2144
          %v2148 = vmul.f32 1.0, %v2147
          %v2149 = vtanh.pop %v2133
          %v2150 = vxor.u32 %v2135, 2147483648
          %v2151 = vmul.f32 %v2150, 1.442695
          %v2152 = vpow.pop %v2151
          %v2153 = vadd.f32 %v2152, 1.0
          %v2154 = vrcp.pop %v2153
          %v2155 = vmul.f32 1.0, %v2154
          %v2156 = vmul.f32 %v2148, %v1987
          %v2157 = vmul.f32 %v2146, %v2149
          %v2158 = vadd.f32 %v2156, %v2157
          %v2159 = vtanh.pop %v2158
          %v2160 = vmul.f32 %v2155, %v2159
          %p2161 = scmp.gt.s32.totalorder %s656, 7
          %s2162 = scalar_select %p2161, 1, 0
          %v2163 = vstv %s2162
          %vm2164 = vcmp.eq.s32.totalorder %v2163, 1
          %v2165 = vsel %vm2164, %v2160, %v1986
          %v2166 = vsel %vm2164, %v2158, %v1987
          %2167 = vst [vmem:[#allocation2] sm:$0xff] %v2165
          %2168 = vst [vmem:[#allocation3] sm:$0xff] %v2166
        $region60: #{tpu_custom_call.1} parent=43 // pred_fallthru
          _
        %p2169 = scmp.eq.s32.totalorder %s25, 1
        // Predicated region
        $region61: #{tpu_custom_call.1} parent=43 // pred_check
          %p2170 = pneg %p2169
        $region62: #{tpu_custom_call.1} parent=43 // pred_check_branch
          %2172 = sbr.rel (%p2170) target = $region64
        $region63: #{tpu_custom_call.1} parent=43 // pred_region
          %v2173 = vld [vmem:[#allocation2] sm:$0xff]
          %v2174 = vld [vmem:[%s4] sm:$0x1]
          %v2176 = vlaneseq
          %v2177 = vshrl.u32 %v2176, 7
          %v2178 = vsub.s32 0, %v2177
          %v2179 = vrot.slane %v2174, %v2178
          %v2181 = vmul.f32 %v2173, %v2179
          %2182 = vadd.xlane.f32.xlu0 %v2181
          %v2183 = vpop.xlane.xlu0 %2182
          %v2184 = vld [vmem:[#allocation5] sm:$0x1]
          %v2186 = vlaneseq
          %v2187 = vshrl.u32 %v2186, 7
          %v2188 = vsub.s32 0, %v2187
          %v2189 = vrot.slane %v2184, %v2188
          %v2191 = vadd.f32 %v2183, %v2189
          %vm2192 = vcmask 7168
          %2193 = vst.msk [vmem:[%s301] sm:$0xff] %vm2192, %v2191
        $region64: #{tpu_custom_call.1} parent=43 // pred_fallthru
          _
        %p2194 = scmp.lt.s32.totalorder %s24, 0
        %s2195 = scalar_select %p2194, %s24, 0
        %s2196 = smul.addr %s2195, 8
        %s2197 = scalar_lea.vmem %s6, %s2196
        // Predicated region
        $region65: #{tpu_custom_call.1} parent=43 // pred_check
          %p2198 = pneg %p187
        $region66: #{tpu_custom_call.1} parent=43 // pred_check_branch
          %2200 = sbr.rel (%p2198) target = $region68
        $region67: #{tpu_custom_call.1} parent=43 // pred_region
          _
        $region68: #{tpu_custom_call.1} parent=43 // pred_fallthru
          _
        // Predicated region
        $region69: #{tpu_custom_call.1} parent=43 // pred_check
          %p2201 = pneg %p187
        $region70: #{tpu_custom_call.1} parent=43 // pred_check_branch
          %2203 = sbr.rel (%p2201) target = $region72
        $region71: #{tpu_custom_call.1} parent=43 // pred_region
          %p2204 = scmp.lt.s32.totalorder %s24, 0
          %s2205 = scalar_select %p2204, %s24, 0
          %s2206 = smul.addr %s2205, 8
          %s2207 = scalar_lea.vmem %s6, %s2206
        $region72: #{tpu_custom_call.1} parent=43 // pred_fallthru
          _
      $region44: #{tpu_custom_call.1} parent=5 // pred_fallthru
        _
      %p2208 = scmp.le.s32.totalorder 2, %s15
      // Predicated region
      $region73: #{tpu_custom_call.1} parent=5 // pred_check
        %p2209 = pneg %p2208
      $region74: #{tpu_custom_call.1} parent=5 // pred_check_branch
        %2211 = sbr.rel (%p2209) target = $region76
      $region75: #{tpu_custom_call.1} parent=5 // pred_region
        %s2212 = ssub.s32 %s15, 2
      $region76: #{tpu_custom_call.1} parent=5 // pred_fallthru
        _
    $region6: #{tpu_custom_call.1} parent=1 // loop_footer
      %s19 = sadd.s32 1, %s15
    $region7: #{tpu_custom_call.1} parent=1 // loop_footer_branch
      %14 = sbr.rel target = $region3
    $region8: #{tpu_custom_call.1} parent=1 // loop_exit
      _
    %2213 = vsyncpa [#allocation7], 1
    %s2214 = scalar_lea.sflag [#allocation7], 1
    %2215 = vsyncpa %s2214, 1

</llo_original>
